<compile_context>
chip_gen: v7x
topology: tpu7x:2x2x1
jax: 0.10.0
libtpu: 0.0.40
codegen_flags: <defaults>
</compile_context>

<pallas_src>
import functools

import jax
import jax.numpy as jnp
from jax import lax
from jax.experimental import pallas as pl
from jax.experimental.pallas import tpu as pltpu

BN_EPS = 1e-5


def _round_up(x, m):
    return (x + m - 1) // m * m


# ---------------------------------------------------------------------------
# Pallas kernel: sum over taps of row-shifted (rows, K) @ (K, TN) matmuls
#   + folded-BN bias [+ residual] [+ ReLU] [* border mask], halo'd output.
# ---------------------------------------------------------------------------
def _tap_conv_kernel(*refs, offsets, rows, out_halo, res_offset,
                     apply_relu, has_mask, has_residual):
    idx = 0
    x_ref = refs[idx]; idx += 1          # (1, Rin, K)     bf16
    w_ref = refs[idx]; idx += 1          # (T, K, TN)      bf16
    b_ref = refs[idx]; idx += 1          # (1, TN)         f32
    m_ref = None
    r_ref = None
    if has_mask:
        m_ref = refs[idx]; idx += 1      # (rows, 1)       f32
    if has_residual:
        r_ref = refs[idx]; idx += 1      # (1, Rres, TN)   bf16
    o_ref = refs[idx]                    # (1, Rout, TN)

    tn = o_ref.shape[-1]

    acc = jnp.zeros((rows, tn), jnp.float32)
    for t, off in enumerate(offsets):
        a = x_ref[0, pl.ds(off, rows), :]                       # (rows, K) bf16
        acc = acc + jnp.dot(a, w_ref[t],
                            preferred_element_type=jnp.float32)

    out = acc + b_ref[...]
    if has_residual:
        out = out + r_ref[0, pl.ds(res_offset, rows), :].astype(jnp.float32)
    if apply_relu:
        out = jnp.maximum(out, 0.0)
    if has_mask:
        out = out * m_ref[...]
    out = out.astype(o_ref.dtype)

    if out_halo:
        zeros = jnp.zeros((out_halo, tn), o_ref.dtype)
        o_ref[0, pl.ds(0, out_halo), :] = zeros
        o_ref[0, pl.ds(out_halo + rows, out_halo), :] = zeros
    o_ref[0, pl.ds(out_halo, rows), :] = out


def flat_tap_conv(x_flat, w_taps, bias, *, rows, offsets, out_halo=0,
                  mask=None, residual=None, res_offset=0,
                  apply_relu=False, out_dtype=jnp.bfloat16):
    """Conv-as-shifted-row-matmuls.

    x_flat:   (N, Rin, K)      activations, flattened padded plane (+ halo rows)
    w_taps:   (T, K, Cout_pad) BN-scale-folded weights, one slab per tap
    bias:     (1, Cout_pad)    folded BN bias (f32)
    mask:     (rows, 1) or None  (zero out padding-border output rows)
    residual: (N, Rres, Cout_pad) or None, added before ReLU (rows at res_offset)
    Output:   (N, rows + 2*out_halo, Cout_pad); halo rows are written as zeros.
    """
    x_flat = x_flat.astype(jnp.bfloat16)
    w_taps = w_taps.astype(jnp.bfloat16)
    bias = bias.astype(jnp.float32)

    n_img, rin, k = x_flat.shape
    n_taps, kw_, n_pad = w_taps.shape
    assert kw_ == k and n_taps == len(offsets)
    assert n_pad % 128 == 0
    tn = next(t for t in (512, 256, 128) if n_pad % t == 0)
    r_out = rows + 2 * out_halo

    in_specs = [
        pl.BlockSpec((1, rin, k), lambda n, j: (n, 0, 0)),
        pl.BlockSpec((n_taps, k, tn), lambda n, j: (0, 0, j)),
        pl.BlockSpec((1, tn), lambda n, j: (0, j)),
    ]
    operands = [x_flat, w_taps, bias]
    if mask is not None:
        mask = mask.astype(jnp.float32)
        in_specs.append(pl.BlockSpec((rows, 1), lambda n, j: (0, 0)))
        operands.append(mask)
    if residual is not None:
        residual = residual.astype(jnp.bfloat16)
        assert residual.shape[0] == n_img and residual.shape[2] == n_pad
        r_rows = residual.shape[1]
        in_specs.append(pl.BlockSpec((1, r_rows, tn), lambda n, j: (n, 0, j)))
        operands.append(residual)

    kernel = functools.partial(
        _tap_conv_kernel, offsets=tuple(offsets), rows=rows, out_halo=out_halo,
        res_offset=res_offset, apply_relu=apply_relu,
        has_mask=mask is not None, has_residual=residual is not None)

    out_itemsize = jnp.dtype(out_dtype).itemsize
    in_bytes = sum(int(op.size) * op.dtype.itemsize for op in operands)
    out_bytes = n_img * r_out * n_pad * out_itemsize
    flops = 2 * n_img * n_taps * rows * k * n_pad

    # Working set: double-buffered input/weight/residual/output blocks + f32 acc.
    blk_bytes = (rin * k * 2 + n_taps * k * tn * 2 + tn * 4
                 + r_out * tn * out_itemsize)
    if mask is not None:
        blk_bytes += rows * 4
    if residual is not None:
        blk_bytes += residual.shape[1] * tn * 2
    vmem_limit = int(min(64 * 2**20,
                         max(32 * 2**20, 2 * blk_bytes + rows * tn * 4)))

    out = pl.pallas_call(
        kernel,
        out_shape=jax.ShapeDtypeStruct((n_img, r_out, n_pad), out_dtype),
        grid_spec=pltpu.PrefetchScalarGridSpec(
            num_scalar_prefetch=0,
            grid=(n_img, n_pad // tn),
            in_specs=in_specs,
            out_specs=pl.BlockSpec((1, r_out, tn), lambda n, j: (n, 0, j)),
        ),
        compiler_params=pltpu.CompilerParams(
            dimension_semantics=("parallel", "parallel"),
            vmem_limit_bytes=vmem_limit),
        cost_estimate=pl.CostEstimate(
            flops=flops, transcendentals=0,
            bytes_accessed=in_bytes + out_bytes),
    )(*operands)
    return out


# ---------------------------------------------------------------------------
# Plain-JAX layout / folding glue (fuses into single passes under jit)
# ---------------------------------------------------------------------------
def to_flat_rows(x_nhwc, *, halo, cpad, dtype=jnp.bfloat16):
    """NHWC -> (N, (H+2)*(W+2) [+2*halo], cpad): zero-pad spatial by 1, flatten,
    optionally add halo rows, zero-pad channels, cast."""
    n, h, w, c = x_nhwc.shape
    hp, wp = h + 2, w + 2
    xf = jnp.pad(x_nhwc, ((0, 0), (1, 1), (1, 1), (0, cpad - c))).astype(dtype)
    xf = xf.reshape(n, hp * wp, cpad)
    if halo:
        xf = jnp.pad(xf, ((0, 0), (halo, halo), (0, 0)))
    return xf


def interior_mask(hp, wp):
    r = jnp.arange(hp * wp, dtype=jnp.int32)
    i, j = r // wp, r % wp
    m = (i >= 1) & (i <= hp - 2) & (j >= 1) & (j <= wp - 2)
    return m.astype(jnp.float32).reshape(hp * wp, 1)


def fold_bn(gamma, beta, mean, var):
    scale = gamma * lax.rsqrt(var + BN_EPS)
    bias = beta - mean * scale
    return scale, bias


def fold_conv_weights(w_hwio, scale, cin_pad, cout_pad):
    kh, kw, cin, cout = w_hwio.shape
    wf = w_hwio * scale
    wf = jnp.pad(wf, ((0, 0), (0, 0), (0, cin_pad - cin), (0, cout_pad - cout)))
    return wf.reshape(kh * kw, cin_pad, cout_pad)


def im2col_batched(x, ksize, stride, pad):
    """NHWC -> (N, Ho*Wo, ksize*ksize*C) with (kh, kw, C) column ordering."""
    n, h, w, c = x.shape
    xp = jnp.pad(x, ((0, 0), (pad, pad), (pad, pad), (0, 0)))
    ho = (h + 2 * pad - ksize) // stride + 1
    wo = (w + 2 * pad - ksize) // stride + 1
    cols = []
    for i in range(ksize):
        for j in range(ksize):
            cols.append(xp[:, i:i + stride * (ho - 1) + 1:stride,
                           j:j + stride * (wo - 1) + 1:stride, :])
    cols = jnp.concatenate(cols, axis=-1)
    return cols.reshape(n, ho * wo, ksize * ksize * c)


def make_bn_params(cout, seed_shift):
    r = jnp.arange(cout, dtype=jnp.float32) + seed_shift
    return dict(gamma=1.0 + 0.05 * r, beta=0.02 * r,
                mean=0.01 * r, var=1.0 + 0.03 * r)


def init_params(key, cin, cout, stride):
    k1, k2, k3 = jax.random.split(key, 3)
    params = {
        "w1": 0.1 * jax.random.normal(k1, (3, 3, cin, cout), jnp.float32),   # HWIO
        "w2": 0.1 * jax.random.normal(k2, (3, 3, cout, cout), jnp.float32),  # HWIO
        "bn1": make_bn_params(cout, 0.0),
        "bn2": make_bn_params(cout, 1.0),
    }
    if stride != 1 or cin != cout:
        params["ws"] = 0.1 * jax.random.normal(k3, (1, 1, cin, cout), jnp.float32)
        params["bns"] = make_bn_params(cout, 2.0)
    return params


# ---------------------------------------------------------------------------
# BasicBlock forward (Pallas-backed)
# ---------------------------------------------------------------------------
def basic_block_forward(x_nchw, params, stride):
    x = jnp.transpose(x_nchw, (0, 2, 3, 1)).astype(jnp.float32)  # NHWC
    n, h, w, cin = x.shape
    cout = params["w1"].shape[-1]
    cin_pad = _round_up(cin, 128)
    cout_pad = _round_up(cout, 128)

    ho = (h - 1) // stride + 1
    wo = (w - 1) // stride + 1
    hp2, wp2 = ho + 2, wo + 2            # conv2's padded input grid
    r2 = hp2 * wp2
    d2 = wp2 + 1                         # halo rows (max tap row shift)
    offsets2 = tuple(kh * wp2 + kw for kh in range(3) for kw in range(3))

    s1, b1 = fold_bn(**params["bn1"])
    s2, b2 = fold_bn(**params["bn2"])
    b1p = jnp.pad(b1, (0, cout_pad - cout)).reshape(1, -1)
    b2p = jnp.pad(b2, (0, cout_pad - cout)).reshape(1, -1)
    w2_taps = fold_conv_weights(params["w2"], s2, cout_pad, cout_pad)

    x_flat = None
    if stride == 1:
        # conv1 + bn1 + relu, im2col-free: 9 shifted-row matmuls over the plane.
        x_flat = to_flat_rows(x, halo=d2, cpad=cin_pad)       # (n, r2 + 2*d2, cin_pad)
        w1_taps = fold_conv_weights(params["w1"], s1, cin_pad, cout_pad)
        mask = interior_mask(hp2, wp2)
        out1 = flat_tap_conv(x_flat, w1_taps, b1p, rows=r2, offsets=offsets2,
                             out_halo=d2, mask=mask, apply_relu=True,
                             out_dtype=jnp.bfloat16)
    else:
        # TODO(synk): strided conv1 still materializes a small im2col (2.25x of x).
        patches = im2col_batched(x.astype(jnp.bfloat16), 3, stride, 1)
        kc = patches.shape[-1]
        k_pad = _round_up(kc, 128)
        patches = jnp.pad(patches, ((0, 0), (0, 0), (0, k_pad - kc)))
        w1 = (params["w1"] * s1).reshape(kc, cout)
        w1 = jnp.pad(w1, ((0, k_pad - kc), (0, cout_pad - cout)))
        w1 = w1.reshape(1, k_pad, cout_pad)
        out1_rows = flat_tap_conv(patches, w1, b1p, rows=ho * wo, offsets=(0,),
                                  apply_relu=True, out_dtype=jnp.bfloat16)
        out1 = out1_rows.reshape(n, ho, wo, cout_pad)
        out1 = jnp.pad(out1, ((0, 0), (1, 1), (1, 1), (0, 0)))
        out1 = out1.reshape(n, r2, cout_pad)
        out1 = jnp.pad(out1, ((0, 0), (d2, d2), (0, 0)))      # conv2 input layout

    # shortcut path (residual streamed in bf16, same row layout as conv2 output)
    if "ws" in params:
        ss, bs = fold_bn(**params["bns"])
        bsp = jnp.pad(bs, (0, cout_pad - cout)).reshape(1, -1)
        ws_taps = fold_conv_weights(params["ws"], ss, cin_pad, cout_pad)
        xs = x[:, ::stride, ::stride, :][:, :ho, :wo, :]
        xs_flat = to_flat_rows(xs, halo=0, cpad=cin_pad)
        residual = flat_tap_conv(xs_flat, ws_taps, bsp, rows=r2, offsets=(0,),
                                 apply_relu=False, out_dtype=jnp.bfloat16)
        res_offset = 0
    else:
        residual = x_flat            # identity: reuse conv1's bf16 input slab
        res_offset = d2

    # conv2 + bn2 + residual add + relu (residual added before relu)
    out2 = flat_tap_conv(out1, w2_taps, b2p, rows=r2, offsets=offsets2,
                         residual=residual, res_offset=res_offset,
                         apply_relu=True, out_dtype=jnp.float32)

    out = out2.reshape(n, hp2, wp2, cout_pad)[:, 1:1 + ho, 1:1 + wo, :cout]
    return jnp.transpose(out, (0, 3, 1, 2))                   # back to NCHW


# ---------------------------------------------------------------------------
# Pure-JAX f32 reference (for validation)
# ---------------------------------------------------------------------------
def ref_forward(x_nchw, params, stride):
    x = jnp.transpose(x_nchw, (0, 2, 3, 1)).astype(jnp.float32)
    dn = ("NHWC", "HWIO", "NHWC")

    def conv(inp, wgt, s):
        pad = [(1, 1), (1, 1)] if wgt.shape[0] == 3 else [(0, 0), (0, 0)]
        return lax.conv_general_dilated(inp, wgt, (s, s), pad, dimension_numbers=dn)

    def bn(inp, p):
        return (inp - p["mean"]) / jnp.sqrt(p["var"] + BN_EPS) * p["gamma"] + p["beta"]

    out = jax.nn.relu(bn(conv(x, params["w1"], stride), params["bn1"]))
    out = bn(conv(out, params["w2"], 1), params["bn2"])
    if "ws" in params:
        sc = bn(conv(x, params["ws"], stride), params["bns"])
    else:
        sc = x
    out = jax.nn.relu(out + sc)
    return jnp.transpose(out, (0, 3, 1, 2))


_fwd = jax.jit(basic_block_forward, static_argnums=2)
_ref = jax.jit(ref_forward, static_argnums=2)


def _check(x, params, stride, name):
    out = jax.block_until_ready(_fwd(x, params, stride))
    ref = jax.block_until_ready(_ref(x, params, stride))
    assert out.shape == ref.shape, f"{name}: shape {out.shape} vs {ref.shape}"
    max_err = float(jnp.max(jnp.abs(out - ref)))
    scale = float(jnp.max(jnp.abs(ref))) + 1e-6
    # bf16 MXU operands, bf16 conv1->conv2 intermediate and bf16 residual stream.
    assert max_err / scale < 2e-2, f"{name}: mismatch rel_err={max_err / scale}"


if __name__ == "__main__":
    key = jax.random.PRNGKey(0)
    kx1, kx2, kp1, kp2 = jax.random.split(key, 4)

    # NOTE: tiny demo shapes; tile / MXU-shape tuning should use Cin/Cout >= 64.
    # Case 1: downsampling block (stride=2, channel change) -> 1x1 conv shortcut
    N, CIN, H, W = 2, 4, 16, 16
    COUT, STRIDE = 8, 2
    x1 = jax.random.normal(kx1, (N, CIN, H, W), jnp.float32)
    params1 = init_params(kp1, CIN, COUT, STRIDE)
    _check(x1, params1, STRIDE, "downsample")

    # Case 2: identity-shortcut block (stride=1, same channels)
    x2 = jax.random.normal(kx2, (N, COUT, H, W), jnp.float32)
    params2 = init_params(kp2, COUT, COUT, 1)
    _check(x2, params2, 1, "identity")

    print("KERNEL_OK")
</pallas_src>

<mosaic_0001>
module attributes {stable_mosaic.version = 11 : i64} {
  func.func @_tap_conv_kernel(%arg0: i32, %arg1: i32, %arg2: memref<1x64x128xbf16, #tpu.memory_space<vmem>>, %arg3: memref<1x128x128xbf16, #tpu.memory_space<vmem>>, %arg4: memref<1x128xf32, #tpu.memory_space<vmem>>, %arg5: memref<1x64x128xbf16, #tpu.memory_space<vmem>>) attributes {dimension_semantics = [#tpu.dimension_semantics<parallel>, #tpu.dimension_semantics<parallel>], iteration_bounds = array<i64: 2, 1>, scalar_prefetch = 0 : i64, scratch_operands = 0 : i64, tpu.core_type = #tpu.core_type<tc>, window_params = [{transform_indices = @transform_0, window_bounds = array<i64: 1, 64, 128>}, {transform_indices = @transform_1, window_bounds = array<i64: 1, 128, 128>}, {transform_indices = @transform_2, window_bounds = array<i64: 1, 128>}, {transform_indices = @transform_3, window_bounds = array<i64: 1, 64, 128>}]} {
    %cst = arith.constant 0.000000e+00 : f32
    %0 = vector.broadcast %cst : f32 to vector<64x128xf32>
    %c0 = arith.constant 0 : index
    %c0_0 = arith.constant 0 : index
    %c0_1 = arith.constant 0 : index
    %1 = vector.load %arg2[%c0, %c0_0, %c0_1] : memref<1x64x128xbf16, #tpu.memory_space<vmem>>, vector<1x64x128xbf16>
    %2 = vector.shape_cast %1 : vector<1x64x128xbf16> to vector<64x128xbf16>
    %c0_2 = arith.constant 0 : index
    %c0_3 = arith.constant 0 : index
    %c0_4 = arith.constant 0 : index
    %3 = vector.load %arg3[%c0_2, %c0_3, %c0_4] : memref<1x128x128xbf16, #tpu.memory_space<vmem>>, vector<1x128x128xbf16>
    %4 = vector.shape_cast %3 : vector<1x128x128xbf16> to vector<128x128xbf16>
    %cst_5 = arith.constant dense<0.000000e+00> : vector<64x128xf32>
    %5 = tpu.matmul %2, %4, %cst_5 {dimension_numbers = #tpu.dot_dimension_numbers<[1], [0], [0], [1], [0, 0, 1, 1], [], []>} : vector<64x128xbf16>, vector<128x128xbf16>, vector<64x128xf32> -> vector<64x128xf32>
    %6 = arith.addf %0, %5 : vector<64x128xf32>
    %c0_6 = arith.constant 0 : index
    %c0_7 = arith.constant 0 : index
    %7 = vector.load %arg4[%c0_6, %c0_7] : memref<1x128xf32, #tpu.memory_space<vmem>>, vector<1x128xf32>
    %8 = vector.broadcast %7 : vector<1x128xf32> to vector<64x128xf32>
    %9 = arith.addf %6, %8 : vector<64x128xf32>
    %cst_8 = arith.constant 0.000000e+00 : f32
    %10 = vector.broadcast %cst_8 : f32 to vector<64x128xf32>
    %11 = arith.maximumf %9, %10 : vector<64x128xf32>
    %12 = arith.truncf %11 : vector<64x128xf32> to vector<64x128xbf16>
    %c0_9 = arith.constant 0 : index
    %c0_10 = arith.constant 0 : index
    %c0_11 = arith.constant 0 : index
    %13 = vector.load %arg5[%c0_9, %c0_10, %c0_11] : memref<1x64x128xbf16, #tpu.memory_space<vmem>>, vector<1x64x128xbf16>
    %14 = vector.shape_cast %13 : vector<1x64x128xbf16> to vector<64x128xbf16>
    %15 = vector.shape_cast %12 : vector<64x128xbf16> to vector<1x64x128xbf16>
    tpu.vector_store %arg5[%c0_9, %c0_10, %c0_11], %15 {strides = array<i32>} : memref<1x64x128xbf16, #tpu.memory_space<vmem>>, vector<1x64x128xbf16>,
    return
  }
  func.func @transform_0(%arg0: i32, %arg1: i32) -> (i32, i32, i32) {
    %c0_i32 = arith.constant 0 : i32
    %c0_i32_0 = arith.constant 0 : i32
    %c0_i32_1 = arith.constant 0 : i32
    return %arg0, %c0_i32, %c0_i32_0 : i32, i32, i32
  }
  func.func @transform_1(%arg0: i32, %arg1: i32) -> (i32, i32, i32) {
    %c0_i32 = arith.constant 0 : i32
    %c0_i32_0 = arith.constant 0 : i32
    %c0_i32_1 = arith.constant 0 : i32
    return %c0_i32, %c0_i32_0, %arg1 : i32, i32, i32
  }
  func.func @transform_2(%arg0: i32, %arg1: i32) -> (i32, i32) {
    %c0_i32 = arith.constant 0 : i32
    %c0_i32_0 = arith.constant 0 : i32
    return %c0_i32, %arg1 : i32, i32
  }
  func.func @transform_3(%arg0: i32, %arg1: i32) -> (i32, i32, i32) {
    %c0_i32 = arith.constant 0 : i32
    %c0_i32_0 = arith.constant 0 : i32
    return %arg0, %c0_i32, %arg1 : i32, i32, i32
  }
}

module attributes {stable_mosaic.version = 11 : i64} {
  func.func @_tap_conv_kernel(%arg0: i32, %arg1: i32, %arg2: memref<1x100x128xbf16, #tpu.memory_space<vmem>>, %arg3: memref<1x128x128xbf16, #tpu.memory_space<vmem>>, %arg4: memref<1x128xf32, #tpu.memory_space<vmem>>, %arg5: memref<1x100x128xbf16, #tpu.memory_space<vmem>>) attributes {dimension_semantics = [#tpu.dimension_semantics<parallel>, #tpu.dimension_semantics<parallel>], iteration_bounds = array<i64: 2, 1>, scalar_prefetch = 0 : i64, scratch_operands = 0 : i64, tpu.core_type = #tpu.core_type<tc>, window_params = [{transform_indices = @transform_0, window_bounds = array<i64: 1, 100, 128>}, {transform_indices = @transform_1, window_bounds = array<i64: 1, 128, 128>}, {transform_indices = @transform_2, window_bounds = array<i64: 1, 128>}, {transform_indices = @transform_3, window_bounds = array<i64: 1, 100, 128>}]} {
    %cst = arith.constant 0.000000e+00 : f32
    %0 = vector.broadcast %cst : f32 to vector<100x128xf32>
    %c0 = arith.constant 0 : index
    %c0_0 = arith.constant 0 : index
    %c0_1 = arith.constant 0 : index
    %1 = vector.load %arg2[%c0, %c0_0, %c0_1] : memref<1x100x128xbf16, #tpu.memory_space<vmem>>, vector<1x100x128xbf16>
    %2 = vector.shape_cast %1 : vector<1x100x128xbf16> to vector<100x128xbf16>
    %c0_2 = arith.constant 0 : index
    %c0_3 = arith.constant 0 : index
    %c0_4 = arith.constant 0 : index
    %3 = vector.load %arg3[%c0_2, %c0_3, %c0_4] : memref<1x128x128xbf16, #tpu.memory_space<vmem>>, vector<1x128x128xbf16>
    %4 = vector.shape_cast %3 : vector<1x128x128xbf16> to vector<128x128xbf16>
    %cst_5 = arith.constant dense<0.000000e+00> : vector<100x128xf32>
    %5 = tpu.matmul %2, %4, %cst_5 {dimension_numbers = #tpu.dot_dimension_numbers<[1], [0], [0], [1], [0, 0, 1, 1], [], []>} : vector<100x128xbf16>, vector<128x128xbf16>, vector<100x128xf32> -> vector<100x128xf32>
    %6 = arith.addf %0, %5 : vector<100x128xf32>
    %c0_6 = arith.constant 0 : index
    %c0_7 = arith.constant 0 : index
    %7 = vector.load %arg4[%c0_6, %c0_7] : memref<1x128xf32, #tpu.memory_space<vmem>>, vector<1x128xf32>
    %8 = vector.broadcast %7 : vector<1x128xf32> to vector<100x128xf32>
    %9 = arith.addf %6, %8 : vector<100x128xf32>
    %10 = arith.truncf %9 : vector<100x128xf32> to vector<100x128xbf16>
    %c0_8 = arith.constant 0 : index
    %c0_9 = arith.constant 0 : index
    %c0_10 = arith.constant 0 : index
    %11 = vector.load %arg5[%c0_8, %c0_9, %c0_10] : memref<1x100x128xbf16, #tpu.memory_space<vmem>>, vector<1x100x128xbf16>
    %12 = vector.shape_cast %11 : vector<1x100x128xbf16> to vector<100x128xbf16>
    %13 = vector.shape_cast %10 : vector<100x128xbf16> to vector<1x100x128xbf16>
    tpu.vector_store %arg5[%c0_8, %c0_9, %c0_10], %13 {strides = array<i32>} : memref<1x100x128xbf16, #tpu.memory_space<vmem>>, vector<1x100x128xbf16>,
    return
  }
  func.func @transform_0(%arg0: i32, %arg1: i32) -> (i32, i32, i32) {
    %c0_i32 = arith.constant 0 : i32
    %c0_i32_0 = arith.constant 0 : i32
    %c0_i32_1 = arith.constant 0 : i32
    return %arg0, %c0_i32, %c0_i32_0 : i32, i32, i32
  }
  func.func @transform_1(%arg0: i32, %arg1: i32) -> (i32, i32, i32) {
    %c0_i32 = arith.constant 0 : i32
    %c0_i32_0 = arith.constant 0 : i32
    %c0_i32_1 = arith.constant 0 : i32
    return %c0_i32, %c0_i32_0, %arg1 : i32, i32, i32
  }
  func.func @transform_2(%arg0: i32, %arg1: i32) -> (i32, i32) {
    %c0_i32 = arith.constant 0 : i32
    %c0_i32_0 = arith.constant 0 : i32
    return %c0_i32, %arg1 : i32, i32
  }
  func.func @transform_3(%arg0: i32, %arg1: i32) -> (i32, i32, i32) {
    %c0_i32 = arith.constant 0 : i32
    %c0_i32_0 = arith.constant 0 : i32
    return %arg0, %c0_i32, %arg1 : i32, i32, i32
  }
}

module attributes {stable_mosaic.version = 11 : i64} {
  func.func @_tap_conv_kernel(%arg0: i32, %arg1: i32, %arg2: memref<1x122x128xbf16, #tpu.memory_space<vmem>>, %arg3: memref<9x128x128xbf16, #tpu.memory_space<vmem>>, %arg4: memref<1x128xf32, #tpu.memory_space<vmem>>, %arg5: memref<1x100x128xbf16, #tpu.memory_space<vmem>>, %arg6: memref<1x100x128xf32, #tpu.memory_space<vmem>>) attributes {dimension_semantics = [#tpu.dimension_semantics<parallel>, #tpu.dimension_semantics<parallel>], iteration_bounds = array<i64: 2, 1>, scalar_prefetch = 0 : i64, scratch_operands = 0 : i64, tpu.core_type = #tpu.core_type<tc>, window_params = [{transform_indices = @transform_0, window_bounds = array<i64: 1, 122, 128>}, {transform_indices = @transform_1, window_bounds = array<i64: 9, 128, 128>}, {transform_indices = @transform_2, window_bounds = array<i64: 1, 128>}, {transform_indices = @transform_3, window_bounds = array<i64: 1, 100, 128>}, {transform_indices = @transform_4, window_bounds = array<i64: 1, 100, 128>}]} {
    %cst = arith.constant 0.000000e+00 : f32
    %0 = vector.broadcast %cst : f32 to vector<100x128xf32>
    %c0 = arith.constant 0 : index
    %c0_0 = arith.constant 0 : index
    %c0_1 = arith.constant 0 : index
    %1 = vector.load %arg2[%c0, %c0_0, %c0_1] : memref<1x122x128xbf16, #tpu.memory_space<vmem>>, vector<1x100x128xbf16>
    %2 = vector.shape_cast %1 : vector<1x100x128xbf16> to vector<100x128xbf16>
    %c0_2 = arith.constant 0 : index
    %c0_3 = arith.constant 0 : index
    %c0_4 = arith.constant 0 : index
    %3 = vector.load %arg3[%c0_2, %c0_3, %c0_4] : memref<9x128x128xbf16, #tpu.memory_space<vmem>>, vector<1x128x128xbf16>
    %4 = vector.shape_cast %3 : vector<1x128x128xbf16> to vector<128x128xbf16>
    %cst_5 = arith.constant dense<0.000000e+00> : vector<100x128xf32>
    %5 = tpu.matmul %2, %4, %cst_5 {dimension_numbers = #tpu.dot_dimension_numbers<[1], [0], [0], [1], [0, 0, 1, 1], [], []>} : vector<100x128xbf16>, vector<128x128xbf16>, vector<100x128xf32> -> vector<100x128xf32>
    %6 = arith.addf %0, %5 : vector<100x128xf32>
    %c0_6 = arith.constant 0 : index
    %c1 = arith.constant 1 : index
    %c0_7 = arith.constant 0 : index
    %7 = vector.load %arg2[%c0_6, %c1, %c0_7] : memref<1x122x128xbf16, #tpu.memory_space<vmem>>, vector<1x100x128xbf16>
    %8 = vector.shape_cast %7 : vector<1x100x128xbf16> to vector<100x128xbf16>
    %c1_8 = arith.constant 1 : index
    %c0_9 = arith.constant 0 : index
    %c0_10 = arith.constant 0 : index
    %9 = vector.load %arg3[%c1_8, %c0_9, %c0_10] : memref<9x128x128xbf16, #tpu.memory_space<vmem>>, vector<1x128x128xbf16>
    %10 = vector.shape_cast %9 : vector<1x128x128xbf16> to vector<128x128xbf16>
    %cst_11 = arith.constant dense<0.000000e+00> : vector<100x128xf32>
    %11 = tpu.matmul %8, %10, %cst_11 {dimension_numbers = #tpu.dot_dimension_numbers<[1], [0], [0], [1], [0, 0, 1, 1], [], []>} : vector<100x128xbf16>, vector<128x128xbf16>, vector<100x128xf32> -> vector<100x128xf32>
    %12 = arith.addf %6, %11 : vector<100x128xf32>
    %c0_12 = arith.constant 0 : index
    %c2 = arith.constant 2 : index
    %c0_13 = arith.constant 0 : index
    %13 = vector.load %arg2[%c0_12, %c2, %c0_13] : memref<1x122x128xbf16, #tpu.memory_space<vmem>>, vector<1x100x128xbf16>
    %14 = vector.shape_cast %13 : vector<1x100x128xbf16> to vector<100x128xbf16>
    %c2_14 = arith.constant 2 : index
    %c0_15 = arith.constant 0 : index
    %c0_16 = arith.constant 0 : index
    %15 = vector.load %arg3[%c2_14, %c0_15, %c0_16] : memref<9x128x128xbf16, #tpu.memory_space<vmem>>, vector<1x128x128xbf16>
    %16 = vector.shape_cast %15 : vector<1x128x128xbf16> to vector<128x128xbf16>
    %cst_17 = arith.constant dense<0.000000e+00> : vector<100x128xf32>
    %17 = tpu.matmul %14, %16, %cst_17 {dimension_numbers = #tpu.dot_dimension_numbers<[1], [0], [0], [1], [0, 0, 1, 1], [], []>} : vector<100x128xbf16>, vector<128x128xbf16>, vector<100x128xf32> -> vector<100x128xf32>
    %18 = arith.addf %12, %17 : vector<100x128xf32>
    %c0_18 = arith.constant 0 : index
    %c10 = arith.constant 10 : index
    %c0_19 = arith.constant 0 : index
    %19 = vector.load %arg2[%c0_18, %c10, %c0_19] : memref<1x122x128xbf16, #tpu.memory_space<vmem>>, vector<1x100x128xbf16>
    %20 = vector.shape_cast %19 : vector<1x100x128xbf16> to vector<100x128xbf16>
    %c3 = arith.constant 3 : index
    %c0_20 = arith.constant 0 : index
    %c0_21 = arith.constant 0 : index
    %21 = vector.load %arg3[%c3, %c0_20, %c0_21] : memref<9x128x128xbf16, #tpu.memory_space<vmem>>, vector<1x128x128xbf16>
    %22 = vector.shape_cast %21 : vector<1x128x128xbf16> to vector<128x128xbf16>
    %cst_22 = arith.constant dense<0.000000e+00> : vector<100x128xf32>
    %23 = tpu.matmul %20, %22, %cst_22 {dimension_numbers = #tpu.dot_dimension_numbers<[1], [0], [0], [1], [0, 0, 1, 1], [], []>} : vector<100x128xbf16>, vector<128x128xbf16>, vector<100x128xf32> -> vector<100x128xf32>
    %24 = arith.addf %18, %23 : vector<100x128xf32>
    %c0_23 = arith.constant 0 : index
    %c11 = arith.constant 11 : index
    %c0_24 = arith.constant 0 : index
    %25 = vector.load %arg2[%c0_23, %c11, %c0_24] : memref<1x122x128xbf16, #tpu.memory_space<vmem>>, vector<1x100x128xbf16>
    %26 = vector.shape_cast %25 : vector<1x100x128xbf16> to vector<100x128xbf16>
    %c4 = arith.constant 4 : index
    %c0_25 = arith.constant 0 : index
    %c0_26 = arith.constant 0 : index
    %27 = vector.load %arg3[%c4, %c0_25, %c0_26] : memref<9x128x128xbf16, #tpu.memory_space<vmem>>, vector<1x128x128xbf16>
    %28 = vector.shape_cast %27 : vector<1x128x128xbf16> to vector<128x128xbf16>
    %cst_27 = arith.constant dense<0.000000e+00> : vector<100x128xf32>
    %29 = tpu.matmul %26, %28, %cst_27 {dimension_numbers = #tpu.dot_dimension_numbers<[1], [0], [0], [1], [0, 0, 1, 1], [], []>} : vector<100x128xbf16>, vector<128x128xbf16>, vector<100x128xf32> -> vector<100x128xf32>
    %30 = arith.addf %24, %29 : vector<100x128xf32>
    %c0_28 = arith.constant 0 : index
    %c12 = arith.constant 12 : index
    %c0_29 = arith.constant 0 : index
    %31 = vector.load %arg2[%c0_28, %c12, %c0_29] : memref<1x122x128xbf16, #tpu.memory_space<vmem>>, vector<1x100x128xbf16>
    %32 = vector.shape_cast %31 : vector<1x100x128xbf16> to vector<100x128xbf16>
    %c5 = arith.constant 5 : index
    %c0_30 = arith.constant 0 : index
    %c0_31 = arith.constant 0 : index
    %33 = vector.load %arg3[%c5, %c0_30, %c0_31] : memref<9x128x128xbf16, #tpu.memory_space<vmem>>, vector<1x128x128xbf16>
    %34 = vector.shape_cast %33 : vector<1x128x128xbf16> to vector<128x128xbf16>
    %cst_32 = arith.constant dense<0.000000e+00> : vector<100x128xf32>
    %35 = tpu.matmul %32, %34, %cst_32 {dimension_numbers = #tpu.dot_dimension_numbers<[1], [0], [0], [1], [0, 0, 1, 1], [], []>} : vector<100x128xbf16>, vector<128x128xbf16>, vector<100x128xf32> -> vector<100x128xf32>
    %36 = arith.addf %30, %35 : vector<100x128xf32>
    %c0_33 = arith.constant 0 : index
    %c20 = arith.constant 20 : index
    %c0_34 = arith.constant 0 : index
    %37 = vector.load %arg2[%c0_33, %c20, %c0_34] : memref<1x122x128xbf16, #tpu.memory_space<vmem>>, vector<1x100x128xbf16>
    %38 = vector.shape_cast %37 : vector<1x100x128xbf16> to vector<100x128xbf16>
    %c6 = arith.constant 6 : index
    %c0_35 = arith.constant 0 : index
    %c0_36 = arith.constant 0 : index
    %39 = vector.load %arg3[%c6, %c0_35, %c0_36] : memref<9x128x128xbf16, #tpu.memory_space<vmem>>, vector<1x128x128xbf16>
    %40 = vector.shape_cast %39 : vector<1x128x128xbf16> to vector<128x128xbf16>
    %cst_37 = arith.constant dense<0.000000e+00> : vector<100x128xf32>
    %41 = tpu.matmul %38, %40, %cst_37 {dimension_numbers = #tpu.dot_dimension_numbers<[1], [0], [0], [1], [0, 0, 1, 1], [], []>} : vector<100x128xbf16>, vector<128x128xbf16>, vector<100x128xf32> -> vector<100x128xf32>
    %42 = arith.addf %36, %41 : vector<100x128xf32>
    %c0_38 = arith.constant 0 : index
    %c21 = arith.constant 21 : index
    %c0_39 = arith.constant 0 : index
    %43 = vector.load %arg2[%c0_38, %c21, %c0_39] : memref<1x122x128xbf16, #tpu.memory_space<vmem>>, vector<1x100x128xbf16>
    %44 = vector.shape_cast %43 : vector<1x100x128xbf16> to vector<100x128xbf16>
    %c7 = arith.constant 7 : index
    %c0_40 = arith.constant 0 : index
    %c0_41 = arith.constant 0 : index
    %45 = vector.load %arg3[%c7, %c0_40, %c0_41] : memref<9x128x128xbf16, #tpu.memory_space<vmem>>, vector<1x128x128xbf16>
    %46 = vector.shape_cast %45 : vector<1x128x128xbf16> to vector<128x128xbf16>
    %cst_42 = arith.constant dense<0.000000e+00> : vector<100x128xf32>
    %47 = tpu.matmul %44, %46, %cst_42 {dimension_numbers = #tpu.dot_dimension_numbers<[1], [0], [0], [1], [0, 0, 1, 1], [], []>} : vector<100x128xbf16>, vector<128x128xbf16>, vector<100x128xf32> -> vector<100x128xf32>
    %48 = arith.addf %42, %47 : vector<100x128xf32>
    %c0_43 = arith.constant 0 : index
    %c22 = arith.constant 22 : index
    %c0_44 = arith.constant 0 : index
    %49 = vector.load %arg2[%c0_43, %c22, %c0_44] : memref<1x122x128xbf16, #tpu.memory_space<vmem>>, vector<1x100x128xbf16>
    %50 = vector.shape_cast %49 : vector<1x100x128xbf16> to vector<100x128xbf16>
    %c8 = arith.constant 8 : index
    %c0_45 = arith.constant 0 : index
    %c0_46 = arith.constant 0 : index
    %51 = vector.load %arg3[%c8, %c0_45, %c0_46] : memref<9x128x128xbf16, #tpu.memory_space<vmem>>, vector<1x128x128xbf16>
    %52 = vector.shape_cast %51 : vector<1x128x128xbf16> to vector<128x128xbf16>
    %cst_47 = arith.constant dense<0.000000e+00> : vector<100x128xf32>
    %53 = tpu.matmul %50, %52, %cst_47 {dimension_numbers = #tpu.dot_dimension_numbers<[1], [0], [0], [1], [0, 0, 1, 1], [], []>} : vector<100x128xbf16>, vector<128x128xbf16>, vector<100x128xf32> -> vector<100x128xf32>
    %54 = arith.addf %48, %53 : vector<100x128xf32>
    %c0_48 = arith.constant 0 : index
    %c0_49 = arith.constant 0 : index
    %55 = vector.load %arg4[%c0_48, %c0_49] : memref<1x128xf32, #tpu.memory_space<vmem>>, vector<1x128xf32>
    %56 = vector.broadcast %55 : vector<1x128xf32> to vector<100x128xf32>
    %57 = arith.addf %54, %56 : vector<100x128xf32>
    %c0_50 = arith.constant 0 : index
    %c0_51 = arith.constant 0 : index
    %c0_52 = arith.constant 0 : index
    %58 = vector.load %arg5[%c0_50, %c0_51, %c0_52] : memref<1x100x128xbf16, #tpu.memory_space<vmem>>, vector<1x100x128xbf16>
    %59 = vector.shape_cast %58 : vector<1x100x128xbf16> to vector<100x128xbf16>
    %60 = arith.extf %59 : vector<100x128xbf16> to vector<100x128xf32>
    %61 = arith.addf %57, %60 : vector<100x128xf32>
    %cst_53 = arith.constant 0.000000e+00 : f32
    %62 = vector.broadcast %cst_53 : f32 to vector<100x128xf32>
    %63 = arith.maximumf %61, %62 : vector<100x128xf32>
    %c0_54 = arith.constant 0 : index
    %c0_55 = arith.constant 0 : index
    %c0_56 = arith.constant 0 : index
    %64 = vector.load %arg6[%c0_54, %c0_55, %c0_56] : memref<1x100x128xf32, #tpu.memory_space<vmem>>, vector<1x100x128xf32>
    %65 = vector.shape_cast %64 : vector<1x100x128xf32> to vector<100x128xf32>
    %66 = vector.shape_cast %63 : vector<100x128xf32> to vector<1x100x128xf32>
    tpu.vector_store %arg6[%c0_54, %c0_55, %c0_56], %66 {strides = array<i32>} : memref<1x100x128xf32, #tpu.memory_space<vmem>>, vector<1x100x128xf32>,
    return
  }
  func.func @transform_0(%arg0: i32, %arg1: i32) -> (i32, i32, i32) {
    %c0_i32 = arith.constant 0 : i32
    %c0_i32_0 = arith.constant 0 : i32
    %c0_i32_1 = arith.constant 0 : i32
    return %arg0, %c0_i32, %c0_i32_0 : i32, i32, i32
  }
  func.func @transform_1(%arg0: i32, %arg1: i32) -> (i32, i32, i32) {
    %c0_i32 = arith.constant 0 : i32
    %c0_i32_0 = arith.constant 0 : i32
    %c0_i32_1 = arith.constant 0 : i32
    return %c0_i32, %c0_i32_0, %arg1 : i32, i32, i32
  }
  func.func @transform_2(%arg0: i32, %arg1: i32) -> (i32, i32) {
    %c0_i32 = arith.constant 0 : i32
    %c0_i32_0 = arith.constant 0 : i32
    return %c0_i32, %arg1 : i32, i32
  }
  func.func @transform_3(%arg0: i32, %arg1: i32) -> (i32, i32, i32) {
    %c0_i32 = arith.constant 0 : i32
    %c0_i32_0 = arith.constant 0 : i32
    return %arg0, %c0_i32, %arg1 : i32, i32, i32
  }
  func.func @transform_4(%arg0: i32, %arg1: i32) -> (i32, i32, i32) {
    %c0_i32 = arith.constant 0 : i32
    %c0_i32_0 = arith.constant 0 : i32
    return %arg0, %c0_i32, %arg1 : i32, i32, i32
  }
}

</mosaic_0001>

<llo_original>
// kernel: basic_block_forward.3
$region0: #{basic_block_forward.3}
  #allocation0 [shape = 'u32[]', space=smem, size = 0x4, offset = 0x4, fixed_abs, tag = 'smem constant byte address 0x4 - core index']
  #allocation1 [shape = 'u32[144,128]{1,0:T(1,128)}', space=vmem, size = 0x12000, scoped, tag = 'internal scratch']
  %s0 = inlined_call_operand.vmem [shape: bf16[2,64,128], index: 0, kind: input, shape index: {}]
  %s1 = inlined_call_operand.vmem [shape: bf16[1,128,128], index: 1, kind: input, shape index: {}]
  %s2 = inlined_call_operand.vmem [shape: f32[1,128], index: 2, kind: input, shape index: {}]
  %s3 = inlined_call_operand.vmem [shape: bf16[2,64,128], index: 3, kind: output, shape index: {}]
  %s4 = sld [smem:[#allocation0]]
  $region45: #{basic_block_forward.3} parent=0
    _
  %s6 = ssub.s32 1, %s4
  %s7 = scalar_select 0, %s6, %s4
  loop: start=0, step=1, limit=4
  $region2: #{basic_block_forward.3} parent=0 // loop_pre_header
    _
  $region3: #{basic_block_forward.3} parent=0 // loop_header
    %s9 = sphi 0, %s13
    %p10 = scmp.ge.s32.totalorder %s9, 4
    %s16 = sphi 0, %s28
    %s17 = sphi 0, %s24
    %s18 = sphi 0, %s16
    %s19 = sphi 0, %s17
    %s20 = sphi 0, %s18
    %s21 = sphi 0, %s19
    %s31 = sphi 0, %s33
    %s34 = sphi 0, %s31
    %s35 = sphi 0, %s34
    %s51 = sphi 0, %s35
    %s57 = sphi 0, %s59
    %s60 = sphi 0, %s57
    %s61 = sphi 0, %s60
    %s77 = sphi 0, %s61
    %s83 = sphi 0, %s85
    %s86 = sphi 0, %s83
    %s87 = sphi 0, %s86
    %s103 = sphi 0, %s87
    %s111 = sphi 0, %s113
    %s114 = sphi 0, %s111
    %s115 = sphi 0, %s114
    %s131 = sphi 0, %s115
  $region4: #{basic_block_forward.3} parent=0 // loop_header_branch
    %12 = sbr.rel (%p10) target = $region8
  $region5: #{basic_block_forward.3} parent=0 // loop_body
    %s14 = ssub.s32 %s9, 1
    %s15 = ssub.s32 %s9, 2
    %s22 = sadd.s32 1, %s17
    %p23 = scmp.ge.s32.totalorder %s22, 1
    %s24 = scalar_select %p23, 0, %s22
    %s25 = sadd.s32 1, %s16
    %s26 = scalar_select %p23, %s25, %s16
    %p27 = scmp.ge.s32.totalorder %s26, 2
    %s28 = scalar_select %p27, 0, %s26
    %s29 = ssub.s32 %s16, %s28
    %p30 = scmp.eq.s32.totalorder %s29, 0
    %s32 = sadd.s32 %s31, 1
    %s33 = scalar_select %p30, %s31, %s32
    %p36 = pneg %p30
    %p37 = scmp.eq.s32.totalorder %s9, 1
    %p38 = por %p36, %p37
    %p39 = scmp.ne.s32.totalorder %s31, %s34
    %p40 = scmp.eq.s32.totalorder %s9, 0
    %p41 = por %p39, %p40
    %p42 = scmp.ne.s32.totalorder %s31, %s34
    %p43 = scmp.eq.s32.totalorder %s14, 1
    %p44 = por %p42, %p43
    %p45 = scmp.ne.s32.totalorder %s34, %s35
    %p46 = scmp.eq.s32.totalorder %s14, 0
    %p47 = por %p45, %p46
    %p48 = scmp.ne.s32.totalorder %s34, %s35
    %p49 = scmp.eq.s32.totalorder %s15, 1
    %p50 = por %p48, %p49
    %p52 = scmp.ne.s32.totalorder %s35, %s51
    %p53 = scmp.eq.s32.totalorder %s15, 0
    %p54 = por %p52, %p53
    %s55 = ssub.s32 %s17, %s24
    %p56 = scmp.eq.s32.totalorder %s55, 0
    %s58 = sadd.s32 %s57, 1
    %s59 = scalar_select %p56, %s57, %s58
    %p62 = pneg %p56
    %p63 = scmp.eq.s32.totalorder %s9, 1
    %p64 = por %p62, %p63
    %p65 = scmp.ne.s32.totalorder %s57, %s60
    %p66 = scmp.eq.s32.totalorder %s9, 0
    %p67 = por %p65, %p66
    %p68 = scmp.ne.s32.totalorder %s57, %s60
    %p69 = scmp.eq.s32.totalorder %s14, 1
    %p70 = por %p68, %p69
    %p71 = scmp.ne.s32.totalorder %s60, %s61
    %p72 = scmp.eq.s32.totalorder %s14, 0
    %p73 = por %p71, %p72
    %p74 = scmp.ne.s32.totalorder %s60, %s61
    %p75 = scmp.eq.s32.totalorder %s15, 1
    %p76 = por %p74, %p75
    %p78 = scmp.ne.s32.totalorder %s61, %s77
    %p79 = scmp.eq.s32.totalorder %s15, 0
    %p80 = por %p78, %p79
    %s81 = ssub.s32 %s17, %s24
    %p82 = scmp.eq.s32.totalorder %s81, 0
    %s84 = sadd.s32 %s83, 1
    %s85 = scalar_select %p82, %s83, %s84
    %p88 = pneg %p82
    %p89 = scmp.eq.s32.totalorder %s9, 1
    %p90 = por %p88, %p89
    %p91 = scmp.ne.s32.totalorder %s83, %s86
    %p92 = scmp.eq.s32.totalorder %s9, 0
    %p93 = por %p91, %p92
    %p94 = scmp.ne.s32.totalorder %s83, %s86
    %p95 = scmp.eq.s32.totalorder %s14, 1
    %p96 = por %p94, %p95
    %p97 = scmp.ne.s32.totalorder %s86, %s87
    %p98 = scmp.eq.s32.totalorder %s14, 0
    %p99 = por %p97, %p98
    %p100 = scmp.ne.s32.totalorder %s86, %s87
    %p101 = scmp.eq.s32.totalorder %s15, 1
    %p102 = por %p100, %p101
    %p104 = scmp.ne.s32.totalorder %s87, %s103
    %p105 = scmp.eq.s32.totalorder %s15, 0
    %p106 = por %p104, %p105
    %s107 = ssub.s32 %s16, %s28
    %s108 = ssub.s32 %s17, %s24
    %s109 = sor.u32 %s107, %s108
    %p110 = scmp.eq.s32.totalorder %s109, 0
    %s112 = sadd.s32 %s111, 1
    %s113 = scalar_select %p110, %s111, %s112
    %p116 = pneg %p110
    %p117 = scmp.eq.s32.totalorder %s9, 1
    %p118 = por %p116, %p117
    %p119 = scmp.ne.s32.totalorder %s111, %s114
    %p120 = scmp.eq.s32.totalorder %s9, 0
    %p121 = por %p119, %p120
    %p122 = scmp.ne.s32.totalorder %s111, %s114
    %p123 = scmp.eq.s32.totalorder %s14, 1
    %p124 = por %p122, %p123
    %p125 = scmp.ne.s32.totalorder %s114, %s115
    %p126 = scmp.eq.s32.totalorder %s14, 0
    %p127 = por %p125, %p126
    %p128 = scmp.ne.s32.totalorder %s114, %s115
    %p129 = scmp.eq.s32.totalorder %s15, 1
    %p130 = por %p128, %p129
    %p132 = scmp.ne.s32.totalorder %s115, %s131
    %p133 = scmp.eq.s32.totalorder %s15, 0
    %p134 = por %p132, %p133
    %p135 = scmp.le.s32.totalorder 1, %s9
    %p136 = scmp.lt.s32.totalorder %s9, 3
    %p137 = pnand %p135, %p136
    %p138 = pneg %p137
    // Predicated region
    $region9: #{basic_block_forward.3} parent=5 // pred_check
      _
    $region10: #{basic_block_forward.3} parent=5 // pred_check_branch
      %140 = sbr.rel (%p137) target = $region12
    $region11: #{basic_block_forward.3} parent=5 // pred_region
      %s141 = ssub.s32 %s9, 1
      // Predicated region
      $region13: #{basic_block_forward.3} parent=11 // pred_check
        %p142 = pneg %p73
      $region14: #{basic_block_forward.3} parent=11 // pred_check_branch
        %144 = sbr.rel (%p142) target = $region16
      $region15: #{basic_block_forward.3} parent=11 // pred_region
        %p145 = scmp.lt.s32.totalorder %s19, 0
        %s146 = scalar_select %p145, %s19, 0
        %s147 = smul.addr %s146, 4
        %s148 = scalar_lea.vmem %s1, %s147
      $region16: #{basic_block_forward.3} parent=11 // pred_fallthru
        _
      // Predicated region
      $region17: #{basic_block_forward.3} parent=11 // pred_check
        %p149 = pneg %p99
      $region18: #{basic_block_forward.3} parent=11 // pred_check_branch
        %151 = sbr.rel (%p149) target = $region20
      $region19: #{basic_block_forward.3} parent=11 // pred_region
        %p152 = scmp.lt.s32.totalorder %s19, 0
        %s153 = scalar_select %p152, %s19, 0
        %s154 = scalar_lea.vmem %s2, %s153
      $region20: #{basic_block_forward.3} parent=11 // pred_fallthru
        _
    $region12: #{basic_block_forward.3} parent=5 // pred_fallthru
      _
    %p155 = scmp.lt.s32.totalorder %s9, 2
    // Predicated region
    $region21: #{basic_block_forward.3} parent=5 // pred_check
      %p156 = pneg %p155
    $region22: #{basic_block_forward.3} parent=5 // pred_check_branch
      %158 = sbr.rel (%p156) target = $region24
    $region23: #{basic_block_forward.3} parent=5 // pred_region
      // Predicated region
      $region25: #{basic_block_forward.3} parent=23 // pred_check
        %p159 = pneg %p41
      $region26: #{basic_block_forward.3} parent=23 // pred_check_branch
        %161 = sbr.rel (%p159) target = $region28
      $region27: #{basic_block_forward.3} parent=23 // pred_region
        %p162 = scmp.lt.s32.totalorder %s16, 1
        %s163 = scalar_select %p162, %s16, 1
        %s164 = smul.addr %s163, 8
        %s165 = smul.addr %s164, 4
        %s166 = scalar_lea.vmem %s0, %s165
      $region28: #{basic_block_forward.3} parent=23 // pred_fallthru
        _
    $region24: #{basic_block_forward.3} parent=5 // pred_fallthru
      _
    %p167 = scmp.le.s32.totalorder 1, %s9
    %p168 = scmp.lt.s32.totalorder %s9, 3
    %p169 = pnand %p167, %p168
    %p170 = pneg %p169
    // Predicated region
    $region29: #{basic_block_forward.3} parent=5 // pred_check
      _
    $region30: #{basic_block_forward.3} parent=5 // pred_check_branch
      %172 = sbr.rel (%p169) target = $region32
    $region31: #{basic_block_forward.3} parent=5 // pred_region
      %s173 = ssub.s32 %s9, 1
      %p174 = scmp.lt.s32.totalorder %s18, 1
      %s175 = scalar_select %p174, %s18, 1
      %s176 = smul.addr %s175, 8
      %s177 = smul.addr %s176, 4
      %s178 = scalar_lea.vmem %s0, %s177
      %p179 = pneg %p47
      %p180 = pneg %p44
      %p181 = scmp.lt.s32.totalorder %s19, 0
      %s182 = scalar_select %p181, %s19, 0
      %s183 = smul.addr %s182, 4
      %s184 = scalar_lea.vmem %s1, %s183
      %p185 = pneg %p73
      %p186 = pneg %p70
      %p187 = scmp.lt.s32.totalorder %s19, 0
      %s188 = scalar_select %p187, %s19, 0
      %s189 = scalar_lea.vmem %s2, %s188
      %p190 = pneg %p99
      %p191 = pneg %p96
      %p192 = pneg %p127
      %p193 = pneg %p124
      %p194 = scmp.lt.s32.totalorder %s18, 1
      %s195 = scalar_select %p194, %s18, 1
      %p196 = scmp.lt.s32.totalorder %s19, 0
      %s197 = scalar_select %p196, %s19, 0
      %s198 = smul.addr %s195, 8
      %s199 = sadd.s32 %s197, %s198
      %s200 = smul.addr %s199, 4
      %s201 = scalar_lea.vmem %s3, %s200
      %p202 = scmp.lt.s32.totalorder %s18, 1
      %s203 = scalar_select %p202, %s18, 1
      %s204 = smul.addr %s203, 8
      %s205 = smul.addr %s204, 4
      %s206 = scalar_lea.vmem %s0, %s205
      %p207 = scmp.lt.s32.totalorder %s19, 0
      %s208 = scalar_select %p207, %s19, 0
      %s209 = smul.addr %s208, 4
      %s210 = scalar_lea.vmem %s1, %s209
      %p211 = scmp.lt.s32.totalorder %s19, 0
      %s212 = scalar_select %p211, %s19, 0
      %s213 = scalar_lea.vmem %s2, %s212
      %p214 = scmp.lt.s32.totalorder %s18, 1
      %s215 = scalar_select %p214, %s18, 1
      %p216 = scmp.lt.s32.totalorder %s19, 0
      %s217 = scalar_select %p216, %s19, 0
      %s218 = smul.addr %s215, 8
      %s219 = sadd.s32 %s217, %s218
      %s220 = smul.addr %s219, 4
      %s221 = scalar_lea.vmem %s3, %s220
      %v223 = vld [vmem:[%s206] sm:$0xf]
      %v224 = vld [vmem:[%s206 + $0x4] sm:$0xf]
      %v225 = vld [vmem:[%s206 + $0x8] sm:$0xf]
      %v226 = vld [vmem:[%s206 + $0xc] sm:$0xf]
      %v227 = vld [vmem:[%s206 + $0x10] sm:$0xf]
      %v228 = vld [vmem:[%s206 + $0x14] sm:$0xf]
      %v229 = vld [vmem:[%s206 + $0x18] sm:$0xf]
      %v230 = vld [vmem:[%s206 + $0x1c] sm:$0xf]
      %v231 = vld [vmem:[%s210] sm:$0xf]
      %v232 = vld [vmem:[%s210 + $0x4] sm:$0xf]
      %v233 = vld [vmem:[%s210 + $0x8] sm:$0xf]
      %v234 = vld [vmem:[%s210 + $0xc] sm:$0xf]
      %v235 = vld [vmem:[%s210 + $0x10] sm:$0xf]
      %v236 = vld [vmem:[%s210 + $0x14] sm:$0xf]
      %v237 = vld [vmem:[%s210 + $0x18] sm:$0xf]
      %v238 = vld [vmem:[%s210 + $0x1c] sm:$0xf]
      %v239 = vld [vmem:[%s210 + $0x20] sm:$0xf]
      %v240 = vld [vmem:[%s210 + $0x24] sm:$0xf]
      %v241 = vld [vmem:[%s210 + $0x28] sm:$0xf]
      %v242 = vld [vmem:[%s210 + $0x2c] sm:$0xf]
      %v243 = vld [vmem:[%s210 + $0x30] sm:$0xf]
      %v244 = vld [vmem:[%s210 + $0x34] sm:$0xf]
      %v245 = vld [vmem:[%s210 + $0x38] sm:$0xf]
      %v246 = vld [vmem:[%s210 + $0x3c] sm:$0xf]
      %v247 = vld [vmem:[%s213] sm:$0x1]
      %v249 = vlaneseq
      %v250 = vshrl.u32 %v249, 7
      %v251 = vsub.s32 0, %v250
      %v252 = vrot.slane %v247, %v251
      %v262 = vunpack.c.l.b16 %v223
      %v263 = vunpack.c.l.b16 %v224
      %v264 = vunpack.c.l.b16 %v225
      %v265 = vunpack.c.l.b16 %v226
      %v266 = vunpack.c.l.b16 %v227
      %v267 = vunpack.c.l.b16 %v228
      %v268 = vunpack.c.l.b16 %v229
      %v269 = vunpack.c.l.b16 %v230
      %v270 = vpack.c.b16 %v263, %v262
      %v271 = vpack.c.b16 %v265, %v264
      %v272 = vpack.c.b16 %v267, %v266
      %v273 = vpack.c.b16 %v269, %v268
      %v294 = vunpack.c.l.b16 %v231
      %v295 = vunpack.c.l.b16 %v232
      %v296 = vunpack.c.l.b16 %v233
      %v297 = vunpack.c.l.b16 %v234
      %v298 = vunpack.c.l.b16 %v235
      %v299 = vunpack.c.l.b16 %v236
      %v300 = vunpack.c.l.b16 %v237
      %v301 = vunpack.c.l.b16 %v238
      %v302 = vunpack.c.l.b16 %v239
      %v303 = vunpack.c.l.b16 %v240
      %v304 = vunpack.c.l.b16 %v241
      %v305 = vunpack.c.l.b16 %v242
      %v306 = vunpack.c.l.b16 %v243
      %v307 = vunpack.c.l.b16 %v244
      %v308 = vunpack.c.l.b16 %v245
      %v309 = vunpack.c.l.b16 %v246
      %v310 = vpack.c.b16 %v295, %v294
      %v311 = vpack.c.b16 %v297, %v296
      %v312 = vpack.c.b16 %v299, %v298
      %v313 = vpack.c.b16 %v301, %v300
      %v314 = vpack.c.b16 %v303, %v302
      %v315 = vpack.c.b16 %v305, %v304
      %v316 = vpack.c.b16 %v307, %v306
      %v317 = vpack.c.b16 %v309, %v308
      %326 = vmatprep.subr.bf16.mxu0 0
      %327 = vmatpush1.bf16.msra.mxu0 %v310
      %328 = vmatprep.subr.bf16.mxu0 0
      %329 = vmatpush1.bf16.msra.mxu0 %v311
      %330 = vmatprep.subr.bf16.mxu0 0
      %331 = vmatpush1.bf16.msra.mxu0 %v312
      %332 = vmatprep.subr.bf16.mxu0 0
      %333 = vmatpush1.bf16.msra.mxu0 %v313
      %334 = vmatprep.subr.bf16.mxu0 0
      %335 = vmatpush1.bf16.msra.mxu0 %v314
      %336 = vmatprep.subr.bf16.mxu0 0
      %337 = vmatpush1.bf16.msra.mxu0 %v315
      %338 = vmatprep.subr.bf16.mxu0 0
      %339 = vmatpush1.bf16.msra.mxu0 %v316
      %340 = vmatprep.subr.bf16.mxu0 0
      %341 = vmatpush1.bf16.msra.mxu0 %v317
      %342 = vmatprep.subr.bf16.mxu0 0
      %343 = vmatpush1.bf16.msra.mxu0 0
      %344 = vmatprep.subr.bf16.mxu0 0
      %345 = vmatpush1.bf16.msra.mxu0 0
      %346 = vmatprep.subr.bf16.mxu0 0
      %347 = vmatpush1.bf16.msra.mxu0 0
      %348 = vmatprep.subr.bf16.mxu0 0
      %349 = vmatpush1.bf16.msra.mxu0 0
      %350 = vmatprep.subr.bf16.mxu0 0
      %351 = vmatpush1.bf16.msra.mxu0 0
      %352 = vmatprep.subr.bf16.mxu0 0
      %353 = vmatpush1.bf16.msra.mxu0 0
      %354 = vmatprep.subr.bf16.mxu0 0
      %355 = vmatpush1.bf16.msra.mxu0 0
      %356 = vmatprep.subr.bf16.mxu0 0
      %357 = vmatpush1.bf16.msra.mxu0 0
      %358 = vmatprep.mubr.bf16.mxu0 0
      %359 = vmatmul.mubr.bf16.gmra.mrb[0].mxu0 %v270
      %v360 = vpop.f32.mrb[0].mxu0
      %v361 = vadd.f32 %v252, %v360
      %v362 = vpop.f32.mrb[0].mxu0
      %v363 = vpop.f32.mrb[0].mxu0
      %v364 = vadd.f32 %v252, %v363
      %v365 = vpop.f32.mrb[0].mxu0
      %366 = vmatprep.mubr.bf16.mxu0 0
      %367 = vmatmul.mubr.bf16.gmra.mrb[0].mxu0 %v271
      %v368 = vpop.f32.mrb[0].mxu0
      %v369 = vadd.f32 %v252, %v368
      %v370 = vpop.f32.mrb[0].mxu0
      %v371 = vpop.f32.mrb[0].mxu0
      %v372 = vadd.f32 %v252, %v371
      %v373 = vpop.f32.mrb[0].mxu0
      %374 = vmatprep.mubr.bf16.mxu0 0
      %375 = vmatmul.mubr.bf16.gmra.mrb[0].mxu0 %v272
      %v376 = vpop.f32.mrb[0].mxu0
      %v377 = vadd.f32 %v252, %v376
      %v378 = vpop.f32.mrb[0].mxu0
      %v379 = vpop.f32.mrb[0].mxu0
      %v380 = vadd.f32 %v252, %v379
      %v381 = vpop.f32.mrb[0].mxu0
      %382 = vmatprep.mubr.bf16.mxu0 0
      %383 = vmatmul.mubr.bf16.gmra.mrb[0].mxu0 %v273
      %v384 = vpop.f32.mrb[0].mxu0
      %v385 = vadd.f32 %v252, %v384
      %v386 = vpop.f32.mrb[0].mxu0
      %v387 = vpop.f32.mrb[0].mxu0
      %v388 = vadd.f32 %v252, %v387
      %v389 = vpop.f32.mrb[0].mxu0
      %390 = vdwg.mxu0
      %v391 = vmax.f32 %v361, 0.0
      %v392 = vmax.f32 %v364, 0.0
      %v393 = vmax.f32 %v369, 0.0
      %v394 = vmax.f32 %v372, 0.0
      %v395 = vmax.f32 %v377, 0.0
      %v396 = vmax.f32 %v380, 0.0
      %v397 = vmax.f32 %v385, 0.0
      %v398 = vmax.f32 %v388, 0.0
      %v399 = vpack.c.bf16 %v392, %v391
      %v400 = vpack.c.bf16 %v394, %v393
      %v401 = vpack.c.bf16 %v396, %v395
      %v402 = vpack.c.bf16 %v398, %v397
      %v407 = vunpack.c.l.b16 %v399
      %v408 = vunpack.c.h.b16 %v399
      %v409 = vunpack.c.l.b16 %v400
      %v410 = vunpack.c.h.b16 %v400
      %v411 = vunpack.c.l.b16 %v401
      %v412 = vunpack.c.h.b16 %v401
      %v413 = vunpack.c.l.b16 %v402
      %v414 = vunpack.c.h.b16 %v402
      %v415 = vpack.c.b16 %v407, %v407
      %v416 = vpack.c.b16 %v408, %v408
      %v417 = vpack.c.b16 %v409, %v409
      %v418 = vpack.c.b16 %v410, %v410
      %v419 = vpack.c.b16 %v411, %v411
      %v420 = vpack.c.b16 %v412, %v412
      %v421 = vpack.c.b16 %v413, %v413
      %v422 = vpack.c.b16 %v414, %v414
      %431 = vst [vmem:[%s221] sm:$0xf] %v415
      %432 = vst [vmem:[%s221 + $0x4] sm:$0xf] %v416
      %433 = vst [vmem:[%s221 + $0x8] sm:$0xf] %v417
      %434 = vst [vmem:[%s221 + $0xc] sm:$0xf] %v418
      %435 = vst [vmem:[%s221 + $0x10] sm:$0xf] %v419
      %436 = vst [vmem:[%s221 + $0x14] sm:$0xf] %v420
      %437 = vst [vmem:[%s221 + $0x18] sm:$0xf] %v421
      %438 = vst [vmem:[%s221 + $0x1c] sm:$0xf] %v422
      %p439 = scmp.lt.s32.totalorder %s18, 1
      %s440 = scalar_select %p439, %s18, 1
      %p441 = scmp.lt.s32.totalorder %s19, 0
      %s442 = scalar_select %p441, %s19, 0
      %s443 = smul.addr %s440, 8
      %s444 = sadd.s32 %s442, %s443
      %s445 = smul.addr %s444, 4
      %s446 = scalar_lea.vmem %s3, %s445
      // Predicated region
      $region33: #{basic_block_forward.3} parent=31 // pred_check
        %p447 = pneg %p124
      $region34: #{basic_block_forward.3} parent=31 // pred_check_branch
        %449 = sbr.rel (%p447) target = $region36
      $region35: #{basic_block_forward.3} parent=31 // pred_region
        _
      $region36: #{basic_block_forward.3} parent=31 // pred_fallthru
        _
    $region32: #{basic_block_forward.3} parent=5 // pred_fallthru
      _
    %p450 = scmp.le.s32.totalorder 2, %s9
    // Predicated region
    $region37: #{basic_block_forward.3} parent=5 // pred_check
      %p451 = pneg %p450
    $region38: #{basic_block_forward.3} parent=5 // pred_check_branch
      %453 = sbr.rel (%p451) target = $region40
    $region39: #{basic_block_forward.3} parent=5 // pred_region
      %s454 = ssub.s32 %s9, 2
      // Predicated region
      $region41: #{basic_block_forward.3} parent=39 // pred_check
        %p455 = pneg %p130
      $region42: #{basic_block_forward.3} parent=39 // pred_check_branch
        %457 = sbr.rel (%p455) target = $region44
      $region43: #{basic_block_forward.3} parent=39 // pred_region
        %p458 = scmp.lt.s32.totalorder %s20, 1
        %s459 = scalar_select %p458, %s20, 1
        %p460 = scmp.lt.s32.totalorder %s21, 0
        %s461 = scalar_select %p460, %s21, 0
        %s462 = smul.addr %s459, 8
        %s463 = sadd.s32 %s461, %s462
        %s464 = smul.addr %s463, 4
        %s465 = scalar_lea.vmem %s3, %s464
      $region44: #{basic_block_forward.3} parent=39 // pred_fallthru
        _
    $region40: #{basic_block_forward.3} parent=5 // pred_fallthru
      _
  $region6: #{basic_block_forward.3} parent=0 // loop_footer
    %s13 = sadd.s32 1, %s9
  $region7: #{basic_block_forward.3} parent=0 // loop_footer_branch
    %8 = sbr.rel target = $region3
  $region8: #{basic_block_forward.3} parent=0 // loop_exit
    _

// kernel: basic_block_forward.4
$region0: #{basic_block_forward.4}
  #allocation0 [shape = 'u32[]', space=smem, size = 0x4, offset = 0x4, fixed_abs, tag = 'smem constant byte address 0x4 - core index']
  #allocation1 [shape = 'u32[144,128]{1,0:T(1,128)}', space=vmem, size = 0x12000, scoped, tag = 'internal scratch']
  %s0 = inlined_call_operand.vmem [shape: bf16[2,100,128], index: 0, kind: input, shape index: {}]
  %s1 = inlined_call_operand.vmem [shape: bf16[1,128,128], index: 1, kind: input, shape index: {}]
  %s2 = inlined_call_operand.vmem [shape: f32[1,128], index: 2, kind: input, shape index: {}]
  %s3 = inlined_call_operand.vmem [shape: bf16[2,100,128], index: 3, kind: output, shape index: {}]
  %s4 = sld [smem:[#allocation0]]
  $region45: #{basic_block_forward.4} parent=0
    _
  %s6 = ssub.s32 1, %s4
  %s7 = scalar_select 0, %s6, %s4
  loop: start=0, step=1, limit=4
  $region2: #{basic_block_forward.4} parent=0 // loop_pre_header
    _
  $region3: #{basic_block_forward.4} parent=0 // loop_header
    %s9 = sphi 0, %s13
    %p10 = scmp.ge.s32.totalorder %s9, 4
    %s16 = sphi 0, %s28
    %s17 = sphi 0, %s24
    %s18 = sphi 0, %s16
    %s19 = sphi 0, %s17
    %s20 = sphi 0, %s18
    %s21 = sphi 0, %s19
    %s31 = sphi 0, %s33
    %s34 = sphi 0, %s31
    %s35 = sphi 0, %s34
    %s51 = sphi 0, %s35
    %s57 = sphi 0, %s59
    %s60 = sphi 0, %s57
    %s61 = sphi 0, %s60
    %s77 = sphi 0, %s61
    %s83 = sphi 0, %s85
    %s86 = sphi 0, %s83
    %s87 = sphi 0, %s86
    %s103 = sphi 0, %s87
    %s111 = sphi 0, %s113
    %s114 = sphi 0, %s111
    %s115 = sphi 0, %s114
    %s131 = sphi 0, %s115
  $region4: #{basic_block_forward.4} parent=0 // loop_header_branch
    %12 = sbr.rel (%p10) target = $region8
  $region5: #{basic_block_forward.4} parent=0 // loop_body
    %s14 = ssub.s32 %s9, 1
    %s15 = ssub.s32 %s9, 2
    %s22 = sadd.s32 1, %s17
    %p23 = scmp.ge.s32.totalorder %s22, 1
    %s24 = scalar_select %p23, 0, %s22
    %s25 = sadd.s32 1, %s16
    %s26 = scalar_select %p23, %s25, %s16
    %p27 = scmp.ge.s32.totalorder %s26, 2
    %s28 = scalar_select %p27, 0, %s26
    %s29 = ssub.s32 %s16, %s28
    %p30 = scmp.eq.s32.totalorder %s29, 0
    %s32 = sadd.s32 %s31, 1
    %s33 = scalar_select %p30, %s31, %s32
    %p36 = pneg %p30
    %p37 = scmp.eq.s32.totalorder %s9, 1
    %p38 = por %p36, %p37
    %p39 = scmp.ne.s32.totalorder %s31, %s34
    %p40 = scmp.eq.s32.totalorder %s9, 0
    %p41 = por %p39, %p40
    %p42 = scmp.ne.s32.totalorder %s31, %s34
    %p43 = scmp.eq.s32.totalorder %s14, 1
    %p44 = por %p42, %p43
    %p45 = scmp.ne.s32.totalorder %s34, %s35
    %p46 = scmp.eq.s32.totalorder %s14, 0
    %p47 = por %p45, %p46
    %p48 = scmp.ne.s32.totalorder %s34, %s35
    %p49 = scmp.eq.s32.totalorder %s15, 1
    %p50 = por %p48, %p49
    %p52 = scmp.ne.s32.totalorder %s35, %s51
    %p53 = scmp.eq.s32.totalorder %s15, 0
    %p54 = por %p52, %p53
    %s55 = ssub.s32 %s17, %s24
    %p56 = scmp.eq.s32.totalorder %s55, 0
    %s58 = sadd.s32 %s57, 1
    %s59 = scalar_select %p56, %s57, %s58
    %p62 = pneg %p56
    %p63 = scmp.eq.s32.totalorder %s9, 1
    %p64 = por %p62, %p63
    %p65 = scmp.ne.s32.totalorder %s57, %s60
    %p66 = scmp.eq.s32.totalorder %s9, 0
    %p67 = por %p65, %p66
    %p68 = scmp.ne.s32.totalorder %s57, %s60
    %p69 = scmp.eq.s32.totalorder %s14, 1
    %p70 = por %p68, %p69
    %p71 = scmp.ne.s32.totalorder %s60, %s61
    %p72 = scmp.eq.s32.totalorder %s14, 0
    %p73 = por %p71, %p72
    %p74 = scmp.ne.s32.totalorder %s60, %s61
    %p75 = scmp.eq.s32.totalorder %s15, 1
    %p76 = por %p74, %p75
    %p78 = scmp.ne.s32.totalorder %s61, %s77
    %p79 = scmp.eq.s32.totalorder %s15, 0
    %p80 = por %p78, %p79
    %s81 = ssub.s32 %s17, %s24
    %p82 = scmp.eq.s32.totalorder %s81, 0
    %s84 = sadd.s32 %s83, 1
    %s85 = scalar_select %p82, %s83, %s84
    %p88 = pneg %p82
    %p89 = scmp.eq.s32.totalorder %s9, 1
    %p90 = por %p88, %p89
    %p91 = scmp.ne.s32.totalorder %s83, %s86
    %p92 = scmp.eq.s32.totalorder %s9, 0
    %p93 = por %p91, %p92
    %p94 = scmp.ne.s32.totalorder %s83, %s86
    %p95 = scmp.eq.s32.totalorder %s14, 1
    %p96 = por %p94, %p95
    %p97 = scmp.ne.s32.totalorder %s86, %s87
    %p98 = scmp.eq.s32.totalorder %s14, 0
    %p99 = por %p97, %p98
    %p100 = scmp.ne.s32.totalorder %s86, %s87
    %p101 = scmp.eq.s32.totalorder %s15, 1
    %p102 = por %p100, %p101
    %p104 = scmp.ne.s32.totalorder %s87, %s103
    %p105 = scmp.eq.s32.totalorder %s15, 0
    %p106 = por %p104, %p105
    %s107 = ssub.s32 %s16, %s28
    %s108 = ssub.s32 %s17, %s24
    %s109 = sor.u32 %s107, %s108
    %p110 = scmp.eq.s32.totalorder %s109, 0
    %s112 = sadd.s32 %s111, 1
    %s113 = scalar_select %p110, %s111, %s112
    %p116 = pneg %p110
    %p117 = scmp.eq.s32.totalorder %s9, 1
    %p118 = por %p116, %p117
    %p119 = scmp.ne.s32.totalorder %s111, %s114
    %p120 = scmp.eq.s32.totalorder %s9, 0
    %p121 = por %p119, %p120
    %p122 = scmp.ne.s32.totalorder %s111, %s114
    %p123 = scmp.eq.s32.totalorder %s14, 1
    %p124 = por %p122, %p123
    %p125 = scmp.ne.s32.totalorder %s114, %s115
    %p126 = scmp.eq.s32.totalorder %s14, 0
    %p127 = por %p125, %p126
    %p128 = scmp.ne.s32.totalorder %s114, %s115
    %p129 = scmp.eq.s32.totalorder %s15, 1
    %p130 = por %p128, %p129
    %p132 = scmp.ne.s32.totalorder %s115, %s131
    %p133 = scmp.eq.s32.totalorder %s15, 0
    %p134 = por %p132, %p133
    %p135 = scmp.le.s32.totalorder 1, %s9
    %p136 = scmp.lt.s32.totalorder %s9, 3
    %p137 = pnand %p135, %p136
    %p138 = pneg %p137
    // Predicated region
    $region9: #{basic_block_forward.4} parent=5 // pred_check
      _
    $region10: #{basic_block_forward.4} parent=5 // pred_check_branch
      %140 = sbr.rel (%p137) target = $region12
    $region11: #{basic_block_forward.4} parent=5 // pred_region
      %s141 = ssub.s32 %s9, 1
      // Predicated region
      $region13: #{basic_block_forward.4} parent=11 // pred_check
        %p142 = pneg %p73
      $region14: #{basic_block_forward.4} parent=11 // pred_check_branch
        %144 = sbr.rel (%p142) target = $region16
      $region15: #{basic_block_forward.4} parent=11 // pred_region
        %p145 = scmp.lt.s32.totalorder %s19, 0
        %s146 = scalar_select %p145, %s19, 0
        %s147 = smul.addr %s146, 4
        %s148 = scalar_lea.vmem %s1, %s147
      $region16: #{basic_block_forward.4} parent=11 // pred_fallthru
        _
      // Predicated region
      $region17: #{basic_block_forward.4} parent=11 // pred_check
        %p149 = pneg %p99
      $region18: #{basic_block_forward.4} parent=11 // pred_check_branch
        %151 = sbr.rel (%p149) target = $region20
      $region19: #{basic_block_forward.4} parent=11 // pred_region
        %p152 = scmp.lt.s32.totalorder %s19, 0
        %s153 = scalar_select %p152, %s19, 0
        %s154 = scalar_lea.vmem %s2, %s153
      $region20: #{basic_block_forward.4} parent=11 // pred_fallthru
        _
    $region12: #{basic_block_forward.4} parent=5 // pred_fallthru
      _
    %p155 = scmp.lt.s32.totalorder %s9, 2
    // Predicated region
    $region21: #{basic_block_forward.4} parent=5 // pred_check
      %p156 = pneg %p155
    $region22: #{basic_block_forward.4} parent=5 // pred_check_branch
      %158 = sbr.rel (%p156) target = $region24
    $region23: #{basic_block_forward.4} parent=5 // pred_region
      // Predicated region
      $region25: #{basic_block_forward.4} parent=23 // pred_check
        %p159 = pneg %p41
      $region26: #{basic_block_forward.4} parent=23 // pred_check_branch
        %161 = sbr.rel (%p159) target = $region28
      $region27: #{basic_block_forward.4} parent=23 // pred_region
        %p162 = scmp.lt.s32.totalorder %s16, 1
        %s163 = scalar_select %p162, %s16, 1
        %s164 = smul.addr %s163, 13
        %s165 = smul.addr %s164, 4
        %s166 = scalar_lea.vmem %s0, %s165
      $region28: #{basic_block_forward.4} parent=23 // pred_fallthru
        _
    $region24: #{basic_block_forward.4} parent=5 // pred_fallthru
      _
    %p167 = scmp.le.s32.totalorder 1, %s9
    %p168 = scmp.lt.s32.totalorder %s9, 3
    %p169 = pnand %p167, %p168
    %p170 = pneg %p169
    // Predicated region
    $region29: #{basic_block_forward.4} parent=5 // pred_check
      _
    $region30: #{basic_block_forward.4} parent=5 // pred_check_branch
      %172 = sbr.rel (%p169) target = $region32
    $region31: #{basic_block_forward.4} parent=5 // pred_region
      %s173 = ssub.s32 %s9, 1
      %p174 = scmp.lt.s32.totalorder %s18, 1
      %s175 = scalar_select %p174, %s18, 1
      %s176 = smul.addr %s175, 13
      %s177 = smul.addr %s176, 4
      %s178 = scalar_lea.vmem %s0, %s177
      %p179 = pneg %p47
      %p180 = pneg %p44
      %p181 = scmp.lt.s32.totalorder %s19, 0
      %s182 = scalar_select %p181, %s19, 0
      %s183 = smul.addr %s182, 4
      %s184 = scalar_lea.vmem %s1, %s183
      %p185 = pneg %p73
      %p186 = pneg %p70
      %p187 = scmp.lt.s32.totalorder %s19, 0
      %s188 = scalar_select %p187, %s19, 0
      %s189 = scalar_lea.vmem %s2, %s188
      %p190 = pneg %p99
      %p191 = pneg %p96
      %p192 = pneg %p127
      %p193 = pneg %p124
      %p194 = scmp.lt.s32.totalorder %s18, 1
      %s195 = scalar_select %p194, %s18, 1
      %p196 = scmp.lt.s32.totalorder %s19, 0
      %s197 = scalar_select %p196, %s19, 0
      %s198 = smul.addr %s195, 13
      %s199 = sadd.s32 %s197, %s198
      %s200 = smul.addr %s199, 4
      %s201 = scalar_lea.vmem %s3, %s200
      %p202 = scmp.lt.s32.totalorder %s18, 1
      %s203 = scalar_select %p202, %s18, 1
      %s204 = smul.addr %s203, 13
      %s205 = smul.addr %s204, 4
      %s206 = scalar_lea.vmem %s0, %s205
      %p207 = scmp.lt.s32.totalorder %s19, 0
      %s208 = scalar_select %p207, %s19, 0
      %s209 = smul.addr %s208, 4
      %s210 = scalar_lea.vmem %s1, %s209
      %p211 = scmp.lt.s32.totalorder %s19, 0
      %s212 = scalar_select %p211, %s19, 0
      %s213 = scalar_lea.vmem %s2, %s212
      %p214 = scmp.lt.s32.totalorder %s18, 1
      %s215 = scalar_select %p214, %s18, 1
      %p216 = scmp.lt.s32.totalorder %s19, 0
      %s217 = scalar_select %p216, %s19, 0
      %s218 = smul.addr %s215, 13
      %s219 = sadd.s32 %s217, %s218
      %s220 = smul.addr %s219, 4
      %s221 = scalar_lea.vmem %s3, %s220
      %v223 = vld [vmem:[%s206] sm:$0xf]
      %v224 = vld [vmem:[%s206 + $0x4] sm:$0xf]
      %v225 = vld [vmem:[%s206 + $0x8] sm:$0xf]
      %v226 = vld [vmem:[%s206 + $0xc] sm:$0xf]
      %v227 = vld [vmem:[%s206 + $0x10] sm:$0xf]
      %v228 = vld [vmem:[%s206 + $0x14] sm:$0xf]
      %v229 = vld [vmem:[%s206 + $0x18] sm:$0xf]
      %v230 = vld [vmem:[%s206 + $0x1c] sm:$0xf]
      %v231 = vld [vmem:[%s206 + $0x20] sm:$0xf]
      %v232 = vld [vmem:[%s206 + $0x24] sm:$0xf]
      %v233 = vld [vmem:[%s206 + $0x28] sm:$0xf]
      %v234 = vld [vmem:[%s206 + $0x2c] sm:$0xf]
      %v235 = vld [vmem:[%s206 + $0x30] sm:$0x3]
      %v236 = vld [vmem:[%s210] sm:$0xf]
      %v237 = vld [vmem:[%s210 + $0x4] sm:$0xf]
      %v238 = vld [vmem:[%s210 + $0x8] sm:$0xf]
      %v239 = vld [vmem:[%s210 + $0xc] sm:$0xf]
      %v240 = vld [vmem:[%s210 + $0x10] sm:$0xf]
      %v241 = vld [vmem:[%s210 + $0x14] sm:$0xf]
      %v242 = vld [vmem:[%s210 + $0x18] sm:$0xf]
      %v243 = vld [vmem:[%s210 + $0x1c] sm:$0xf]
      %v244 = vld [vmem:[%s210 + $0x20] sm:$0xf]
      %v245 = vld [vmem:[%s210 + $0x24] sm:$0xf]
      %v246 = vld [vmem:[%s210 + $0x28] sm:$0xf]
      %v247 = vld [vmem:[%s210 + $0x2c] sm:$0xf]
      %v248 = vld [vmem:[%s210 + $0x30] sm:$0xf]
      %v249 = vld [vmem:[%s210 + $0x34] sm:$0xf]
      %v250 = vld [vmem:[%s210 + $0x38] sm:$0xf]
      %v251 = vld [vmem:[%s210 + $0x3c] sm:$0xf]
      %v252 = vld [vmem:[%s213] sm:$0x1]
      %v254 = vlaneseq
      %v255 = vshrl.u32 %v254, 7
      %v256 = vsub.s32 0, %v255
      %v257 = vrot.slane %v252, %v256
      %v272 = vunpack.c.l.b16 %v223
      %v273 = vunpack.c.l.b16 %v224
      %v274 = vunpack.c.l.b16 %v225
      %v275 = vunpack.c.l.b16 %v226
      %v276 = vunpack.c.l.b16 %v227
      %v277 = vunpack.c.l.b16 %v228
      %v278 = vunpack.c.l.b16 %v229
      %v279 = vunpack.c.l.b16 %v230
      %v280 = vunpack.c.l.b16 %v231
      %v281 = vunpack.c.l.b16 %v232
      %v282 = vunpack.c.l.b16 %v233
      %v283 = vunpack.c.l.b16 %v234
      %v284 = vunpack.c.l.b16 %v235
      %v285 = vpack.c.b16 %v273, %v272
      %v286 = vpack.c.b16 %v275, %v274
      %v287 = vpack.c.b16 %v277, %v276
      %v288 = vpack.c.b16 %v279, %v278
      %v289 = vpack.c.b16 %v281, %v280
      %v290 = vpack.c.b16 %v283, %v282
      %v291 = vpack.c.b16 %v284, %v284
      %v315 = vunpack.c.l.b16 %v236
      %v316 = vunpack.c.l.b16 %v237
      %v317 = vunpack.c.l.b16 %v238
      %v318 = vunpack.c.l.b16 %v239
      %v319 = vunpack.c.l.b16 %v240
      %v320 = vunpack.c.l.b16 %v241
      %v321 = vunpack.c.l.b16 %v242
      %v322 = vunpack.c.l.b16 %v243
      %v323 = vunpack.c.l.b16 %v244
      %v324 = vunpack.c.l.b16 %v245
      %v325 = vunpack.c.l.b16 %v246
      %v326 = vunpack.c.l.b16 %v247
      %v327 = vunpack.c.l.b16 %v248
      %v328 = vunpack.c.l.b16 %v249
      %v329 = vunpack.c.l.b16 %v250
      %v330 = vunpack.c.l.b16 %v251
      %v331 = vpack.c.b16 %v316, %v315
      %v332 = vpack.c.b16 %v318, %v317
      %v333 = vpack.c.b16 %v320, %v319
      %v334 = vpack.c.b16 %v322, %v321
      %v335 = vpack.c.b16 %v324, %v323
      %v336 = vpack.c.b16 %v326, %v325
      %v337 = vpack.c.b16 %v328, %v327
      %v338 = vpack.c.b16 %v330, %v329
      %347 = vmatprep.subr.bf16.mxu0 0
      %348 = vmatpush1.bf16.msra.mxu0 %v331
      %349 = vmatprep.subr.bf16.mxu0 0
      %350 = vmatpush1.bf16.msra.mxu0 %v332
      %351 = vmatprep.subr.bf16.mxu0 0
      %352 = vmatpush1.bf16.msra.mxu0 %v333
      %353 = vmatprep.subr.bf16.mxu0 0
      %354 = vmatpush1.bf16.msra.mxu0 %v334
      %355 = vmatprep.subr.bf16.mxu0 0
      %356 = vmatpush1.bf16.msra.mxu0 %v335
      %357 = vmatprep.subr.bf16.mxu0 0
      %358 = vmatpush1.bf16.msra.mxu0 %v336
      %359 = vmatprep.subr.bf16.mxu0 0
      %360 = vmatpush1.bf16.msra.mxu0 %v337
      %361 = vmatprep.subr.bf16.mxu0 0
      %362 = vmatpush1.bf16.msra.mxu0 %v338
      %363 = vmatprep.subr.bf16.mxu0 0
      %364 = vmatpush1.bf16.msra.mxu0 0
      %365 = vmatprep.subr.bf16.mxu0 0
      %366 = vmatpush1.bf16.msra.mxu0 0
      %367 = vmatprep.subr.bf16.mxu0 0
      %368 = vmatpush1.bf16.msra.mxu0 0
      %369 = vmatprep.subr.bf16.mxu0 0
      %370 = vmatpush1.bf16.msra.mxu0 0
      %371 = vmatprep.subr.bf16.mxu0 0
      %372 = vmatpush1.bf16.msra.mxu0 0
      %373 = vmatprep.subr.bf16.mxu0 0
      %374 = vmatpush1.bf16.msra.mxu0 0
      %375 = vmatprep.subr.bf16.mxu0 0
      %376 = vmatpush1.bf16.msra.mxu0 0
      %377 = vmatprep.subr.bf16.mxu0 0
      %378 = vmatpush1.bf16.msra.mxu0 0
      %379 = vmatprep.mubr.bf16.mxu0 0
      %380 = vmatmul.mubr.bf16.gmra.mrb[0].mxu0 %v285
      %v381 = vpop.f32.mrb[0].mxu0
      %v382 = vadd.f32 %v257, %v381
      %v383 = vpop.f32.mrb[0].mxu0
      %v384 = vpop.f32.mrb[0].mxu0
      %v385 = vadd.f32 %v257, %v384
      %v386 = vpop.f32.mrb[0].mxu0
      %387 = vmatprep.mubr.bf16.mxu0 0
      %388 = vmatmul.mubr.bf16.gmra.mrb[0].mxu0 %v286
      %v389 = vpop.f32.mrb[0].mxu0
      %v390 = vadd.f32 %v257, %v389
      %v391 = vpop.f32.mrb[0].mxu0
      %v392 = vpop.f32.mrb[0].mxu0
      %v393 = vadd.f32 %v257, %v392
      %v394 = vpop.f32.mrb[0].mxu0
      %395 = vmatprep.mubr.bf16.mxu0 0
      %396 = vmatmul.mubr.bf16.gmra.mrb[0].mxu0 %v287
      %v397 = vpop.f32.mrb[0].mxu0
      %v398 = vadd.f32 %v257, %v397
      %v399 = vpop.f32.mrb[0].mxu0
      %v400 = vpop.f32.mrb[0].mxu0
      %v401 = vadd.f32 %v257, %v400
      %v402 = vpop.f32.mrb[0].mxu0
      %403 = vmatprep.mubr.bf16.mxu0 0
      %404 = vmatmul.mubr.bf16.gmra.mrb[0].mxu0 %v288
      %v405 = vpop.f32.mrb[0].mxu0
      %v406 = vadd.f32 %v257, %v405
      %v407 = vpop.f32.mrb[0].mxu0
      %v408 = vpop.f32.mrb[0].mxu0
      %v409 = vadd.f32 %v257, %v408
      %v410 = vpop.f32.mrb[0].mxu0
      %411 = vmatprep.mubr.bf16.mxu0 0
      %412 = vmatmul.mubr.bf16.gmra.mrb[0].mxu0 %v289
      %v413 = vpop.f32.mrb[0].mxu0
      %v414 = vadd.f32 %v257, %v413
      %v415 = vpop.f32.mrb[0].mxu0
      %v416 = vpop.f32.mrb[0].mxu0
      %v417 = vadd.f32 %v257, %v416
      %v418 = vpop.f32.mrb[0].mxu0
      %419 = vmatprep.mubr.bf16.mxu0 0
      %420 = vmatmul.mubr.bf16.gmra.mrb[0].mxu0 %v290
      %v421 = vpop.f32.mrb[0].mxu0
      %v422 = vadd.f32 %v257, %v421
      %v423 = vpop.f32.mrb[0].mxu0
      %v424 = vpop.f32.mrb[0].mxu0
      %v425 = vadd.f32 %v257, %v424
      %v426 = vpop.f32.mrb[0].mxu0
      %427 = vmatprep.mubr.bf16.mxu0 0
      %428 = vmatmul.mubr.bf16.gmra.mrb[0].mxu0 %v291
      %v429 = vpop.f32.mrb[0].mxu0
      %v430 = vadd.f32 %v257, %v429
      %v431 = vpop.f32.mrb[0].mxu0
      %v432 = vpop.f32.mrb[0].mxu0
      %v433 = vpop.f32.mrb[0].mxu0
      %434 = vdwg.mxu0
      %v435 = vpack.c.bf16 %v385, %v382
      %v436 = vpack.c.bf16 %v393, %v390
      %v437 = vpack.c.bf16 %v401, %v398
      %v438 = vpack.c.bf16 %v409, %v406
      %v439 = vpack.c.bf16 %v417, %v414
      %v440 = vpack.c.bf16 %v425, %v422
      %v441 = vpack.c.bf16 %v430, %v430
      %v449 = vunpack.c.l.b16 %v435
      %v450 = vunpack.c.h.b16 %v435
      %v451 = vunpack.c.l.b16 %v436
      %v452 = vunpack.c.h.b16 %v436
      %v453 = vunpack.c.l.b16 %v437
      %v454 = vunpack.c.h.b16 %v437
      %v455 = vunpack.c.l.b16 %v438
      %v456 = vunpack.c.h.b16 %v438
      %v457 = vunpack.c.l.b16 %v439
      %v458 = vunpack.c.h.b16 %v439
      %v459 = vunpack.c.l.b16 %v440
      %v460 = vunpack.c.h.b16 %v440
      %v461 = vunpack.c.l.b16 %v441
      %v462 = vpack.c.b16 %v449, %v449
      %v463 = vpack.c.b16 %v450, %v450
      %v464 = vpack.c.b16 %v451, %v451
      %v465 = vpack.c.b16 %v452, %v452
      %v466 = vpack.c.b16 %v453, %v453
      %v467 = vpack.c.b16 %v454, %v454
      %v468 = vpack.c.b16 %v455, %v455
      %v469 = vpack.c.b16 %v456, %v456
      %v470 = vpack.c.b16 %v457, %v457
      %v471 = vpack.c.b16 %v458, %v458
      %v472 = vpack.c.b16 %v459, %v459
      %v473 = vpack.c.b16 %v460, %v460
      %v474 = vpack.c.b16 %v461, %v461
      %488 = vst [vmem:[%s221] sm:$0xf] %v462
      %489 = vst [vmem:[%s221 + $0x4] sm:$0xf] %v463
      %490 = vst [vmem:[%s221 + $0x8] sm:$0xf] %v464
      %491 = vst [vmem:[%s221 + $0xc] sm:$0xf] %v465
      %492 = vst [vmem:[%s221 + $0x10] sm:$0xf] %v466
      %493 = vst [vmem:[%s221 + $0x14] sm:$0xf] %v467
      %494 = vst [vmem:[%s221 + $0x18] sm:$0xf] %v468
      %495 = vst [vmem:[%s221 + $0x1c] sm:$0xf] %v469
      %496 = vst [vmem:[%s221 + $0x20] sm:$0xf] %v470
      %497 = vst [vmem:[%s221 + $0x24] sm:$0xf] %v471
      %498 = vst [vmem:[%s221 + $0x28] sm:$0xf] %v472
      %499 = vst [vmem:[%s221 + $0x2c] sm:$0xf] %v473
      %500 = vst [vmem:[%s221 + $0x30] sm:$0x3] %v474
      %p501 = scmp.lt.s32.totalorder %s18, 1
      %s502 = scalar_select %p501, %s18, 1
      %p503 = scmp.lt.s32.totalorder %s19, 0
      %s504 = scalar_select %p503, %s19, 0
      %s505 = smul.addr %s502, 13
      %s506 = sadd.s32 %s504, %s505
      %s507 = smul.addr %s506, 4
      %s508 = scalar_lea.vmem %s3, %s507
      // Predicated region
      $region33: #{basic_block_forward.4} parent=31 // pred_check
        %p509 = pneg %p124
      $region34: #{basic_block_forward.4} parent=31 // pred_check_branch
        %511 = sbr.rel (%p509) target = $region36
      $region35: #{basic_block_forward.4} parent=31 // pred_region
        _
      $region36: #{basic_block_forward.4} parent=31 // pred_fallthru
        _
    $region32: #{basic_block_forward.4} parent=5 // pred_fallthru
      _
    %p512 = scmp.le.s32.totalorder 2, %s9
    // Predicated region
    $region37: #{basic_block_forward.4} parent=5 // pred_check
      %p513 = pneg %p512
    $region38: #{basic_block_forward.4} parent=5 // pred_check_branch
      %515 = sbr.rel (%p513) target = $region40
    $region39: #{basic_block_forward.4} parent=5 // pred_region
      %s516 = ssub.s32 %s9, 2
      // Predicated region
      $region41: #{basic_block_forward.4} parent=39 // pred_check
        %p517 = pneg %p130
      $region42: #{basic_block_forward.4} parent=39 // pred_check_branch
        %519 = sbr.rel (%p517) target = $region44
      $region43: #{basic_block_forward.4} parent=39 // pred_region
        %p520 = scmp.lt.s32.totalorder %s20, 1
        %s521 = scalar_select %p520, %s20, 1
        %p522 = scmp.lt.s32.totalorder %s21, 0
        %s523 = scalar_select %p522, %s21, 0
        %s524 = smul.addr %s521, 13
        %s525 = sadd.s32 %s523, %s524
        %s526 = smul.addr %s525, 4
        %s527 = scalar_lea.vmem %s3, %s526
      $region44: #{basic_block_forward.4} parent=39 // pred_fallthru
        _
    $region40: #{basic_block_forward.4} parent=5 // pred_fallthru
      _
  $region6: #{basic_block_forward.4} parent=0 // loop_footer
    %s13 = sadd.s32 1, %s9
  $region7: #{basic_block_forward.4} parent=0 // loop_footer_branch
    %8 = sbr.rel target = $region3
  $region8: #{basic_block_forward.4} parent=0 // loop_exit
    _

// kernel: basic_block_forward.5
$region0: #{basic_block_forward.5}
  #allocation0 [shape = 'u32[]', space=smem, size = 0x4, offset = 0x4, fixed_abs, tag = 'smem constant byte address 0x4 - core index']
  #allocation1 [shape = 'u32[144,128]{1,0:T(1,128)}', space=vmem, size = 0x12000, scoped, tag = 'internal scratch']
  %s0 = inlined_call_operand.vmem [shape: bf16[2,122,128], index: 0, kind: input, shape index: {}]
  %s1 = inlined_call_operand.vmem [shape: bf16[9,128,128], index: 1, kind: input, shape index: {}]
  %s2 = inlined_call_operand.vmem [shape: f32[1,128], index: 2, kind: input, shape index: {}]
  %s3 = inlined_call_operand.vmem [shape: bf16[2,100,128], index: 3, kind: input, shape index: {}]
  %s4 = inlined_call_operand.vmem [shape: f32[2,100,128], index: 4, kind: output, shape index: {}]
  %s5 = sld [smem:[#allocation0]]
  $region49: #{basic_block_forward.5} parent=0
    _
  %s7 = ssub.s32 1, %s5
  %s8 = scalar_select 0, %s7, %s5
  loop: start=0, step=1, limit=4
  $region2: #{basic_block_forward.5} parent=0 // loop_pre_header
    _
  $region3: #{basic_block_forward.5} parent=0 // loop_header
    %s10 = sphi 0, %s14
    %p11 = scmp.ge.s32.totalorder %s10, 4
    %s17 = sphi 0, %s29
    %s18 = sphi 0, %s25
    %s19 = sphi 0, %s17
    %s20 = sphi 0, %s18
    %s21 = sphi 0, %s19
    %s22 = sphi 0, %s20
    %s32 = sphi 0, %s34
    %s35 = sphi 0, %s32
    %s36 = sphi 0, %s35
    %s52 = sphi 0, %s36
    %s58 = sphi 0, %s60
    %s61 = sphi 0, %s58
    %s62 = sphi 0, %s61
    %s78 = sphi 0, %s62
    %s84 = sphi 0, %s86
    %s87 = sphi 0, %s84
    %s88 = sphi 0, %s87
    %s104 = sphi 0, %s88
    %s112 = sphi 0, %s114
    %s115 = sphi 0, %s112
    %s116 = sphi 0, %s115
    %s132 = sphi 0, %s116
    %s140 = sphi 0, %s142
    %s143 = sphi 0, %s140
    %s144 = sphi 0, %s143
    %s160 = sphi 0, %s144
  $region4: #{basic_block_forward.5} parent=0 // loop_header_branch
    %13 = sbr.rel (%p11) target = $region8
  $region5: #{basic_block_forward.5} parent=0 // loop_body
    %s15 = ssub.s32 %s10, 1
    %s16 = ssub.s32 %s10, 2
    %s23 = sadd.s32 1, %s18
    %p24 = scmp.ge.s32.totalorder %s23, 1
    %s25 = scalar_select %p24, 0, %s23
    %s26 = sadd.s32 1, %s17
    %s27 = scalar_select %p24, %s26, %s17
    %p28 = scmp.ge.s32.totalorder %s27, 2
    %s29 = scalar_select %p28, 0, %s27
    %s30 = ssub.s32 %s17, %s29
    %p31 = scmp.eq.s32.totalorder %s30, 0
    %s33 = sadd.s32 %s32, 1
    %s34 = scalar_select %p31, %s32, %s33
    %p37 = pneg %p31
    %p38 = scmp.eq.s32.totalorder %s10, 1
    %p39 = por %p37, %p38
    %p40 = scmp.ne.s32.totalorder %s32, %s35
    %p41 = scmp.eq.s32.totalorder %s10, 0
    %p42 = por %p40, %p41
    %p43 = scmp.ne.s32.totalorder %s32, %s35
    %p44 = scmp.eq.s32.totalorder %s15, 1
    %p45 = por %p43, %p44
    %p46 = scmp.ne.s32.totalorder %s35, %s36
    %p47 = scmp.eq.s32.totalorder %s15, 0
    %p48 = por %p46, %p47
    %p49 = scmp.ne.s32.totalorder %s35, %s36
    %p50 = scmp.eq.s32.totalorder %s16, 1
    %p51 = por %p49, %p50
    %p53 = scmp.ne.s32.totalorder %s36, %s52
    %p54 = scmp.eq.s32.totalorder %s16, 0
    %p55 = por %p53, %p54
    %s56 = ssub.s32 %s18, %s25
    %p57 = scmp.eq.s32.totalorder %s56, 0
    %s59 = sadd.s32 %s58, 1
    %s60 = scalar_select %p57, %s58, %s59
    %p63 = pneg %p57
    %p64 = scmp.eq.s32.totalorder %s10, 1
    %p65 = por %p63, %p64
    %p66 = scmp.ne.s32.totalorder %s58, %s61
    %p67 = scmp.eq.s32.totalorder %s10, 0
    %p68 = por %p66, %p67
    %p69 = scmp.ne.s32.totalorder %s58, %s61
    %p70 = scmp.eq.s32.totalorder %s15, 1
    %p71 = por %p69, %p70
    %p72 = scmp.ne.s32.totalorder %s61, %s62
    %p73 = scmp.eq.s32.totalorder %s15, 0
    %p74 = por %p72, %p73
    %p75 = scmp.ne.s32.totalorder %s61, %s62
    %p76 = scmp.eq.s32.totalorder %s16, 1
    %p77 = por %p75, %p76
    %p79 = scmp.ne.s32.totalorder %s62, %s78
    %p80 = scmp.eq.s32.totalorder %s16, 0
    %p81 = por %p79, %p80
    %s82 = ssub.s32 %s18, %s25
    %p83 = scmp.eq.s32.totalorder %s82, 0
    %s85 = sadd.s32 %s84, 1
    %s86 = scalar_select %p83, %s84, %s85
    %p89 = pneg %p83
    %p90 = scmp.eq.s32.totalorder %s10, 1
    %p91 = por %p89, %p90
    %p92 = scmp.ne.s32.totalorder %s84, %s87
    %p93 = scmp.eq.s32.totalorder %s10, 0
    %p94 = por %p92, %p93
    %p95 = scmp.ne.s32.totalorder %s84, %s87
    %p96 = scmp.eq.s32.totalorder %s15, 1
    %p97 = por %p95, %p96
    %p98 = scmp.ne.s32.totalorder %s87, %s88
    %p99 = scmp.eq.s32.totalorder %s15, 0
    %p100 = por %p98, %p99
    %p101 = scmp.ne.s32.totalorder %s87, %s88
    %p102 = scmp.eq.s32.totalorder %s16, 1
    %p103 = por %p101, %p102
    %p105 = scmp.ne.s32.totalorder %s88, %s104
    %p106 = scmp.eq.s32.totalorder %s16, 0
    %p107 = por %p105, %p106
    %s108 = ssub.s32 %s17, %s29
    %s109 = ssub.s32 %s18, %s25
    %s110 = sor.u32 %s108, %s109
    %p111 = scmp.eq.s32.totalorder %s110, 0
    %s113 = sadd.s32 %s112, 1
    %s114 = scalar_select %p111, %s112, %s113
    %p117 = pneg %p111
    %p118 = scmp.eq.s32.totalorder %s10, 1
    %p119 = por %p117, %p118
    %p120 = scmp.ne.s32.totalorder %s112, %s115
    %p121 = scmp.eq.s32.totalorder %s10, 0
    %p122 = por %p120, %p121
    %p123 = scmp.ne.s32.totalorder %s112, %s115
    %p124 = scmp.eq.s32.totalorder %s15, 1
    %p125 = por %p123, %p124
    %p126 = scmp.ne.s32.totalorder %s115, %s116
    %p127 = scmp.eq.s32.totalorder %s15, 0
    %p128 = por %p126, %p127
    %p129 = scmp.ne.s32.totalorder %s115, %s116
    %p130 = scmp.eq.s32.totalorder %s16, 1
    %p131 = por %p129, %p130
    %p133 = scmp.ne.s32.totalorder %s116, %s132
    %p134 = scmp.eq.s32.totalorder %s16, 0
    %p135 = por %p133, %p134
    %s136 = ssub.s32 %s17, %s29
    %s137 = ssub.s32 %s18, %s25
    %s138 = sor.u32 %s136, %s137
    %p139 = scmp.eq.s32.totalorder %s138, 0
    %s141 = sadd.s32 %s140, 1
    %s142 = scalar_select %p139, %s140, %s141
    %p145 = pneg %p139
    %p146 = scmp.eq.s32.totalorder %s10, 1
    %p147 = por %p145, %p146
    %p148 = scmp.ne.s32.totalorder %s140, %s143
    %p149 = scmp.eq.s32.totalorder %s10, 0
    %p150 = por %p148, %p149
    %p151 = scmp.ne.s32.totalorder %s140, %s143
    %p152 = scmp.eq.s32.totalorder %s15, 1
    %p153 = por %p151, %p152
    %p154 = scmp.ne.s32.totalorder %s143, %s144
    %p155 = scmp.eq.s32.totalorder %s15, 0
    %p156 = por %p154, %p155
    %p157 = scmp.ne.s32.totalorder %s143, %s144
    %p158 = scmp.eq.s32.totalorder %s16, 1
    %p159 = por %p157, %p158
    %p161 = scmp.ne.s32.totalorder %s144, %s160
    %p162 = scmp.eq.s32.totalorder %s16, 0
    %p163 = por %p161, %p162
    %p164 = scmp.le.s32.totalorder 1, %s10
    %p165 = scmp.lt.s32.totalorder %s10, 3
    %p166 = pnand %p164, %p165
    %p167 = pneg %p166
    // Predicated region
    $region9: #{basic_block_forward.5} parent=5 // pred_check
      _
    $region10: #{basic_block_forward.5} parent=5 // pred_check_branch
      %169 = sbr.rel (%p166) target = $region12
    $region11: #{basic_block_forward.5} parent=5 // pred_region
      %s170 = ssub.s32 %s10, 1
      // Predicated region
      $region13: #{basic_block_forward.5} parent=11 // pred_check
        %p171 = pneg %p74
      $region14: #{basic_block_forward.5} parent=11 // pred_check_branch
        %173 = sbr.rel (%p171) target = $region16
      $region15: #{basic_block_forward.5} parent=11 // pred_region
        %p174 = scmp.lt.s32.totalorder %s20, 0
        %s175 = scalar_select %p174, %s20, 0
        %s176 = smul.addr %s175, 4
        %s177 = scalar_lea.vmem %s1, %s176
      $region16: #{basic_block_forward.5} parent=11 // pred_fallthru
        _
      // Predicated region
      $region17: #{basic_block_forward.5} parent=11 // pred_check
        %p178 = pneg %p100
      $region18: #{basic_block_forward.5} parent=11 // pred_check_branch
        %180 = sbr.rel (%p178) target = $region20
      $region19: #{basic_block_forward.5} parent=11 // pred_region
        %p181 = scmp.lt.s32.totalorder %s20, 0
        %s182 = scalar_select %p181, %s20, 0
        %s183 = scalar_lea.vmem %s2, %s182
      $region20: #{basic_block_forward.5} parent=11 // pred_fallthru
        _
    $region12: #{basic_block_forward.5} parent=5 // pred_fallthru
      _
    %p184 = scmp.lt.s32.totalorder %s10, 2
    // Predicated region
    $region21: #{basic_block_forward.5} parent=5 // pred_check
      %p185 = pneg %p184
    $region22: #{basic_block_forward.5} parent=5 // pred_check_branch
      %187 = sbr.rel (%p185) target = $region24
    $region23: #{basic_block_forward.5} parent=5 // pred_region
      // Predicated region
      $region25: #{basic_block_forward.5} parent=23 // pred_check
        %p188 = pneg %p42
      $region26: #{basic_block_forward.5} parent=23 // pred_check_branch
        %190 = sbr.rel (%p188) target = $region28
      $region27: #{basic_block_forward.5} parent=23 // pred_region
        %p191 = scmp.lt.s32.totalorder %s17, 1
        %s192 = scalar_select %p191, %s17, 1
        %s193 = smul.addr %s192, 16
        %s194 = smul.addr %s193, 4
        %s195 = scalar_lea.vmem %s0, %s194
      $region28: #{basic_block_forward.5} parent=23 // pred_fallthru
        _
      // Predicated region
      $region29: #{basic_block_forward.5} parent=23 // pred_check
        %p196 = pneg %p122
      $region30: #{basic_block_forward.5} parent=23 // pred_check_branch
        %198 = sbr.rel (%p196) target = $region32
      $region31: #{basic_block_forward.5} parent=23 // pred_region
        %p199 = scmp.lt.s32.totalorder %s17, 1
        %s200 = scalar_select %p199, %s17, 1
        %p201 = scmp.lt.s32.totalorder %s18, 0
        %s202 = scalar_select %p201, %s18, 0
        %s203 = smul.addr %s200, 13
        %s204 = sadd.s32 %s202, %s203
        %s205 = smul.addr %s204, 4
        %s206 = scalar_lea.vmem %s3, %s205
      $region32: #{basic_block_forward.5} parent=23 // pred_fallthru
        _
    $region24: #{basic_block_forward.5} parent=5 // pred_fallthru
      _
    %p207 = scmp.le.s32.totalorder 1, %s10
    %p208 = scmp.lt.s32.totalorder %s10, 3
    %p209 = pnand %p207, %p208
    %p210 = pneg %p209
    // Predicated region
    $region33: #{basic_block_forward.5} parent=5 // pred_check
      _
    $region34: #{basic_block_forward.5} parent=5 // pred_check_branch
      %212 = sbr.rel (%p209) target = $region36
    $region35: #{basic_block_forward.5} parent=5 // pred_region
      %s213 = ssub.s32 %s10, 1
      %p214 = scmp.lt.s32.totalorder %s19, 1
      %s215 = scalar_select %p214, %s19, 1
      %s216 = smul.addr %s215, 16
      %s217 = smul.addr %s216, 4
      %s218 = scalar_lea.vmem %s0, %s217
      %p219 = pneg %p48
      %p220 = pneg %p45
      %p221 = scmp.lt.s32.totalorder %s20, 0
      %s222 = scalar_select %p221, %s20, 0
      %s223 = smul.addr %s222, 4
      %s224 = scalar_lea.vmem %s1, %s223
      %p225 = pneg %p74
      %p226 = pneg %p71
      %p227 = scmp.lt.s32.totalorder %s20, 0
      %s228 = scalar_select %p227, %s20, 0
      %s229 = scalar_lea.vmem %s2, %s228
      %p230 = pneg %p100
      %p231 = pneg %p97
      %p232 = scmp.lt.s32.totalorder %s19, 1
      %s233 = scalar_select %p232, %s19, 1
      %p234 = scmp.lt.s32.totalorder %s20, 0
      %s235 = scalar_select %p234, %s20, 0
      %s236 = smul.addr %s233, 13
      %s237 = sadd.s32 %s235, %s236
      %s238 = smul.addr %s237, 4
      %s239 = scalar_lea.vmem %s3, %s238
      %p240 = pneg %p128
      %p241 = pneg %p125
      %p242 = pneg %p156
      %p243 = pneg %p153
      %p244 = scmp.lt.s32.totalorder %s19, 1
      %s245 = scalar_select %p244, %s19, 1
      %p246 = scmp.lt.s32.totalorder %s20, 0
      %s247 = scalar_select %p246, %s20, 0
      %s248 = smul.addr %s245, 13
      %s249 = sadd.s32 %s247, %s248
      %s250 = smul.addr %s249, 8
      %s251 = scalar_lea.vmem %s4, %s250
      %p252 = scmp.lt.s32.totalorder %s19, 1
      %s253 = scalar_select %p252, %s19, 1
      %s254 = smul.addr %s253, 16
      %s255 = smul.addr %s254, 4
      %s256 = scalar_lea.vmem %s0, %s255
      %p257 = scmp.lt.s32.totalorder %s20, 0
      %s258 = scalar_select %p257, %s20, 0
      %s259 = smul.addr %s258, 4
      %s260 = scalar_lea.vmem %s1, %s259
      %p261 = scmp.lt.s32.totalorder %s20, 0
      %s262 = scalar_select %p261, %s20, 0
      %s263 = scalar_lea.vmem %s2, %s262
      %p264 = scmp.lt.s32.totalorder %s19, 1
      %s265 = scalar_select %p264, %s19, 1
      %p266 = scmp.lt.s32.totalorder %s20, 0
      %s267 = scalar_select %p266, %s20, 0
      %s268 = smul.addr %s265, 13
      %s269 = sadd.s32 %s267, %s268
      %s270 = smul.addr %s269, 4
      %s271 = scalar_lea.vmem %s3, %s270
      %p272 = scmp.lt.s32.totalorder %s19, 1
      %s273 = scalar_select %p272, %s19, 1
      %p274 = scmp.lt.s32.totalorder %s20, 0
      %s275 = scalar_select %p274, %s20, 0
      %s276 = smul.addr %s273, 13
      %s277 = sadd.s32 %s275, %s276
      %s278 = smul.addr %s277, 8
      %s279 = scalar_lea.vmem %s4, %s278
      %v281 = vld [vmem:[%s256] sm:$0xf]
      %v282 = vld [vmem:[%s256 + $0x4] sm:$0xf]
      %v283 = vld [vmem:[%s256 + $0x8] sm:$0xf]
      %v284 = vld [vmem:[%s256 + $0xc] sm:$0xf]
      %v285 = vld [vmem:[%s256 + $0x10] sm:$0xf]
      %v286 = vld [vmem:[%s256 + $0x14] sm:$0xf]
      %v287 = vld [vmem:[%s256 + $0x18] sm:$0xf]
      %v288 = vld [vmem:[%s256 + $0x1c] sm:$0xf]
      %v289 = vld [vmem:[%s256 + $0x20] sm:$0xf]
      %v290 = vld [vmem:[%s256 + $0x24] sm:$0xf]
      %v291 = vld [vmem:[%s256 + $0x28] sm:$0xf]
      %v292 = vld [vmem:[%s256 + $0x2c] sm:$0xf]
      %v293 = vld [vmem:[%s256 + $0x30] sm:$0x3]
      %v294 = vld [vmem:[%s260] sm:$0xf]
      %v295 = vld [vmem:[%s260 + $0x4] sm:$0xf]
      %v296 = vld [vmem:[%s260 + $0x8] sm:$0xf]
      %v297 = vld [vmem:[%s260 + $0xc] sm:$0xf]
      %v298 = vld [vmem:[%s260 + $0x10] sm:$0xf]
      %v299 = vld [vmem:[%s260 + $0x14] sm:$0xf]
      %v300 = vld [vmem:[%s260 + $0x18] sm:$0xf]
      %v301 = vld [vmem:[%s260 + $0x1c] sm:$0xf]
      %v302 = vld [vmem:[%s260 + $0x20] sm:$0xf]
      %v303 = vld [vmem:[%s260 + $0x24] sm:$0xf]
      %v304 = vld [vmem:[%s260 + $0x28] sm:$0xf]
      %v305 = vld [vmem:[%s260 + $0x2c] sm:$0xf]
      %v306 = vld [vmem:[%s260 + $0x30] sm:$0xf]
      %v307 = vld [vmem:[%s260 + $0x34] sm:$0xf]
      %v308 = vld [vmem:[%s260 + $0x38] sm:$0xf]
      %v309 = vld [vmem:[%s260 + $0x3c] sm:$0xf]
      %v310 = vld [vmem:[%s256 + $0x30] sm:$0x7]
      %s311 = scalar_lea.vmem %s260, 64
      %v312 = vld [vmem:[%s311] sm:$0xf]
      %v313 = vld [vmem:[%s311 + $0x4] sm:$0xf]
      %v314 = vld [vmem:[%s311 + $0x8] sm:$0xf]
      %v315 = vld [vmem:[%s311 + $0xc] sm:$0xf]
      %v316 = vld [vmem:[%s311 + $0x10] sm:$0xf]
      %v317 = vld [vmem:[%s311 + $0x14] sm:$0xf]
      %v318 = vld [vmem:[%s311 + $0x18] sm:$0xf]
      %v319 = vld [vmem:[%s311 + $0x1c] sm:$0xf]
      %v320 = vld [vmem:[%s311 + $0x20] sm:$0xf]
      %v321 = vld [vmem:[%s311 + $0x24] sm:$0xf]
      %v322 = vld [vmem:[%s311 + $0x28] sm:$0xf]
      %v323 = vld [vmem:[%s311 + $0x2c] sm:$0xf]
      %v324 = vld [vmem:[%s311 + $0x30] sm:$0xf]
      %v325 = vld [vmem:[%s311 + $0x34] sm:$0xf]
      %v326 = vld [vmem:[%s311 + $0x38] sm:$0xf]
      %v327 = vld [vmem:[%s311 + $0x3c] sm:$0xf]
      %v341 = vunpack.c.l.b16 %v281
      %v342 = vunpack.c.l.b16 %v282
      %v343 = vunpack.c.l.b16 %v283
      %v344 = vunpack.c.l.b16 %v284
      %v345 = vunpack.c.l.b16 %v285
      %v346 = vunpack.c.l.b16 %v286
      %v347 = vunpack.c.l.b16 %v287
      %v348 = vunpack.c.l.b16 %v288
      %v349 = vunpack.c.l.b16 %v289
      %v350 = vunpack.c.l.b16 %v290
      %v351 = vunpack.c.l.b16 %v291
      %v352 = vunpack.c.l.b16 %v292
      %v353 = vunpack.c.l.b16 %v310
      %v354 = vpack.c.b16 %v342, %v341
      %v355 = vpack.c.b16 %v344, %v343
      %v356 = vpack.c.b16 %v346, %v345
      %v357 = vpack.c.b16 %v348, %v347
      %v358 = vpack.c.b16 %v350, %v349
      %v359 = vpack.c.b16 %v352, %v351
      %v360 = vpack.c.b16 %v353, %v353
      %vm361 = vsmask.f32 7424
      %v363 = vshrl.u32 %v354, 16
      %v365 = vshll.u32 %v354, 16
      %v367 = vrot.slane %v365, 1
      %v368 = vor.u32 %v363, %v367
      %v370 = vshll.u32 %v355, 16
      %v372 = vrot.slane %v370, 1
      %v373 = vsel %vm361, %v368, %v372
      %v374 = vshrl.u32 %v355, 16
      %v376 = vor.u32 %v374, %v372
      %v378 = vshll.u32 %v356, 16
      %v380 = vrot.slane %v378, 1
      %v381 = vsel %vm361, %v376, %v380
      %v382 = vshrl.u32 %v356, 16
      %v384 = vor.u32 %v382, %v380
      %v386 = vshll.u32 %v357, 16
      %v388 = vrot.slane %v386, 1
      %v389 = vsel %vm361, %v384, %v388
      %v390 = vshrl.u32 %v357, 16
      %v392 = vor.u32 %v390, %v388
      %v394 = vshll.u32 %v358, 16
      %v396 = vrot.slane %v394, 1
      %v397 = vsel %vm361, %v392, %v396
      %v398 = vshrl.u32 %v358, 16
      %v400 = vor.u32 %v398, %v396
      %v402 = vshll.u32 %v359, 16
      %v404 = vrot.slane %v402, 1
      %v405 = vsel %vm361, %v400, %v404
      %v406 = vshrl.u32 %v359, 16
      %v408 = vor.u32 %v406, %v404
      %v410 = vshll.u32 %v360, 16
      %v412 = vrot.slane %v410, 1
      %v413 = vsel %vm361, %v408, %v412
      %v414 = vshrl.u32 %v360, 16
      %v416 = vor.u32 %v414, %v412
      %v440 = vunpack.c.l.b16 %v312
      %v441 = vunpack.c.l.b16 %v313
      %v442 = vunpack.c.l.b16 %v314
      %v443 = vunpack.c.l.b16 %v315
      %v444 = vunpack.c.l.b16 %v316
      %v445 = vunpack.c.l.b16 %v317
      %v446 = vunpack.c.l.b16 %v318
      %v447 = vunpack.c.l.b16 %v319
      %v448 = vunpack.c.l.b16 %v320
      %v449 = vunpack.c.l.b16 %v321
      %v450 = vunpack.c.l.b16 %v322
      %v451 = vunpack.c.l.b16 %v323
      %v452 = vunpack.c.l.b16 %v324
      %v453 = vunpack.c.l.b16 %v325
      %v454 = vunpack.c.l.b16 %v326
      %v455 = vunpack.c.l.b16 %v327
      %v456 = vpack.c.b16 %v441, %v440
      %v457 = vpack.c.b16 %v443, %v442
      %v458 = vpack.c.b16 %v445, %v444
      %v459 = vpack.c.b16 %v447, %v446
      %v460 = vpack.c.b16 %v449, %v448
      %v461 = vpack.c.b16 %v451, %v450
      %v462 = vpack.c.b16 %v453, %v452
      %v463 = vpack.c.b16 %v455, %v454
      %472 = vmatprep.subr.bf16.mxu0 0
      %473 = vmatpush1.bf16.msra.mxu0 %v456
      %474 = vmatprep.subr.bf16.mxu0 0
      %475 = vmatpush1.bf16.msra.mxu0 %v457
      %476 = vmatprep.subr.bf16.mxu0 0
      %477 = vmatpush1.bf16.msra.mxu0 %v458
      %478 = vmatprep.subr.bf16.mxu0 0
      %479 = vmatpush1.bf16.msra.mxu0 %v459
      %480 = vmatprep.subr.bf16.mxu0 0
      %481 = vmatpush1.bf16.msra.mxu0 %v460
      %482 = vmatprep.subr.bf16.mxu0 0
      %483 = vmatpush1.bf16.msra.mxu0 %v461
      %484 = vmatprep.subr.bf16.mxu0 0
      %485 = vmatpush1.bf16.msra.mxu0 %v462
      %486 = vmatprep.subr.bf16.mxu0 0
      %487 = vmatpush1.bf16.msra.mxu0 %v463
      %488 = vmatprep.subr.bf16.mxu0 0
      %489 = vmatpush1.bf16.msra.mxu0 0
      %490 = vmatprep.subr.bf16.mxu0 0
      %491 = vmatpush1.bf16.msra.mxu0 0
      %492 = vmatprep.subr.bf16.mxu0 0
      %493 = vmatpush1.bf16.msra.mxu0 0
      %494 = vmatprep.subr.bf16.mxu0 0
      %495 = vmatpush1.bf16.msra.mxu0 0
      %496 = vmatprep.subr.bf16.mxu0 0
      %497 = vmatpush1.bf16.msra.mxu0 0
      %498 = vmatprep.subr.bf16.mxu0 0
      %499 = vmatpush1.bf16.msra.mxu0 0
      %500 = vmatprep.subr.bf16.mxu0 0
      %501 = vmatpush1.bf16.msra.mxu0 0
      %502 = vmatprep.subr.bf16.mxu0 0
      %503 = vmatpush1.bf16.msra.mxu0 0
      %504 = vmatprep.mubr.bf16.mxu0 0
      %505 = vmatmul.mubr.bf16.gmra.mrb[0].mxu0 %v373
      %v506 = vpop.f32.mrb[0].mxu0
      %v507 = vadd.f32 0.0, %v506
      %v508 = vpop.f32.mrb[0].mxu0
      %v509 = vpop.f32.mrb[0].mxu0
      %v510 = vadd.f32 0.0, %v509
      %v511 = vpop.f32.mrb[0].mxu0
      %512 = vmatprep.mubr.bf16.mxu0 0
      %513 = vmatmul.mubr.bf16.gmra.mrb[0].mxu0 %v381
      %v514 = vpop.f32.mrb[0].mxu0
      %v515 = vadd.f32 0.0, %v514
      %v516 = vpop.f32.mrb[0].mxu0
      %v517 = vpop.f32.mrb[0].mxu0
      %v518 = vadd.f32 0.0, %v517
      %v519 = vpop.f32.mrb[0].mxu0
      %520 = vmatprep.mubr.bf16.mxu0 0
      %521 = vmatmul.mubr.bf16.gmra.mrb[0].mxu0 %v389
      %v522 = vpop.f32.mrb[0].mxu0
      %v523 = vadd.f32 0.0, %v522
      %v524 = vpop.f32.mrb[0].mxu0
      %v525 = vpop.f32.mrb[0].mxu0
      %v526 = vadd.f32 0.0, %v525
      %v527 = vpop.f32.mrb[0].mxu0
      %528 = vmatprep.mubr.bf16.mxu0 0
      %529 = vmatmul.mubr.bf16.gmra.mrb[0].mxu0 %v397
      %v530 = vpop.f32.mrb[0].mxu0
      %v531 = vadd.f32 0.0, %v530
      %v532 = vpop.f32.mrb[0].mxu0
      %v533 = vpop.f32.mrb[0].mxu0
      %v534 = vadd.f32 0.0, %v533
      %v535 = vpop.f32.mrb[0].mxu0
      %536 = vmatprep.mubr.bf16.mxu0 0
      %537 = vmatmul.mubr.bf16.gmra.mrb[0].mxu0 %v405
      %v538 = vpop.f32.mrb[0].mxu0
      %v539 = vadd.f32 0.0, %v538
      %v540 = vpop.f32.mrb[0].mxu0
      %v541 = vpop.f32.mrb[0].mxu0
      %v542 = vadd.f32 0.0, %v541
      %v543 = vpop.f32.mrb[0].mxu0
      %544 = vmatprep.mubr.bf16.mxu0 0
      %545 = vmatmul.mubr.bf16.gmra.mrb[0].mxu0 %v413
      %v546 = vpop.f32.mrb[0].mxu0
      %v547 = vadd.f32 0.0, %v546
      %v548 = vpop.f32.mrb[0].mxu0
      %v549 = vpop.f32.mrb[0].mxu0
      %v550 = vadd.f32 0.0, %v549
      %v551 = vpop.f32.mrb[0].mxu0
      %552 = vmatprep.mubr.bf16.mxu0 0
      %553 = vmatmul.mubr.bf16.gmra.mrb[0].mxu0 %v416
      %v554 = vpop.f32.mrb[0].mxu0
      %v555 = vadd.f32 0.0, %v554
      %v556 = vpop.f32.mrb[0].mxu0
      %v557 = vpop.f32.mrb[0].mxu0
      %v558 = vpop.f32.mrb[0].mxu0
      %559 = vdwg.mxu0
      %v561 = vunpack.c.l.b16 %v293
      %v562 = vpack.c.b16 %v561, %v561
      %v586 = vunpack.c.l.b16 %v294
      %v587 = vunpack.c.l.b16 %v295
      %v588 = vunpack.c.l.b16 %v296
      %v589 = vunpack.c.l.b16 %v297
      %v590 = vunpack.c.l.b16 %v298
      %v591 = vunpack.c.l.b16 %v299
      %v592 = vunpack.c.l.b16 %v300
      %v593 = vunpack.c.l.b16 %v301
      %v594 = vunpack.c.l.b16 %v302
      %v595 = vunpack.c.l.b16 %v303
      %v596 = vunpack.c.l.b16 %v304
      %v597 = vunpack.c.l.b16 %v305
      %v598 = vunpack.c.l.b16 %v306
      %v599 = vunpack.c.l.b16 %v307
      %v600 = vunpack.c.l.b16 %v308
      %v601 = vunpack.c.l.b16 %v309
      %v602 = vpack.c.b16 %v587, %v586
      %v603 = vpack.c.b16 %v589, %v588
      %v604 = vpack.c.b16 %v591, %v590
      %v605 = vpack.c.b16 %v593, %v592
      %v606 = vpack.c.b16 %v595, %v594
      %v607 = vpack.c.b16 %v597, %v596
      %v608 = vpack.c.b16 %v599, %v598
      %v609 = vpack.c.b16 %v601, %v600
      %618 = vmatprep.subr.bf16.mxu0 0
      %619 = vmatpush1.bf16.msra.mxu0 %v602
      %620 = vmatprep.subr.bf16.mxu0 0
      %621 = vmatpush1.bf16.msra.mxu0 %v603
      %622 = vmatprep.subr.bf16.mxu0 0
      %623 = vmatpush1.bf16.msra.mxu0 %v604
      %624 = vmatprep.subr.bf16.mxu0 0
      %625 = vmatpush1.bf16.msra.mxu0 %v605
      %626 = vmatprep.subr.bf16.mxu0 0
      %627 = vmatpush1.bf16.msra.mxu0 %v606
      %628 = vmatprep.subr.bf16.mxu0 0
      %629 = vmatpush1.bf16.msra.mxu0 %v607
      %630 = vmatprep.subr.bf16.mxu0 0
      %631 = vmatpush1.bf16.msra.mxu0 %v608
      %632 = vmatprep.subr.bf16.mxu0 0
      %633 = vmatpush1.bf16.msra.mxu0 %v609
      %634 = vmatprep.subr.bf16.mxu0 0
      %635 = vmatpush1.bf16.msra.mxu0 0
      %636 = vmatprep.subr.bf16.mxu0 0
      %637 = vmatpush1.bf16.msra.mxu0 0
      %638 = vmatprep.subr.bf16.mxu0 0
      %639 = vmatpush1.bf16.msra.mxu0 0
      %640 = vmatprep.subr.bf16.mxu0 0
      %641 = vmatpush1.bf16.msra.mxu0 0
      %642 = vmatprep.subr.bf16.mxu0 0
      %643 = vmatpush1.bf16.msra.mxu0 0
      %644 = vmatprep.subr.bf16.mxu0 0
      %645 = vmatpush1.bf16.msra.mxu0 0
      %646 = vmatprep.subr.bf16.mxu0 0
      %647 = vmatpush1.bf16.msra.mxu0 0
      %648 = vmatprep.subr.bf16.mxu0 0
      %649 = vmatpush1.bf16.msra.mxu0 0
      %650 = vmatprep.mubr.bf16.mxu0 0
      %651 = vmatmul.mubr.bf16.gmra.mrb[0].mxu0 %v354
      %v652 = vpop.f32.mrb[0].mxu0
      %v653 = vadd.f32 %v507, %v652
      %v654 = vpop.f32.mrb[0].mxu0
      %v655 = vpop.f32.mrb[0].mxu0
      %v656 = vadd.f32 %v510, %v655
      %v657 = vpop.f32.mrb[0].mxu0
      %658 = vmatprep.mubr.bf16.mxu0 0
      %659 = vmatmul.mubr.bf16.gmra.mrb[0].mxu0 %v355
      %v660 = vpop.f32.mrb[0].mxu0
      %v661 = vadd.f32 %v515, %v660
      %v662 = vpop.f32.mrb[0].mxu0
      %v663 = vpop.f32.mrb[0].mxu0
      %v664 = vadd.f32 %v518, %v663
      %v665 = vpop.f32.mrb[0].mxu0
      %666 = vmatprep.mubr.bf16.mxu0 0
      %667 = vmatmul.mubr.bf16.gmra.mrb[0].mxu0 %v356
      %v668 = vpop.f32.mrb[0].mxu0
      %v669 = vadd.f32 %v523, %v668
      %v670 = vpop.f32.mrb[0].mxu0
      %v671 = vpop.f32.mrb[0].mxu0
      %v672 = vadd.f32 %v526, %v671
      %v673 = vpop.f32.mrb[0].mxu0
      %674 = vmatprep.mubr.bf16.mxu0 0
      %675 = vmatmul.mubr.bf16.gmra.mrb[0].mxu0 %v357
      %v676 = vpop.f32.mrb[0].mxu0
      %v677 = vadd.f32 %v531, %v676
      %v678 = vpop.f32.mrb[0].mxu0
      %v679 = vpop.f32.mrb[0].mxu0
      %v680 = vadd.f32 %v534, %v679
      %v681 = vpop.f32.mrb[0].mxu0
      %682 = vmatprep.mubr.bf16.mxu0 0
      %683 = vmatmul.mubr.bf16.gmra.mrb[0].mxu0 %v358
      %v684 = vpop.f32.mrb[0].mxu0
      %v685 = vadd.f32 %v539, %v684
      %v686 = vpop.f32.mrb[0].mxu0
      %v687 = vpop.f32.mrb[0].mxu0
      %v688 = vadd.f32 %v542, %v687
      %v689 = vpop.f32.mrb[0].mxu0
      %690 = vmatprep.mubr.bf16.mxu0 0
      %691 = vmatmul.mubr.bf16.gmra.mrb[0].mxu0 %v359
      %v692 = vpop.f32.mrb[0].mxu0
      %v693 = vadd.f32 %v547, %v692
      %v694 = vpop.f32.mrb[0].mxu0
      %v695 = vpop.f32.mrb[0].mxu0
      %v696 = vadd.f32 %v550, %v695
      %v697 = vpop.f32.mrb[0].mxu0
      %698 = vmatprep.mubr.bf16.mxu0 0
      %699 = vmatmul.mubr.bf16.gmra.mrb[0].mxu0 %v562
      %v700 = vpop.f32.mrb[0].mxu0
      %v701 = vadd.f32 %v555, %v700
      %v702 = vpop.f32.mrb[0].mxu0
      %v703 = vpop.f32.mrb[0].mxu0
      %v704 = vpop.f32.mrb[0].mxu0
      %705 = vdwg.mxu0
      %v706 = vld [vmem:[%s256] sm:$0xe]
      %s707 = scalar_lea.vmem %s260, 128
      %v708 = vld [vmem:[%s707] sm:$0xf]
      %v709 = vld [vmem:[%s707 + $0x4] sm:$0xf]
      %v710 = vld [vmem:[%s707 + $0x8] sm:$0xf]
      %v711 = vld [vmem:[%s707 + $0xc] sm:$0xf]
      %v712 = vld [vmem:[%s707 + $0x10] sm:$0xf]
      %v713 = vld [vmem:[%s707 + $0x14] sm:$0xf]
      %v714 = vld [vmem:[%s707 + $0x18] sm:$0xf]
      %v715 = vld [vmem:[%s707 + $0x1c] sm:$0xf]
      %v716 = vld [vmem:[%s707 + $0x20] sm:$0xf]
      %v717 = vld [vmem:[%s707 + $0x24] sm:$0xf]
      %v718 = vld [vmem:[%s707 + $0x28] sm:$0xf]
      %v719 = vld [vmem:[%s707 + $0x2c] sm:$0xf]
      %v720 = vld [vmem:[%s707 + $0x30] sm:$0xf]
      %v721 = vld [vmem:[%s707 + $0x34] sm:$0xf]
      %v722 = vld [vmem:[%s707 + $0x38] sm:$0xf]
      %v723 = vld [vmem:[%s707 + $0x3c] sm:$0xf]
      %v725 = vunpack.c.l.b16 %v706
      %v726 = vpack.c.b16 %v342, %v725
      %vm727 = vcmask 1046528
      %v728 = vrot.slane %v726, 1
      %v729 = vrot.slane %v355, 1
      %v730 = vsel %vm727, %v728, %v729
      %v731 = vrot.slane %v356, 1
      %v732 = vsel %vm727, %v729, %v731
      %v733 = vrot.slane %v357, 1
      %v734 = vsel %vm727, %v731, %v733
      %v735 = vrot.slane %v358, 1
      %v736 = vsel %vm727, %v733, %v735
      %v737 = vrot.slane %v359, 1
      %v738 = vsel %vm727, %v735, %v737
      %v739 = vrot.slane %v360, 1
      %v740 = vsel %vm727, %v737, %v739
      %v764 = vunpack.c.l.b16 %v708
      %v765 = vunpack.c.l.b16 %v709
      %v766 = vunpack.c.l.b16 %v710
      %v767 = vunpack.c.l.b16 %v711
      %v768 = vunpack.c.l.b16 %v712
      %v769 = vunpack.c.l.b16 %v713
      %v770 = vunpack.c.l.b16 %v714
      %v771 = vunpack.c.l.b16 %v715
      %v772 = vunpack.c.l.b16 %v716
      %v773 = vunpack.c.l.b16 %v717
      %v774 = vunpack.c.l.b16 %v718
      %v775 = vunpack.c.l.b16 %v719
      %v776 = vunpack.c.l.b16 %v720
      %v777 = vunpack.c.l.b16 %v721
      %v778 = vunpack.c.l.b16 %v722
      %v779 = vunpack.c.l.b16 %v723
      %v780 = vpack.c.b16 %v765, %v764
      %v781 = vpack.c.b16 %v767, %v766
      %v782 = vpack.c.b16 %v769, %v768
      %v783 = vpack.c.b16 %v771, %v770
      %v784 = vpack.c.b16 %v773, %v772
      %v785 = vpack.c.b16 %v775, %v774
      %v786 = vpack.c.b16 %v777, %v776
      %v787 = vpack.c.b16 %v779, %v778
      %796 = vmatprep.subr.bf16.mxu0 0
      %797 = vmatpush1.bf16.msra.mxu0 %v780
      %798 = vmatprep.subr.bf16.mxu0 0
      %799 = vmatpush1.bf16.msra.mxu0 %v781
      %800 = vmatprep.subr.bf16.mxu0 0
      %801 = vmatpush1.bf16.msra.mxu0 %v782
      %802 = vmatprep.subr.bf16.mxu0 0
      %803 = vmatpush1.bf16.msra.mxu0 %v783
      %804 = vmatprep.subr.bf16.mxu0 0
      %805 = vmatpush1.bf16.msra.mxu0 %v784
      %806 = vmatprep.subr.bf16.mxu0 0
      %807 = vmatpush1.bf16.msra.mxu0 %v785
      %808 = vmatprep.subr.bf16.mxu0 0
      %809 = vmatpush1.bf16.msra.mxu0 %v786
      %810 = vmatprep.subr.bf16.mxu0 0
      %811 = vmatpush1.bf16.msra.mxu0 %v787
      %812 = vmatprep.subr.bf16.mxu0 0
      %813 = vmatpush1.bf16.msra.mxu0 0
      %814 = vmatprep.subr.bf16.mxu0 0
      %815 = vmatpush1.bf16.msra.mxu0 0
      %816 = vmatprep.subr.bf16.mxu0 0
      %817 = vmatpush1.bf16.msra.mxu0 0
      %818 = vmatprep.subr.bf16.mxu0 0
      %819 = vmatpush1.bf16.msra.mxu0 0
      %820 = vmatprep.subr.bf16.mxu0 0
      %821 = vmatpush1.bf16.msra.mxu0 0
      %822 = vmatprep.subr.bf16.mxu0 0
      %823 = vmatpush1.bf16.msra.mxu0 0
      %824 = vmatprep.subr.bf16.mxu0 0
      %825 = vmatpush1.bf16.msra.mxu0 0
      %826 = vmatprep.subr.bf16.mxu0 0
      %827 = vmatpush1.bf16.msra.mxu0 0
      %828 = vmatprep.mubr.bf16.mxu0 0
      %829 = vmatmul.mubr.bf16.gmra.mrb[0].mxu0 %v730
      %v830 = vpop.f32.mrb[0].mxu0
      %v831 = vadd.f32 0.0, %v830
      %v832 = vpop.f32.mrb[0].mxu0
      %v833 = vpop.f32.mrb[0].mxu0
      %v834 = vadd.f32 0.0, %v833
      %v835 = vpop.f32.mrb[0].mxu0
      %836 = vmatprep.mubr.bf16.mxu0 0
      %837 = vmatmul.mubr.bf16.gmra.mrb[0].mxu0 %v732
      %v838 = vpop.f32.mrb[0].mxu0
      %v839 = vadd.f32 0.0, %v838
      %v840 = vpop.f32.mrb[0].mxu0
      %v841 = vpop.f32.mrb[0].mxu0
      %v842 = vadd.f32 0.0, %v841
      %v843 = vpop.f32.mrb[0].mxu0
      %844 = vmatprep.mubr.bf16.mxu0 0
      %845 = vmatmul.mubr.bf16.gmra.mrb[0].mxu0 %v734
      %v846 = vpop.f32.mrb[0].mxu0
      %v847 = vadd.f32 0.0, %v846
      %v848 = vpop.f32.mrb[0].mxu0
      %v849 = vpop.f32.mrb[0].mxu0
      %v850 = vadd.f32 0.0, %v849
      %v851 = vpop.f32.mrb[0].mxu0
      %852 = vmatprep.mubr.bf16.mxu0 0
      %853 = vmatmul.mubr.bf16.gmra.mrb[0].mxu0 %v736
      %v854 = vpop.f32.mrb[0].mxu0
      %v855 = vadd.f32 0.0, %v854
      %v856 = vpop.f32.mrb[0].mxu0
      %v857 = vpop.f32.mrb[0].mxu0
      %v858 = vadd.f32 0.0, %v857
      %v859 = vpop.f32.mrb[0].mxu0
      %860 = vmatprep.mubr.bf16.mxu0 0
      %861 = vmatmul.mubr.bf16.gmra.mrb[0].mxu0 %v738
      %v862 = vpop.f32.mrb[0].mxu0
      %v863 = vadd.f32 0.0, %v862
      %v864 = vpop.f32.mrb[0].mxu0
      %v865 = vpop.f32.mrb[0].mxu0
      %v866 = vadd.f32 0.0, %v865
      %v867 = vpop.f32.mrb[0].mxu0
      %868 = vmatprep.mubr.bf16.mxu0 0
      %869 = vmatmul.mubr.bf16.gmra.mrb[0].mxu0 %v740
      %v870 = vpop.f32.mrb[0].mxu0
      %v871 = vadd.f32 0.0, %v870
      %v872 = vpop.f32.mrb[0].mxu0
      %v873 = vpop.f32.mrb[0].mxu0
      %v874 = vadd.f32 0.0, %v873
      %v875 = vpop.f32.mrb[0].mxu0
      %876 = vmatprep.mubr.bf16.mxu0 0
      %877 = vmatmul.mubr.bf16.gmra.mrb[0].mxu0 %v739
      %v878 = vpop.f32.mrb[0].mxu0
      %v879 = vadd.f32 0.0, %v878
      %v880 = vpop.f32.mrb[0].mxu0
      %v881 = vpop.f32.mrb[0].mxu0
      %v882 = vpop.f32.mrb[0].mxu0
      %883 = vdwg.mxu0
      %v884 = vadd.f32 %v653, %v831
      %v885 = vadd.f32 %v656, %v834
      %v886 = vadd.f32 %v661, %v839
      %v887 = vadd.f32 %v664, %v842
      %v888 = vadd.f32 %v669, %v847
      %v889 = vadd.f32 %v672, %v850
      %v890 = vadd.f32 %v677, %v855
      %v891 = vadd.f32 %v680, %v858
      %v892 = vadd.f32 %v685, %v863
      %v893 = vadd.f32 %v688, %v866
      %v894 = vadd.f32 %v693, %v871
      %v895 = vadd.f32 %v696, %v874
      %v896 = vadd.f32 %v701, %v879
      %v897 = vld [vmem:[%s256 + $0x4] sm:$0xe]
      %v898 = vld [vmem:[%s256 + $0x8] sm:$0xf]
      %v899 = vld [vmem:[%s256 + $0xc] sm:$0xf]
      %v900 = vld [vmem:[%s256 + $0x10] sm:$0xf]
      %v901 = vld [vmem:[%s256 + $0x14] sm:$0xf]
      %v902 = vld [vmem:[%s256 + $0x18] sm:$0xf]
      %v903 = vld [vmem:[%s256 + $0x1c] sm:$0xf]
      %v904 = vld [vmem:[%s256 + $0x20] sm:$0xf]
      %v905 = vld [vmem:[%s256 + $0x24] sm:$0xf]
      %v906 = vld [vmem:[%s256 + $0x28] sm:$0xf]
      %v907 = vld [vmem:[%s256 + $0x2c] sm:$0xf]
      %v908 = vld [vmem:[%s256 + $0x30] sm:$0xf]
      %v909 = vld [vmem:[%s256 + $0x34] sm:$0x7]
      %s910 = scalar_lea.vmem %s260, 192
      %v911 = vld [vmem:[%s910] sm:$0xf]
      %v912 = vld [vmem:[%s910 + $0x4] sm:$0xf]
      %v913 = vld [vmem:[%s910 + $0x8] sm:$0xf]
      %v914 = vld [vmem:[%s910 + $0xc] sm:$0xf]
      %v915 = vld [vmem:[%s910 + $0x10] sm:$0xf]
      %v916 = vld [vmem:[%s910 + $0x14] sm:$0xf]
      %v917 = vld [vmem:[%s910 + $0x18] sm:$0xf]
      %v918 = vld [vmem:[%s910 + $0x1c] sm:$0xf]
      %v919 = vld [vmem:[%s910 + $0x20] sm:$0xf]
      %v920 = vld [vmem:[%s910 + $0x24] sm:$0xf]
      %v921 = vld [vmem:[%s910 + $0x28] sm:$0xf]
      %v922 = vld [vmem:[%s910 + $0x2c] sm:$0xf]
      %v923 = vld [vmem:[%s910 + $0x30] sm:$0xf]
      %v924 = vld [vmem:[%s910 + $0x34] sm:$0xf]
      %v925 = vld [vmem:[%s910 + $0x38] sm:$0xf]
      %v926 = vld [vmem:[%s910 + $0x3c] sm:$0xf]
      %v940 = vunpack.c.l.b16 %v897
      %v941 = vunpack.c.l.b16 %v898
      %v942 = vunpack.c.l.b16 %v899
      %v943 = vunpack.c.l.b16 %v900
      %v944 = vunpack.c.l.b16 %v901
      %v945 = vunpack.c.l.b16 %v902
      %v946 = vunpack.c.l.b16 %v903
      %v947 = vunpack.c.l.b16 %v904
      %v948 = vunpack.c.l.b16 %v905
      %v949 = vunpack.c.l.b16 %v906
      %v950 = vunpack.c.l.b16 %v907
      %v951 = vunpack.c.l.b16 %v908
      %v952 = vunpack.c.l.b16 %v909
      %v953 = vpack.c.b16 %v941, %v940
      %v954 = vpack.c.b16 %v943, %v942
      %v955 = vpack.c.b16 %v945, %v944
      %v956 = vpack.c.b16 %v947, %v946
      %v957 = vpack.c.b16 %v949, %v948
      %v958 = vpack.c.b16 %v951, %v950
      %v959 = vpack.c.b16 %v952, %v952
      %v960 = vrot.slane %v953, 1
      %v961 = vrot.slane %v954, 1
      %v962 = vsel %vm727, %v960, %v961
      %v963 = vrot.slane %v955, 1
      %v964 = vsel %vm727, %v961, %v963
      %v965 = vrot.slane %v956, 1
      %v966 = vsel %vm727, %v963, %v965
      %v967 = vrot.slane %v957, 1
      %v968 = vsel %vm727, %v965, %v967
      %v969 = vrot.slane %v958, 1
      %v970 = vsel %vm727, %v967, %v969
      %v971 = vrot.slane %v959, 1
      %v972 = vsel %vm727, %v969, %v971
      %v996 = vunpack.c.l.b16 %v911
      %v997 = vunpack.c.l.b16 %v912
      %v998 = vunpack.c.l.b16 %v913
      %v999 = vunpack.c.l.b16 %v914
      %v1000 = vunpack.c.l.b16 %v915
      %v1001 = vunpack.c.l.b16 %v916
      %v1002 = vunpack.c.l.b16 %v917
      %v1003 = vunpack.c.l.b16 %v918
      %v1004 = vunpack.c.l.b16 %v919
      %v1005 = vunpack.c.l.b16 %v920
      %v1006 = vunpack.c.l.b16 %v921
      %v1007 = vunpack.c.l.b16 %v922
      %v1008 = vunpack.c.l.b16 %v923
      %v1009 = vunpack.c.l.b16 %v924
      %v1010 = vunpack.c.l.b16 %v925
      %v1011 = vunpack.c.l.b16 %v926
      %v1012 = vpack.c.b16 %v997, %v996
      %v1013 = vpack.c.b16 %v999, %v998
      %v1014 = vpack.c.b16 %v1001, %v1000
      %v1015 = vpack.c.b16 %v1003, %v1002
      %v1016 = vpack.c.b16 %v1005, %v1004
      %v1017 = vpack.c.b16 %v1007, %v1006
      %v1018 = vpack.c.b16 %v1009, %v1008
      %v1019 = vpack.c.b16 %v1011, %v1010
      %1028 = vmatprep.subr.bf16.mxu0 0
      %1029 = vmatpush1.bf16.msra.mxu0 %v1012
      %1030 = vmatprep.subr.bf16.mxu0 0
      %1031 = vmatpush1.bf16.msra.mxu0 %v1013
      %1032 = vmatprep.subr.bf16.mxu0 0
      %1033 = vmatpush1.bf16.msra.mxu0 %v1014
      %1034 = vmatprep.subr.bf16.mxu0 0
      %1035 = vmatpush1.bf16.msra.mxu0 %v1015
      %1036 = vmatprep.subr.bf16.mxu0 0
      %1037 = vmatpush1.bf16.msra.mxu0 %v1016
      %1038 = vmatprep.subr.bf16.mxu0 0
      %1039 = vmatpush1.bf16.msra.mxu0 %v1017
      %1040 = vmatprep.subr.bf16.mxu0 0
      %1041 = vmatpush1.bf16.msra.mxu0 %v1018
      %1042 = vmatprep.subr.bf16.mxu0 0
      %1043 = vmatpush1.bf16.msra.mxu0 %v1019
      %1044 = vmatprep.subr.bf16.mxu0 0
      %1045 = vmatpush1.bf16.msra.mxu0 0
      %1046 = vmatprep.subr.bf16.mxu0 0
      %1047 = vmatpush1.bf16.msra.mxu0 0
      %1048 = vmatprep.subr.bf16.mxu0 0
      %1049 = vmatpush1.bf16.msra.mxu0 0
      %1050 = vmatprep.subr.bf16.mxu0 0
      %1051 = vmatpush1.bf16.msra.mxu0 0
      %1052 = vmatprep.subr.bf16.mxu0 0
      %1053 = vmatpush1.bf16.msra.mxu0 0
      %1054 = vmatprep.subr.bf16.mxu0 0
      %1055 = vmatpush1.bf16.msra.mxu0 0
      %1056 = vmatprep.subr.bf16.mxu0 0
      %1057 = vmatpush1.bf16.msra.mxu0 0
      %1058 = vmatprep.subr.bf16.mxu0 0
      %1059 = vmatpush1.bf16.msra.mxu0 0
      %1060 = vmatprep.mubr.bf16.mxu0 0
      %1061 = vmatmul.mubr.bf16.gmra.mrb[0].mxu0 %v962
      %v1062 = vpop.f32.mrb[0].mxu0
      %v1063 = vadd.f32 0.0, %v1062
      %v1064 = vpop.f32.mrb[0].mxu0
      %v1065 = vpop.f32.mrb[0].mxu0
      %v1066 = vadd.f32 0.0, %v1065
      %v1067 = vpop.f32.mrb[0].mxu0
      %1068 = vmatprep.mubr.bf16.mxu0 0
      %1069 = vmatmul.mubr.bf16.gmra.mrb[0].mxu0 %v964
      %v1070 = vpop.f32.mrb[0].mxu0
      %v1071 = vadd.f32 0.0, %v1070
      %v1072 = vpop.f32.mrb[0].mxu0
      %v1073 = vpop.f32.mrb[0].mxu0
      %v1074 = vadd.f32 0.0, %v1073
      %v1075 = vpop.f32.mrb[0].mxu0
      %1076 = vmatprep.mubr.bf16.mxu0 0
      %1077 = vmatmul.mubr.bf16.gmra.mrb[0].mxu0 %v966
      %v1078 = vpop.f32.mrb[0].mxu0
      %v1079 = vadd.f32 0.0, %v1078
      %v1080 = vpop.f32.mrb[0].mxu0
      %v1081 = vpop.f32.mrb[0].mxu0
      %v1082 = vadd.f32 0.0, %v1081
      %v1083 = vpop.f32.mrb[0].mxu0
      %1084 = vmatprep.mubr.bf16.mxu0 0
      %1085 = vmatmul.mubr.bf16.gmra.mrb[0].mxu0 %v968
      %v1086 = vpop.f32.mrb[0].mxu0
      %v1087 = vadd.f32 0.0, %v1086
      %v1088 = vpop.f32.mrb[0].mxu0
      %v1089 = vpop.f32.mrb[0].mxu0
      %v1090 = vadd.f32 0.0, %v1089
      %v1091 = vpop.f32.mrb[0].mxu0
      %1092 = vmatprep.mubr.bf16.mxu0 0
      %1093 = vmatmul.mubr.bf16.gmra.mrb[0].mxu0 %v970
      %v1094 = vpop.f32.mrb[0].mxu0
      %v1095 = vadd.f32 0.0, %v1094
      %v1096 = vpop.f32.mrb[0].mxu0
      %v1097 = vpop.f32.mrb[0].mxu0
      %v1098 = vadd.f32 0.0, %v1097
      %v1099 = vpop.f32.mrb[0].mxu0
      %1100 = vmatprep.mubr.bf16.mxu0 0
      %1101 = vmatmul.mubr.bf16.gmra.mrb[0].mxu0 %v972
      %v1102 = vpop.f32.mrb[0].mxu0
      %v1103 = vadd.f32 0.0, %v1102
      %v1104 = vpop.f32.mrb[0].mxu0
      %v1105 = vpop.f32.mrb[0].mxu0
      %v1106 = vadd.f32 0.0, %v1105
      %v1107 = vpop.f32.mrb[0].mxu0
      %1108 = vmatprep.mubr.bf16.mxu0 0
      %1109 = vmatmul.mubr.bf16.gmra.mrb[0].mxu0 %v971
      %v1110 = vpop.f32.mrb[0].mxu0
      %v1111 = vadd.f32 0.0, %v1110
      %v1112 = vpop.f32.mrb[0].mxu0
      %v1113 = vpop.f32.mrb[0].mxu0
      %v1114 = vpop.f32.mrb[0].mxu0
      %1115 = vdwg.mxu0
      %v1116 = vadd.f32 %v884, %v1063
      %v1117 = vadd.f32 %v885, %v1066
      %v1118 = vadd.f32 %v886, %v1071
      %v1119 = vadd.f32 %v887, %v1074
      %v1120 = vadd.f32 %v888, %v1079
      %v1121 = vadd.f32 %v889, %v1082
      %v1122 = vadd.f32 %v890, %v1087
      %v1123 = vadd.f32 %v891, %v1090
      %v1124 = vadd.f32 %v892, %v1095
      %v1125 = vadd.f32 %v893, %v1098
      %v1126 = vadd.f32 %v894, %v1103
      %v1127 = vadd.f32 %v895, %v1106
      %v1128 = vadd.f32 %v896, %v1111
      %v1129 = vld [vmem:[%s256 + $0x34] sm:$0xf]
      %s1130 = scalar_lea.vmem %s260, 256
      %v1131 = vld [vmem:[%s1130] sm:$0xf]
      %v1132 = vld [vmem:[%s1130 + $0x4] sm:$0xf]
      %v1133 = vld [vmem:[%s1130 + $0x8] sm:$0xf]
      %v1134 = vld [vmem:[%s1130 + $0xc] sm:$0xf]
      %v1135 = vld [vmem:[%s1130 + $0x10] sm:$0xf]
      %v1136 = vld [vmem:[%s1130 + $0x14] sm:$0xf]
      %v1137 = vld [vmem:[%s1130 + $0x18] sm:$0xf]
      %v1138 = vld [vmem:[%s1130 + $0x1c] sm:$0xf]
      %v1139 = vld [vmem:[%s1130 + $0x20] sm:$0xf]
      %v1140 = vld [vmem:[%s1130 + $0x24] sm:$0xf]
      %v1141 = vld [vmem:[%s1130 + $0x28] sm:$0xf]
      %v1142 = vld [vmem:[%s1130 + $0x2c] sm:$0xf]
      %v1143 = vld [vmem:[%s1130 + $0x30] sm:$0xf]
      %v1144 = vld [vmem:[%s1130 + $0x34] sm:$0xf]
      %v1145 = vld [vmem:[%s1130 + $0x38] sm:$0xf]
      %v1146 = vld [vmem:[%s1130 + $0x3c] sm:$0xf]
      %v1148 = vunpack.c.l.b16 %v1129
      %v1149 = vpack.c.b16 %v1148, %v1148
      %vm1150 = vsmask.f32 6400
      %v1152 = vshrl.u32 %v953, 16
      %v1154 = vrot.slane %v1152, 1
      %v1155 = vshll.u32 %v953, 16
      %v1157 = vrot.slane %v1155, 2
      %v1158 = vor.u32 %v1154, %v1157
      %v1160 = vshrl.u32 %v954, 16
      %v1162 = vrot.slane %v1160, 1
      %v1163 = vshll.u32 %v954, 16
      %v1165 = vrot.slane %v1163, 2
      %v1166 = vor.u32 %v1162, %v1165
      %v1167 = vsel %vm1150, %v1158, %v1166
      %v1169 = vshrl.u32 %v955, 16
      %v1171 = vrot.slane %v1169, 1
      %v1172 = vshll.u32 %v955, 16
      %v1174 = vrot.slane %v1172, 2
      %v1175 = vor.u32 %v1171, %v1174
      %v1176 = vsel %vm1150, %v1166, %v1175
      %v1178 = vshrl.u32 %v956, 16
      %v1180 = vrot.slane %v1178, 1
      %v1181 = vshll.u32 %v956, 16
      %v1183 = vrot.slane %v1181, 2
      %v1184 = vor.u32 %v1180, %v1183
      %v1185 = vsel %vm1150, %v1175, %v1184
      %v1187 = vshrl.u32 %v957, 16
      %v1189 = vrot.slane %v1187, 1
      %v1190 = vshll.u32 %v957, 16
      %v1192 = vrot.slane %v1190, 2
      %v1193 = vor.u32 %v1189, %v1192
      %v1194 = vsel %vm1150, %v1184, %v1193
      %v1196 = vshrl.u32 %v958, 16
      %v1198 = vrot.slane %v1196, 1
      %v1199 = vshll.u32 %v958, 16
      %v1201 = vrot.slane %v1199, 2
      %v1202 = vor.u32 %v1198, %v1201
      %v1203 = vsel %vm1150, %v1193, %v1202
      %v1205 = vshrl.u32 %v1149, 16
      %v1207 = vrot.slane %v1205, 1
      %v1208 = vshll.u32 %v1149, 16
      %v1210 = vrot.slane %v1208, 2
      %v1211 = vor.u32 %v1207, %v1210
      %v1212 = vsel %vm1150, %v1202, %v1211
      %v1236 = vunpack.c.l.b16 %v1131
      %v1237 = vunpack.c.l.b16 %v1132
      %v1238 = vunpack.c.l.b16 %v1133
      %v1239 = vunpack.c.l.b16 %v1134
      %v1240 = vunpack.c.l.b16 %v1135
      %v1241 = vunpack.c.l.b16 %v1136
      %v1242 = vunpack.c.l.b16 %v1137
      %v1243 = vunpack.c.l.b16 %v1138
      %v1244 = vunpack.c.l.b16 %v1139
      %v1245 = vunpack.c.l.b16 %v1140
      %v1246 = vunpack.c.l.b16 %v1141
      %v1247 = vunpack.c.l.b16 %v1142
      %v1248 = vunpack.c.l.b16 %v1143
      %v1249 = vunpack.c.l.b16 %v1144
      %v1250 = vunpack.c.l.b16 %v1145
      %v1251 = vunpack.c.l.b16 %v1146
      %v1252 = vpack.c.b16 %v1237, %v1236
      %v1253 = vpack.c.b16 %v1239, %v1238
      %v1254 = vpack.c.b16 %v1241, %v1240
      %v1255 = vpack.c.b16 %v1243, %v1242
      %v1256 = vpack.c.b16 %v1245, %v1244
      %v1257 = vpack.c.b16 %v1247, %v1246
      %v1258 = vpack.c.b16 %v1249, %v1248
      %v1259 = vpack.c.b16 %v1251, %v1250
      %1268 = vmatprep.subr.bf16.mxu0 0
      %1269 = vmatpush1.bf16.msra.mxu0 %v1252
      %1270 = vmatprep.subr.bf16.mxu0 0
      %1271 = vmatpush1.bf16.msra.mxu0 %v1253
      %1272 = vmatprep.subr.bf16.mxu0 0
      %1273 = vmatpush1.bf16.msra.mxu0 %v1254
      %1274 = vmatprep.subr.bf16.mxu0 0
      %1275 = vmatpush1.bf16.msra.mxu0 %v1255
      %1276 = vmatprep.subr.bf16.mxu0 0
      %1277 = vmatpush1.bf16.msra.mxu0 %v1256
      %1278 = vmatprep.subr.bf16.mxu0 0
      %1279 = vmatpush1.bf16.msra.mxu0 %v1257
      %1280 = vmatprep.subr.bf16.mxu0 0
      %1281 = vmatpush1.bf16.msra.mxu0 %v1258
      %1282 = vmatprep.subr.bf16.mxu0 0
      %1283 = vmatpush1.bf16.msra.mxu0 %v1259
      %1284 = vmatprep.subr.bf16.mxu0 0
      %1285 = vmatpush1.bf16.msra.mxu0 0
      %1286 = vmatprep.subr.bf16.mxu0 0
      %1287 = vmatpush1.bf16.msra.mxu0 0
      %1288 = vmatprep.subr.bf16.mxu0 0
      %1289 = vmatpush1.bf16.msra.mxu0 0
      %1290 = vmatprep.subr.bf16.mxu0 0
      %1291 = vmatpush1.bf16.msra.mxu0 0
      %1292 = vmatprep.subr.bf16.mxu0 0
      %1293 = vmatpush1.bf16.msra.mxu0 0
      %1294 = vmatprep.subr.bf16.mxu0 0
      %1295 = vmatpush1.bf16.msra.mxu0 0
      %1296 = vmatprep.subr.bf16.mxu0 0
      %1297 = vmatpush1.bf16.msra.mxu0 0
      %1298 = vmatprep.subr.bf16.mxu0 0
      %1299 = vmatpush1.bf16.msra.mxu0 0
      %1300 = vmatprep.mubr.bf16.mxu0 0
      %1301 = vmatmul.mubr.bf16.gmra.mrb[0].mxu0 %v1167
      %v1302 = vpop.f32.mrb[0].mxu0
      %v1303 = vadd.f32 0.0, %v1302
      %v1304 = vpop.f32.mrb[0].mxu0
      %v1305 = vpop.f32.mrb[0].mxu0
      %v1306 = vadd.f32 0.0, %v1305
      %v1307 = vpop.f32.mrb[0].mxu0
      %1308 = vmatprep.mubr.bf16.mxu0 0
      %1309 = vmatmul.mubr.bf16.gmra.mrb[0].mxu0 %v1176
      %v1310 = vpop.f32.mrb[0].mxu0
      %v1311 = vadd.f32 0.0, %v1310
      %v1312 = vpop.f32.mrb[0].mxu0
      %v1313 = vpop.f32.mrb[0].mxu0
      %v1314 = vadd.f32 0.0, %v1313
      %v1315 = vpop.f32.mrb[0].mxu0
      %1316 = vmatprep.mubr.bf16.mxu0 0
      %1317 = vmatmul.mubr.bf16.gmra.mrb[0].mxu0 %v1185
      %v1318 = vpop.f32.mrb[0].mxu0
      %v1319 = vadd.f32 0.0, %v1318
      %v1320 = vpop.f32.mrb[0].mxu0
      %v1321 = vpop.f32.mrb[0].mxu0
      %v1322 = vadd.f32 0.0, %v1321
      %v1323 = vpop.f32.mrb[0].mxu0
      %1324 = vmatprep.mubr.bf16.mxu0 0
      %1325 = vmatmul.mubr.bf16.gmra.mrb[0].mxu0 %v1194
      %v1326 = vpop.f32.mrb[0].mxu0
      %v1327 = vadd.f32 0.0, %v1326
      %v1328 = vpop.f32.mrb[0].mxu0
      %v1329 = vpop.f32.mrb[0].mxu0
      %v1330 = vadd.f32 0.0, %v1329
      %v1331 = vpop.f32.mrb[0].mxu0
      %1332 = vmatprep.mubr.bf16.mxu0 0
      %1333 = vmatmul.mubr.bf16.gmra.mrb[0].mxu0 %v1203
      %v1334 = vpop.f32.mrb[0].mxu0
      %v1335 = vadd.f32 0.0, %v1334
      %v1336 = vpop.f32.mrb[0].mxu0
      %v1337 = vpop.f32.mrb[0].mxu0
      %v1338 = vadd.f32 0.0, %v1337
      %v1339 = vpop.f32.mrb[0].mxu0
      %1340 = vmatprep.mubr.bf16.mxu0 0
      %1341 = vmatmul.mubr.bf16.gmra.mrb[0].mxu0 %v1212
      %v1342 = vpop.f32.mrb[0].mxu0
      %v1343 = vadd.f32 0.0, %v1342
      %v1344 = vpop.f32.mrb[0].mxu0
      %v1345 = vpop.f32.mrb[0].mxu0
      %v1346 = vadd.f32 0.0, %v1345
      %v1347 = vpop.f32.mrb[0].mxu0
      %1348 = vmatprep.mubr.bf16.mxu0 0
      %1349 = vmatmul.mubr.bf16.gmra.mrb[0].mxu0 %v1211
      %v1350 = vpop.f32.mrb[0].mxu0
      %v1351 = vadd.f32 0.0, %v1350
      %v1352 = vpop.f32.mrb[0].mxu0
      %v1353 = vpop.f32.mrb[0].mxu0
      %v1354 = vpop.f32.mrb[0].mxu0
      %1355 = vdwg.mxu0
      %v1356 = vadd.f32 %v1116, %v1303
      %v1357 = vadd.f32 %v1117, %v1306
      %v1358 = vadd.f32 %v1118, %v1311
      %v1359 = vadd.f32 %v1119, %v1314
      %v1360 = vadd.f32 %v1120, %v1319
      %v1361 = vadd.f32 %v1121, %v1322
      %v1362 = vadd.f32 %v1122, %v1327
      %v1363 = vadd.f32 %v1123, %v1330
      %v1364 = vadd.f32 %v1124, %v1335
      %v1365 = vadd.f32 %v1125, %v1338
      %v1366 = vadd.f32 %v1126, %v1343
      %v1367 = vadd.f32 %v1127, %v1346
      %v1368 = vadd.f32 %v1128, %v1351
      %v1369 = vld [vmem:[%s256 + $0x4] sm:$0xc]
      %s1370 = scalar_lea.vmem %s260, 320
      %v1371 = vld [vmem:[%s1370] sm:$0xf]
      %v1372 = vld [vmem:[%s1370 + $0x4] sm:$0xf]
      %v1373 = vld [vmem:[%s1370 + $0x8] sm:$0xf]
      %v1374 = vld [vmem:[%s1370 + $0xc] sm:$0xf]
      %v1375 = vld [vmem:[%s1370 + $0x10] sm:$0xf]
      %v1376 = vld [vmem:[%s1370 + $0x14] sm:$0xf]
      %v1377 = vld [vmem:[%s1370 + $0x18] sm:$0xf]
      %v1378 = vld [vmem:[%s1370 + $0x1c] sm:$0xf]
      %v1379 = vld [vmem:[%s1370 + $0x20] sm:$0xf]
      %v1380 = vld [vmem:[%s1370 + $0x24] sm:$0xf]
      %v1381 = vld [vmem:[%s1370 + $0x28] sm:$0xf]
      %v1382 = vld [vmem:[%s1370 + $0x2c] sm:$0xf]
      %v1383 = vld [vmem:[%s1370 + $0x30] sm:$0xf]
      %v1384 = vld [vmem:[%s1370 + $0x34] sm:$0xf]
      %v1385 = vld [vmem:[%s1370 + $0x38] sm:$0xf]
      %v1386 = vld [vmem:[%s1370 + $0x3c] sm:$0xf]
      %v1388 = vunpack.c.l.b16 %v1369
      %v1389 = vpack.c.b16 %v941, %v1388
      %vm1390 = vcmask 1045504
      %v1391 = vrot.slane %v1389, 2
      %v1392 = vrot.slane %v954, 2
      %v1393 = vsel %vm1390, %v1391, %v1392
      %v1394 = vrot.slane %v955, 2
      %v1395 = vsel %vm1390, %v1392, %v1394
      %v1396 = vrot.slane %v956, 2
      %v1397 = vsel %vm1390, %v1394, %v1396
      %v1398 = vrot.slane %v957, 2
      %v1399 = vsel %vm1390, %v1396, %v1398
      %v1400 = vrot.slane %v958, 2
      %v1401 = vsel %vm1390, %v1398, %v1400
      %v1402 = vrot.slane %v1149, 2
      %v1403 = vsel %vm1390, %v1400, %v1402
      %v1427 = vunpack.c.l.b16 %v1371
      %v1428 = vunpack.c.l.b16 %v1372
      %v1429 = vunpack.c.l.b16 %v1373
      %v1430 = vunpack.c.l.b16 %v1374
      %v1431 = vunpack.c.l.b16 %v1375
      %v1432 = vunpack.c.l.b16 %v1376
      %v1433 = vunpack.c.l.b16 %v1377
      %v1434 = vunpack.c.l.b16 %v1378
      %v1435 = vunpack.c.l.b16 %v1379
      %v1436 = vunpack.c.l.b16 %v1380
      %v1437 = vunpack.c.l.b16 %v1381
      %v1438 = vunpack.c.l.b16 %v1382
      %v1439 = vunpack.c.l.b16 %v1383
      %v1440 = vunpack.c.l.b16 %v1384
      %v1441 = vunpack.c.l.b16 %v1385
      %v1442 = vunpack.c.l.b16 %v1386
      %v1443 = vpack.c.b16 %v1428, %v1427
      %v1444 = vpack.c.b16 %v1430, %v1429
      %v1445 = vpack.c.b16 %v1432, %v1431
      %v1446 = vpack.c.b16 %v1434, %v1433
      %v1447 = vpack.c.b16 %v1436, %v1435
      %v1448 = vpack.c.b16 %v1438, %v1437
      %v1449 = vpack.c.b16 %v1440, %v1439
      %v1450 = vpack.c.b16 %v1442, %v1441
      %1459 = vmatprep.subr.bf16.mxu0 0
      %1460 = vmatpush1.bf16.msra.mxu0 %v1443
      %1461 = vmatprep.subr.bf16.mxu0 0
      %1462 = vmatpush1.bf16.msra.mxu0 %v1444
      %1463 = vmatprep.subr.bf16.mxu0 0
      %1464 = vmatpush1.bf16.msra.mxu0 %v1445
      %1465 = vmatprep.subr.bf16.mxu0 0
      %1466 = vmatpush1.bf16.msra.mxu0 %v1446
      %1467 = vmatprep.subr.bf16.mxu0 0
      %1468 = vmatpush1.bf16.msra.mxu0 %v1447
      %1469 = vmatprep.subr.bf16.mxu0 0
      %1470 = vmatpush1.bf16.msra.mxu0 %v1448
      %1471 = vmatprep.subr.bf16.mxu0 0
      %1472 = vmatpush1.bf16.msra.mxu0 %v1449
      %1473 = vmatprep.subr.bf16.mxu0 0
      %1474 = vmatpush1.bf16.msra.mxu0 %v1450
      %1475 = vmatprep.subr.bf16.mxu0 0
      %1476 = vmatpush1.bf16.msra.mxu0 0
      %1477 = vmatprep.subr.bf16.mxu0 0
      %1478 = vmatpush1.bf16.msra.mxu0 0
      %1479 = vmatprep.subr.bf16.mxu0 0
      %1480 = vmatpush1.bf16.msra.mxu0 0
      %1481 = vmatprep.subr.bf16.mxu0 0
      %1482 = vmatpush1.bf16.msra.mxu0 0
      %1483 = vmatprep.subr.bf16.mxu0 0
      %1484 = vmatpush1.bf16.msra.mxu0 0
      %1485 = vmatprep.subr.bf16.mxu0 0
      %1486 = vmatpush1.bf16.msra.mxu0 0
      %1487 = vmatprep.subr.bf16.mxu0 0
      %1488 = vmatpush1.bf16.msra.mxu0 0
      %1489 = vmatprep.subr.bf16.mxu0 0
      %1490 = vmatpush1.bf16.msra.mxu0 0
      %1491 = vmatprep.mubr.bf16.mxu0 0
      %1492 = vmatmul.mubr.bf16.gmra.mrb[0].mxu0 %v1393
      %v1493 = vpop.f32.mrb[0].mxu0
      %v1494 = vadd.f32 0.0, %v1493
      %v1495 = vpop.f32.mrb[0].mxu0
      %v1496 = vpop.f32.mrb[0].mxu0
      %v1497 = vadd.f32 0.0, %v1496
      %v1498 = vpop.f32.mrb[0].mxu0
      %1499 = vmatprep.mubr.bf16.mxu0 0
      %1500 = vmatmul.mubr.bf16.gmra.mrb[0].mxu0 %v1395
      %v1501 = vpop.f32.mrb[0].mxu0
      %v1502 = vadd.f32 0.0, %v1501
      %v1503 = vpop.f32.mrb[0].mxu0
      %v1504 = vpop.f32.mrb[0].mxu0
      %v1505 = vadd.f32 0.0, %v1504
      %v1506 = vpop.f32.mrb[0].mxu0
      %1507 = vmatprep.mubr.bf16.mxu0 0
      %1508 = vmatmul.mubr.bf16.gmra.mrb[0].mxu0 %v1397
      %v1509 = vpop.f32.mrb[0].mxu0
      %v1510 = vadd.f32 0.0, %v1509
      %v1511 = vpop.f32.mrb[0].mxu0
      %v1512 = vpop.f32.mrb[0].mxu0
      %v1513 = vadd.f32 0.0, %v1512
      %v1514 = vpop.f32.mrb[0].mxu0
      %1515 = vmatprep.mubr.bf16.mxu0 0
      %1516 = vmatmul.mubr.bf16.gmra.mrb[0].mxu0 %v1399
      %v1517 = vpop.f32.mrb[0].mxu0
      %v1518 = vadd.f32 0.0, %v1517
      %v1519 = vpop.f32.mrb[0].mxu0
      %v1520 = vpop.f32.mrb[0].mxu0
      %v1521 = vadd.f32 0.0, %v1520
      %v1522 = vpop.f32.mrb[0].mxu0
      %1523 = vmatprep.mubr.bf16.mxu0 0
      %1524 = vmatmul.mubr.bf16.gmra.mrb[0].mxu0 %v1401
      %v1525 = vpop.f32.mrb[0].mxu0
      %v1526 = vadd.f32 0.0, %v1525
      %v1527 = vpop.f32.mrb[0].mxu0
      %v1528 = vpop.f32.mrb[0].mxu0
      %v1529 = vadd.f32 0.0, %v1528
      %v1530 = vpop.f32.mrb[0].mxu0
      %1531 = vmatprep.mubr.bf16.mxu0 0
      %1532 = vmatmul.mubr.bf16.gmra.mrb[0].mxu0 %v1403
      %v1533 = vpop.f32.mrb[0].mxu0
      %v1534 = vadd.f32 0.0, %v1533
      %v1535 = vpop.f32.mrb[0].mxu0
      %v1536 = vpop.f32.mrb[0].mxu0
      %v1537 = vadd.f32 0.0, %v1536
      %v1538 = vpop.f32.mrb[0].mxu0
      %1539 = vmatprep.mubr.bf16.mxu0 0
      %1540 = vmatmul.mubr.bf16.gmra.mrb[0].mxu0 %v1402
      %v1541 = vpop.f32.mrb[0].mxu0
      %v1542 = vadd.f32 0.0, %v1541
      %v1543 = vpop.f32.mrb[0].mxu0
      %v1544 = vpop.f32.mrb[0].mxu0
      %v1545 = vpop.f32.mrb[0].mxu0
      %1546 = vdwg.mxu0
      %v1547 = vadd.f32 %v1356, %v1494
      %v1548 = vadd.f32 %v1357, %v1497
      %v1549 = vadd.f32 %v1358, %v1502
      %v1550 = vadd.f32 %v1359, %v1505
      %v1551 = vadd.f32 %v1360, %v1510
      %v1552 = vadd.f32 %v1361, %v1513
      %v1553 = vadd.f32 %v1362, %v1518
      %v1554 = vadd.f32 %v1363, %v1521
      %v1555 = vadd.f32 %v1364, %v1526
      %v1556 = vadd.f32 %v1365, %v1529
      %v1557 = vadd.f32 %v1366, %v1534
      %v1558 = vadd.f32 %v1367, %v1537
      %v1559 = vadd.f32 %v1368, %v1542
      %v1560 = vld [vmem:[%s256 + $0x8] sm:$0xc]
      %v1561 = vld [vmem:[%s256 + $0xc] sm:$0xf]
      %v1562 = vld [vmem:[%s256 + $0x10] sm:$0xf]
      %v1563 = vld [vmem:[%s256 + $0x14] sm:$0xf]
      %v1564 = vld [vmem:[%s256 + $0x18] sm:$0xf]
      %v1565 = vld [vmem:[%s256 + $0x1c] sm:$0xf]
      %v1566 = vld [vmem:[%s256 + $0x20] sm:$0xf]
      %v1567 = vld [vmem:[%s256 + $0x24] sm:$0xf]
      %v1568 = vld [vmem:[%s256 + $0x28] sm:$0xf]
      %v1569 = vld [vmem:[%s256 + $0x2c] sm:$0xf]
      %v1570 = vld [vmem:[%s256 + $0x30] sm:$0xf]
      %v1571 = vld [vmem:[%s256 + $0x34] sm:$0xf]
      %v1572 = vld [vmem:[%s256 + $0x38] sm:$0xf]
      %s1573 = scalar_lea.vmem %s260, 384
      %v1574 = vld [vmem:[%s1573] sm:$0xf]
      %v1575 = vld [vmem:[%s1573 + $0x4] sm:$0xf]
      %v1576 = vld [vmem:[%s1573 + $0x8] sm:$0xf]
      %v1577 = vld [vmem:[%s1573 + $0xc] sm:$0xf]
      %v1578 = vld [vmem:[%s1573 + $0x10] sm:$0xf]
      %v1579 = vld [vmem:[%s1573 + $0x14] sm:$0xf]
      %v1580 = vld [vmem:[%s1573 + $0x18] sm:$0xf]
      %v1581 = vld [vmem:[%s1573 + $0x1c] sm:$0xf]
      %v1582 = vld [vmem:[%s1573 + $0x20] sm:$0xf]
      %v1583 = vld [vmem:[%s1573 + $0x24] sm:$0xf]
      %v1584 = vld [vmem:[%s1573 + $0x28] sm:$0xf]
      %v1585 = vld [vmem:[%s1573 + $0x2c] sm:$0xf]
      %v1586 = vld [vmem:[%s1573 + $0x30] sm:$0xf]
      %v1587 = vld [vmem:[%s1573 + $0x34] sm:$0xf]
      %v1588 = vld [vmem:[%s1573 + $0x38] sm:$0xf]
      %v1589 = vld [vmem:[%s1573 + $0x3c] sm:$0xf]
      %v1603 = vunpack.c.l.b16 %v1560
      %v1604 = vunpack.c.l.b16 %v1561
      %v1605 = vunpack.c.l.b16 %v1562
      %v1606 = vunpack.c.l.b16 %v1563
      %v1607 = vunpack.c.l.b16 %v1564
      %v1608 = vunpack.c.l.b16 %v1565
      %v1609 = vunpack.c.l.b16 %v1566
      %v1610 = vunpack.c.l.b16 %v1567
      %v1611 = vunpack.c.l.b16 %v1568
      %v1612 = vunpack.c.l.b16 %v1569
      %v1613 = vunpack.c.l.b16 %v1570
      %v1614 = vunpack.c.l.b16 %v1571
      %v1615 = vunpack.c.l.b16 %v1572
      %v1616 = vpack.c.b16 %v1604, %v1603
      %v1617 = vpack.c.b16 %v1606, %v1605
      %v1618 = vpack.c.b16 %v1608, %v1607
      %v1619 = vpack.c.b16 %v1610, %v1609
      %v1620 = vpack.c.b16 %v1612, %v1611
      %v1621 = vpack.c.b16 %v1614, %v1613
      %v1622 = vpack.c.b16 %v1615, %v1615
      %v1623 = vrot.slane %v1616, 2
      %v1624 = vrot.slane %v1617, 2
      %v1625 = vsel %vm1390, %v1623, %v1624
      %v1626 = vrot.slane %v1618, 2
      %v1627 = vsel %vm1390, %v1624, %v1626
      %v1628 = vrot.slane %v1619, 2
      %v1629 = vsel %vm1390, %v1626, %v1628
      %v1630 = vrot.slane %v1620, 2
      %v1631 = vsel %vm1390, %v1628, %v1630
      %v1632 = vrot.slane %v1621, 2
      %v1633 = vsel %vm1390, %v1630, %v1632
      %v1634 = vrot.slane %v1622, 2
      %v1635 = vsel %vm1390, %v1632, %v1634
      %v1659 = vunpack.c.l.b16 %v1574
      %v1660 = vunpack.c.l.b16 %v1575
      %v1661 = vunpack.c.l.b16 %v1576
      %v1662 = vunpack.c.l.b16 %v1577
      %v1663 = vunpack.c.l.b16 %v1578
      %v1664 = vunpack.c.l.b16 %v1579
      %v1665 = vunpack.c.l.b16 %v1580
      %v1666 = vunpack.c.l.b16 %v1581
      %v1667 = vunpack.c.l.b16 %v1582
      %v1668 = vunpack.c.l.b16 %v1583
      %v1669 = vunpack.c.l.b16 %v1584
      %v1670 = vunpack.c.l.b16 %v1585
      %v1671 = vunpack.c.l.b16 %v1586
      %v1672 = vunpack.c.l.b16 %v1587
      %v1673 = vunpack.c.l.b16 %v1588
      %v1674 = vunpack.c.l.b16 %v1589
      %v1675 = vpack.c.b16 %v1660, %v1659
      %v1676 = vpack.c.b16 %v1662, %v1661
      %v1677 = vpack.c.b16 %v1664, %v1663
      %v1678 = vpack.c.b16 %v1666, %v1665
      %v1679 = vpack.c.b16 %v1668, %v1667
      %v1680 = vpack.c.b16 %v1670, %v1669
      %v1681 = vpack.c.b16 %v1672, %v1671
      %v1682 = vpack.c.b16 %v1674, %v1673
      %1691 = vmatprep.subr.bf16.mxu0 0
      %1692 = vmatpush1.bf16.msra.mxu0 %v1675
      %1693 = vmatprep.subr.bf16.mxu0 0
      %1694 = vmatpush1.bf16.msra.mxu0 %v1676
      %1695 = vmatprep.subr.bf16.mxu0 0
      %1696 = vmatpush1.bf16.msra.mxu0 %v1677
      %1697 = vmatprep.subr.bf16.mxu0 0
      %1698 = vmatpush1.bf16.msra.mxu0 %v1678
      %1699 = vmatprep.subr.bf16.mxu0 0
      %1700 = vmatpush1.bf16.msra.mxu0 %v1679
      %1701 = vmatprep.subr.bf16.mxu0 0
      %1702 = vmatpush1.bf16.msra.mxu0 %v1680
      %1703 = vmatprep.subr.bf16.mxu0 0
      %1704 = vmatpush1.bf16.msra.mxu0 %v1681
      %1705 = vmatprep.subr.bf16.mxu0 0
      %1706 = vmatpush1.bf16.msra.mxu0 %v1682
      %1707 = vmatprep.subr.bf16.mxu0 0
      %1708 = vmatpush1.bf16.msra.mxu0 0
      %1709 = vmatprep.subr.bf16.mxu0 0
      %1710 = vmatpush1.bf16.msra.mxu0 0
      %1711 = vmatprep.subr.bf16.mxu0 0
      %1712 = vmatpush1.bf16.msra.mxu0 0
      %1713 = vmatprep.subr.bf16.mxu0 0
      %1714 = vmatpush1.bf16.msra.mxu0 0
      %1715 = vmatprep.subr.bf16.mxu0 0
      %1716 = vmatpush1.bf16.msra.mxu0 0
      %1717 = vmatprep.subr.bf16.mxu0 0
      %1718 = vmatpush1.bf16.msra.mxu0 0
      %1719 = vmatprep.subr.bf16.mxu0 0
      %1720 = vmatpush1.bf16.msra.mxu0 0
      %1721 = vmatprep.subr.bf16.mxu0 0
      %1722 = vmatpush1.bf16.msra.mxu0 0
      %1723 = vmatprep.mubr.bf16.mxu0 0
      %1724 = vmatmul.mubr.bf16.gmra.mrb[0].mxu0 %v1625
      %v1725 = vpop.f32.mrb[0].mxu0
      %v1726 = vadd.f32 0.0, %v1725
      %v1727 = vpop.f32.mrb[0].mxu0
      %v1728 = vpop.f32.mrb[0].mxu0
      %v1729 = vadd.f32 0.0, %v1728
      %v1730 = vpop.f32.mrb[0].mxu0
      %1731 = vmatprep.mubr.bf16.mxu0 0
      %1732 = vmatmul.mubr.bf16.gmra.mrb[0].mxu0 %v1627
      %v1733 = vpop.f32.mrb[0].mxu0
      %v1734 = vadd.f32 0.0, %v1733
      %v1735 = vpop.f32.mrb[0].mxu0
      %v1736 = vpop.f32.mrb[0].mxu0
      %v1737 = vadd.f32 0.0, %v1736
      %v1738 = vpop.f32.mrb[0].mxu0
      %1739 = vmatprep.mubr.bf16.mxu0 0
      %1740 = vmatmul.mubr.bf16.gmra.mrb[0].mxu0 %v1629
      %v1741 = vpop.f32.mrb[0].mxu0
      %v1742 = vadd.f32 0.0, %v1741
      %v1743 = vpop.f32.mrb[0].mxu0
      %v1744 = vpop.f32.mrb[0].mxu0
      %v1745 = vadd.f32 0.0, %v1744
      %v1746 = vpop.f32.mrb[0].mxu0
      %1747 = vmatprep.mubr.bf16.mxu0 0
      %1748 = vmatmul.mubr.bf16.gmra.mrb[0].mxu0 %v1631
      %v1749 = vpop.f32.mrb[0].mxu0
      %v1750 = vadd.f32 0.0, %v1749
      %v1751 = vpop.f32.mrb[0].mxu0
      %v1752 = vpop.f32.mrb[0].mxu0
      %v1753 = vadd.f32 0.0, %v1752
      %v1754 = vpop.f32.mrb[0].mxu0
      %1755 = vmatprep.mubr.bf16.mxu0 0
      %1756 = vmatmul.mubr.bf16.gmra.mrb[0].mxu0 %v1633
      %v1757 = vpop.f32.mrb[0].mxu0
      %v1758 = vadd.f32 0.0, %v1757
      %v1759 = vpop.f32.mrb[0].mxu0
      %v1760 = vpop.f32.mrb[0].mxu0
      %v1761 = vadd.f32 0.0, %v1760
      %v1762 = vpop.f32.mrb[0].mxu0
      %1763 = vmatprep.mubr.bf16.mxu0 0
      %1764 = vmatmul.mubr.bf16.gmra.mrb[0].mxu0 %v1635
      %v1765 = vpop.f32.mrb[0].mxu0
      %v1766 = vadd.f32 0.0, %v1765
      %v1767 = vpop.f32.mrb[0].mxu0
      %v1768 = vpop.f32.mrb[0].mxu0
      %v1769 = vadd.f32 0.0, %v1768
      %v1770 = vpop.f32.mrb[0].mxu0
      %1771 = vmatprep.mubr.bf16.mxu0 0
      %1772 = vmatmul.mubr.bf16.gmra.mrb[0].mxu0 %v1634
      %v1773 = vpop.f32.mrb[0].mxu0
      %v1774 = vadd.f32 0.0, %v1773
      %v1775 = vpop.f32.mrb[0].mxu0
      %v1776 = vpop.f32.mrb[0].mxu0
      %v1777 = vpop.f32.mrb[0].mxu0
      %1778 = vdwg.mxu0
      %v1779 = vadd.f32 %v1547, %v1726
      %v1780 = vadd.f32 %v1548, %v1729
      %v1781 = vadd.f32 %v1549, %v1734
      %v1782 = vadd.f32 %v1550, %v1737
      %v1783 = vadd.f32 %v1551, %v1742
      %v1784 = vadd.f32 %v1552, %v1745
      %v1785 = vadd.f32 %v1553, %v1750
      %v1786 = vadd.f32 %v1554, %v1753
      %v1787 = vadd.f32 %v1555, %v1758
      %v1788 = vadd.f32 %v1556, %v1761
      %v1789 = vadd.f32 %v1557, %v1766
      %v1790 = vadd.f32 %v1558, %v1769
      %v1791 = vadd.f32 %v1559, %v1774
      %v1792 = vld [vmem:[%s256 + $0x8] sm:$0xc]
      %v1793 = vld [vmem:[%s256 + $0xc] sm:$0xf]
      %v1794 = vld [vmem:[%s256 + $0x10] sm:$0xf]
      %v1795 = vld [vmem:[%s256 + $0x14] sm:$0xf]
      %v1796 = vld [vmem:[%s256 + $0x18] sm:$0xf]
      %v1797 = vld [vmem:[%s256 + $0x1c] sm:$0xf]
      %v1798 = vld [vmem:[%s256 + $0x20] sm:$0xf]
      %v1799 = vld [vmem:[%s256 + $0x24] sm:$0xf]
      %v1800 = vld [vmem:[%s256 + $0x28] sm:$0xf]
      %v1801 = vld [vmem:[%s256 + $0x2c] sm:$0xf]
      %v1802 = vld [vmem:[%s256 + $0x30] sm:$0xf]
      %v1803 = vld [vmem:[%s256 + $0x34] sm:$0xf]
      %v1804 = vld [vmem:[%s256 + $0x38] sm:$0xf]
      %v1805 = vld [vmem:[%s256 + $0x3c] sm:$0x1]
      %s1806 = scalar_lea.vmem %s260, 448
      %v1807 = vld [vmem:[%s1806] sm:$0xf]
      %v1808 = vld [vmem:[%s1806 + $0x4] sm:$0xf]
      %v1809 = vld [vmem:[%s1806 + $0x8] sm:$0xf]
      %v1810 = vld [vmem:[%s1806 + $0xc] sm:$0xf]
      %v1811 = vld [vmem:[%s1806 + $0x10] sm:$0xf]
      %v1812 = vld [vmem:[%s1806 + $0x14] sm:$0xf]
      %v1813 = vld [vmem:[%s1806 + $0x18] sm:$0xf]
      %v1814 = vld [vmem:[%s1806 + $0x1c] sm:$0xf]
      %v1815 = vld [vmem:[%s1806 + $0x20] sm:$0xf]
      %v1816 = vld [vmem:[%s1806 + $0x24] sm:$0xf]
      %v1817 = vld [vmem:[%s1806 + $0x28] sm:$0xf]
      %v1818 = vld [vmem:[%s1806 + $0x2c] sm:$0xf]
      %v1819 = vld [vmem:[%s1806 + $0x30] sm:$0xf]
      %v1820 = vld [vmem:[%s1806 + $0x34] sm:$0xf]
      %v1821 = vld [vmem:[%s1806 + $0x38] sm:$0xf]
      %v1822 = vld [vmem:[%s1806 + $0x3c] sm:$0xf]
      %v1837 = vunpack.c.l.b16 %v1792
      %v1838 = vunpack.c.l.b16 %v1793
      %v1839 = vunpack.c.l.b16 %v1794
      %v1840 = vunpack.c.l.b16 %v1795
      %v1841 = vunpack.c.l.b16 %v1796
      %v1842 = vunpack.c.l.b16 %v1797
      %v1843 = vunpack.c.l.b16 %v1798
      %v1844 = vunpack.c.l.b16 %v1799
      %v1845 = vunpack.c.l.b16 %v1800
      %v1846 = vunpack.c.l.b16 %v1801
      %v1847 = vunpack.c.l.b16 %v1802
      %v1848 = vunpack.c.l.b16 %v1803
      %v1849 = vunpack.c.l.b16 %v1804
      %v1850 = vunpack.c.l.b16 %v1805
      %v1851 = vpack.c.b16 %v1838, %v1837
      %v1852 = vpack.c.b16 %v1840, %v1839
      %v1853 = vpack.c.b16 %v1842, %v1841
      %v1854 = vpack.c.b16 %v1844, %v1843
      %v1855 = vpack.c.b16 %v1846, %v1845
      %v1856 = vpack.c.b16 %v1848, %v1847
      %v1857 = vpack.c.b16 %v1850, %v1849
      %vm1858 = vsmask.f32 5376
      %v1860 = vshrl.u32 %v1851, 16
      %v1862 = vrot.slane %v1860, 2
      %v1863 = vshll.u32 %v1851, 16
      %v1865 = vrot.slane %v1863, 3
      %v1866 = vor.u32 %v1862, %v1865
      %v1868 = vshrl.u32 %v1852, 16
      %v1870 = vrot.slane %v1868, 2
      %v1871 = vshll.u32 %v1852, 16
      %v1873 = vrot.slane %v1871, 3
      %v1874 = vor.u32 %v1870, %v1873
      %v1875 = vsel %vm1858, %v1866, %v1874
      %v1877 = vshrl.u32 %v1853, 16
      %v1879 = vrot.slane %v1877, 2
      %v1880 = vshll.u32 %v1853, 16
      %v1882 = vrot.slane %v1880, 3
      %v1883 = vor.u32 %v1879, %v1882
      %v1884 = vsel %vm1858, %v1874, %v1883
      %v1886 = vshrl.u32 %v1854, 16
      %v1888 = vrot.slane %v1886, 2
      %v1889 = vshll.u32 %v1854, 16
      %v1891 = vrot.slane %v1889, 3
      %v1892 = vor.u32 %v1888, %v1891
      %v1893 = vsel %vm1858, %v1883, %v1892
      %v1895 = vshrl.u32 %v1855, 16
      %v1897 = vrot.slane %v1895, 2
      %v1898 = vshll.u32 %v1855, 16
      %v1900 = vrot.slane %v1898, 3
      %v1901 = vor.u32 %v1897, %v1900
      %v1902 = vsel %vm1858, %v1892, %v1901
      %v1904 = vshrl.u32 %v1856, 16
      %v1906 = vrot.slane %v1904, 2
      %v1907 = vshll.u32 %v1856, 16
      %v1909 = vrot.slane %v1907, 3
      %v1910 = vor.u32 %v1906, %v1909
      %v1911 = vsel %vm1858, %v1901, %v1910
      %v1913 = vshrl.u32 %v1857, 16
      %v1915 = vrot.slane %v1913, 2
      %v1916 = vshll.u32 %v1857, 16
      %v1918 = vrot.slane %v1916, 3
      %v1919 = vor.u32 %v1915, %v1918
      %v1920 = vsel %vm1858, %v1910, %v1919
      %v1944 = vunpack.c.l.b16 %v1807
      %v1945 = vunpack.c.l.b16 %v1808
      %v1946 = vunpack.c.l.b16 %v1809
      %v1947 = vunpack.c.l.b16 %v1810
      %v1948 = vunpack.c.l.b16 %v1811
      %v1949 = vunpack.c.l.b16 %v1812
      %v1950 = vunpack.c.l.b16 %v1813
      %v1951 = vunpack.c.l.b16 %v1814
      %v1952 = vunpack.c.l.b16 %v1815
      %v1953 = vunpack.c.l.b16 %v1816
      %v1954 = vunpack.c.l.b16 %v1817
      %v1955 = vunpack.c.l.b16 %v1818
      %v1956 = vunpack.c.l.b16 %v1819
      %v1957 = vunpack.c.l.b16 %v1820
      %v1958 = vunpack.c.l.b16 %v1821
      %v1959 = vunpack.c.l.b16 %v1822
      %v1960 = vpack.c.b16 %v1945, %v1944
      %v1961 = vpack.c.b16 %v1947, %v1946
      %v1962 = vpack.c.b16 %v1949, %v1948
      %v1963 = vpack.c.b16 %v1951, %v1950
      %v1964 = vpack.c.b16 %v1953, %v1952
      %v1965 = vpack.c.b16 %v1955, %v1954
      %v1966 = vpack.c.b16 %v1957, %v1956
      %v1967 = vpack.c.b16 %v1959, %v1958
      %1976 = vmatprep.subr.bf16.mxu0 0
      %1977 = vmatpush1.bf16.msra.mxu0 %v1960
      %1978 = vmatprep.subr.bf16.mxu0 0
      %1979 = vmatpush1.bf16.msra.mxu0 %v1961
      %1980 = vmatprep.subr.bf16.mxu0 0
      %1981 = vmatpush1.bf16.msra.mxu0 %v1962
      %1982 = vmatprep.subr.bf16.mxu0 0
      %1983 = vmatpush1.bf16.msra.mxu0 %v1963
      %1984 = vmatprep.subr.bf16.mxu0 0
      %1985 = vmatpush1.bf16.msra.mxu0 %v1964
      %1986 = vmatprep.subr.bf16.mxu0 0
      %1987 = vmatpush1.bf16.msra.mxu0 %v1965
      %1988 = vmatprep.subr.bf16.mxu0 0
      %1989 = vmatpush1.bf16.msra.mxu0 %v1966
      %1990 = vmatprep.subr.bf16.mxu0 0
      %1991 = vmatpush1.bf16.msra.mxu0 %v1967
      %1992 = vmatprep.subr.bf16.mxu0 0
      %1993 = vmatpush1.bf16.msra.mxu0 0
      %1994 = vmatprep.subr.bf16.mxu0 0
      %1995 = vmatpush1.bf16.msra.mxu0 0
      %1996 = vmatprep.subr.bf16.mxu0 0
      %1997 = vmatpush1.bf16.msra.mxu0 0
      %1998 = vmatprep.subr.bf16.mxu0 0
      %1999 = vmatpush1.bf16.msra.mxu0 0
      %2000 = vmatprep.subr.bf16.mxu0 0
      %2001 = vmatpush1.bf16.msra.mxu0 0
      %2002 = vmatprep.subr.bf16.mxu0 0
      %2003 = vmatpush1.bf16.msra.mxu0 0
      %2004 = vmatprep.subr.bf16.mxu0 0
      %2005 = vmatpush1.bf16.msra.mxu0 0
      %2006 = vmatprep.subr.bf16.mxu0 0
      %2007 = vmatpush1.bf16.msra.mxu0 0
      %2008 = vmatprep.mubr.bf16.mxu0 0
      %2009 = vmatmul.mubr.bf16.gmra.mrb[0].mxu0 %v1875
      %v2010 = vpop.f32.mrb[0].mxu0
      %v2011 = vadd.f32 0.0, %v2010
      %v2012 = vpop.f32.mrb[0].mxu0
      %v2013 = vpop.f32.mrb[0].mxu0
      %v2014 = vadd.f32 0.0, %v2013
      %v2015 = vpop.f32.mrb[0].mxu0
      %2016 = vmatprep.mubr.bf16.mxu0 0
      %2017 = vmatmul.mubr.bf16.gmra.mrb[0].mxu0 %v1884
      %v2018 = vpop.f32.mrb[0].mxu0
      %v2019 = vadd.f32 0.0, %v2018
      %v2020 = vpop.f32.mrb[0].mxu0
      %v2021 = vpop.f32.mrb[0].mxu0
      %v2022 = vadd.f32 0.0, %v2021
      %v2023 = vpop.f32.mrb[0].mxu0
      %2024 = vmatprep.mubr.bf16.mxu0 0
      %2025 = vmatmul.mubr.bf16.gmra.mrb[0].mxu0 %v1893
      %v2026 = vpop.f32.mrb[0].mxu0
      %v2027 = vadd.f32 0.0, %v2026
      %v2028 = vpop.f32.mrb[0].mxu0
      %v2029 = vpop.f32.mrb[0].mxu0
      %v2030 = vadd.f32 0.0, %v2029
      %v2031 = vpop.f32.mrb[0].mxu0
      %2032 = vmatprep.mubr.bf16.mxu0 0
      %2033 = vmatmul.mubr.bf16.gmra.mrb[0].mxu0 %v1902
      %v2034 = vpop.f32.mrb[0].mxu0
      %v2035 = vadd.f32 0.0, %v2034
      %v2036 = vpop.f32.mrb[0].mxu0
      %v2037 = vpop.f32.mrb[0].mxu0
      %v2038 = vadd.f32 0.0, %v2037
      %v2039 = vpop.f32.mrb[0].mxu0
      %2040 = vmatprep.mubr.bf16.mxu0 0
      %2041 = vmatmul.mubr.bf16.gmra.mrb[0].mxu0 %v1911
      %v2042 = vpop.f32.mrb[0].mxu0
      %v2043 = vadd.f32 0.0, %v2042
      %v2044 = vpop.f32.mrb[0].mxu0
      %v2045 = vpop.f32.mrb[0].mxu0
      %v2046 = vadd.f32 0.0, %v2045
      %v2047 = vpop.f32.mrb[0].mxu0
      %2048 = vmatprep.mubr.bf16.mxu0 0
      %2049 = vmatmul.mubr.bf16.gmra.mrb[0].mxu0 %v1920
      %v2050 = vpop.f32.mrb[0].mxu0
      %v2051 = vadd.f32 0.0, %v2050
      %v2052 = vpop.f32.mrb[0].mxu0
      %v2053 = vpop.f32.mrb[0].mxu0
      %v2054 = vadd.f32 0.0, %v2053
      %v2055 = vpop.f32.mrb[0].mxu0
      %2056 = vmatprep.mubr.bf16.mxu0 0
      %2057 = vmatmul.mubr.bf16.gmra.mrb[0].mxu0 %v1919
      %v2058 = vpop.f32.mrb[0].mxu0
      %v2059 = vadd.f32 0.0, %v2058
      %v2060 = vpop.f32.mrb[0].mxu0
      %v2061 = vpop.f32.mrb[0].mxu0
      %v2062 = vpop.f32.mrb[0].mxu0
      %2063 = vdwg.mxu0
      %v2064 = vadd.f32 %v1779, %v2011
      %v2065 = vadd.f32 %v1780, %v2014
      %v2066 = vadd.f32 %v1781, %v2019
      %v2067 = vadd.f32 %v1782, %v2022
      %v2068 = vadd.f32 %v1783, %v2027
      %v2069 = vadd.f32 %v1784, %v2030
      %v2070 = vadd.f32 %v1785, %v2035
      %v2071 = vadd.f32 %v1786, %v2038
      %v2072 = vadd.f32 %v1787, %v2043
      %v2073 = vadd.f32 %v1788, %v2046
      %v2074 = vadd.f32 %v1789, %v2051
      %v2075 = vadd.f32 %v1790, %v2054
      %v2076 = vadd.f32 %v1791, %v2059
      %v2077 = vld [vmem:[%s256 + $0x8] sm:$0x8]
      %s2078 = scalar_lea.vmem %s260, 512
      %v2079 = vld [vmem:[%s2078] sm:$0xf]
      %v2080 = vld [vmem:[%s2078 + $0x4] sm:$0xf]
      %v2081 = vld [vmem:[%s2078 + $0x8] sm:$0xf]
      %v2082 = vld [vmem:[%s2078 + $0xc] sm:$0xf]
      %v2083 = vld [vmem:[%s2078 + $0x10] sm:$0xf]
      %v2084 = vld [vmem:[%s2078 + $0x14] sm:$0xf]
      %v2085 = vld [vmem:[%s2078 + $0x18] sm:$0xf]
      %v2086 = vld [vmem:[%s2078 + $0x1c] sm:$0xf]
      %v2087 = vld [vmem:[%s2078 + $0x20] sm:$0xf]
      %v2088 = vld [vmem:[%s2078 + $0x24] sm:$0xf]
      %v2089 = vld [vmem:[%s2078 + $0x28] sm:$0xf]
      %v2090 = vld [vmem:[%s2078 + $0x2c] sm:$0xf]
      %v2091 = vld [vmem:[%s2078 + $0x30] sm:$0xf]
      %v2092 = vld [vmem:[%s2078 + $0x34] sm:$0xf]
      %v2093 = vld [vmem:[%s2078 + $0x38] sm:$0xf]
      %v2094 = vld [vmem:[%s2078 + $0x3c] sm:$0xf]
      %v2096 = vunpack.c.l.b16 %v2077
      %v2097 = vpack.c.b16 %v1838, %v2096
      %vm2098 = vcmask 1044480
      %v2099 = vrot.slane %v2097, 3
      %v2100 = vrot.slane %v1852, 3
      %v2101 = vsel %vm2098, %v2099, %v2100
      %v2102 = vrot.slane %v1853, 3
      %v2103 = vsel %vm2098, %v2100, %v2102
      %v2104 = vrot.slane %v1854, 3
      %v2105 = vsel %vm2098, %v2102, %v2104
      %v2106 = vrot.slane %v1855, 3
      %v2107 = vsel %vm2098, %v2104, %v2106
      %v2108 = vrot.slane %v1856, 3
      %v2109 = vsel %vm2098, %v2106, %v2108
      %v2110 = vrot.slane %v1857, 3
      %v2111 = vsel %vm2098, %v2108, %v2110
      %v2135 = vunpack.c.l.b16 %v2079
      %v2136 = vunpack.c.l.b16 %v2080
      %v2137 = vunpack.c.l.b16 %v2081
      %v2138 = vunpack.c.l.b16 %v2082
      %v2139 = vunpack.c.l.b16 %v2083
      %v2140 = vunpack.c.l.b16 %v2084
      %v2141 = vunpack.c.l.b16 %v2085
      %v2142 = vunpack.c.l.b16 %v2086
      %v2143 = vunpack.c.l.b16 %v2087
      %v2144 = vunpack.c.l.b16 %v2088
      %v2145 = vunpack.c.l.b16 %v2089
      %v2146 = vunpack.c.l.b16 %v2090
      %v2147 = vunpack.c.l.b16 %v2091
      %v2148 = vunpack.c.l.b16 %v2092
      %v2149 = vunpack.c.l.b16 %v2093
      %v2150 = vunpack.c.l.b16 %v2094
      %v2151 = vpack.c.b16 %v2136, %v2135
      %v2152 = vpack.c.b16 %v2138, %v2137
      %v2153 = vpack.c.b16 %v2140, %v2139
      %v2154 = vpack.c.b16 %v2142, %v2141
      %v2155 = vpack.c.b16 %v2144, %v2143
      %v2156 = vpack.c.b16 %v2146, %v2145
      %v2157 = vpack.c.b16 %v2148, %v2147
      %v2158 = vpack.c.b16 %v2150, %v2149
      %2167 = vmatprep.subr.bf16.mxu0 0
      %2168 = vmatpush1.bf16.msra.mxu0 %v2151
      %2169 = vmatprep.subr.bf16.mxu0 0
      %2170 = vmatpush1.bf16.msra.mxu0 %v2152
      %2171 = vmatprep.subr.bf16.mxu0 0
      %2172 = vmatpush1.bf16.msra.mxu0 %v2153
      %2173 = vmatprep.subr.bf16.mxu0 0
      %2174 = vmatpush1.bf16.msra.mxu0 %v2154
      %2175 = vmatprep.subr.bf16.mxu0 0
      %2176 = vmatpush1.bf16.msra.mxu0 %v2155
      %2177 = vmatprep.subr.bf16.mxu0 0
      %2178 = vmatpush1.bf16.msra.mxu0 %v2156
      %2179 = vmatprep.subr.bf16.mxu0 0
      %2180 = vmatpush1.bf16.msra.mxu0 %v2157
      %2181 = vmatprep.subr.bf16.mxu0 0
      %2182 = vmatpush1.bf16.msra.mxu0 %v2158
      %2183 = vmatprep.subr.bf16.mxu0 0
      %2184 = vmatpush1.bf16.msra.mxu0 0
      %2185 = vmatprep.subr.bf16.mxu0 0
      %2186 = vmatpush1.bf16.msra.mxu0 0
      %2187 = vmatprep.subr.bf16.mxu0 0
      %2188 = vmatpush1.bf16.msra.mxu0 0
      %2189 = vmatprep.subr.bf16.mxu0 0
      %2190 = vmatpush1.bf16.msra.mxu0 0
      %2191 = vmatprep.subr.bf16.mxu0 0
      %2192 = vmatpush1.bf16.msra.mxu0 0
      %2193 = vmatprep.subr.bf16.mxu0 0
      %2194 = vmatpush1.bf16.msra.mxu0 0
      %2195 = vmatprep.subr.bf16.mxu0 0
      %2196 = vmatpush1.bf16.msra.mxu0 0
      %2197 = vmatprep.subr.bf16.mxu0 0
      %2198 = vmatpush1.bf16.msra.mxu0 0
      %2199 = vmatprep.mubr.bf16.mxu0 0
      %2200 = vmatmul.mubr.bf16.gmra.mrb[0].mxu0 %v2101
      %v2201 = vpop.f32.mrb[0].mxu0
      %v2202 = vadd.f32 0.0, %v2201
      %v2203 = vpop.f32.mrb[0].mxu0
      %v2204 = vpop.f32.mrb[0].mxu0
      %v2205 = vadd.f32 0.0, %v2204
      %v2206 = vpop.f32.mrb[0].mxu0
      %2207 = vmatprep.mubr.bf16.mxu0 0
      %2208 = vmatmul.mubr.bf16.gmra.mrb[0].mxu0 %v2103
      %v2209 = vpop.f32.mrb[0].mxu0
      %v2210 = vadd.f32 0.0, %v2209
      %v2211 = vpop.f32.mrb[0].mxu0
      %v2212 = vpop.f32.mrb[0].mxu0
      %v2213 = vadd.f32 0.0, %v2212
      %v2214 = vpop.f32.mrb[0].mxu0
      %2215 = vmatprep.mubr.bf16.mxu0 0
      %2216 = vmatmul.mubr.bf16.gmra.mrb[0].mxu0 %v2105
      %v2217 = vpop.f32.mrb[0].mxu0
      %v2218 = vadd.f32 0.0, %v2217
      %v2219 = vpop.f32.mrb[0].mxu0
      %v2220 = vpop.f32.mrb[0].mxu0
      %v2221 = vadd.f32 0.0, %v2220
      %v2222 = vpop.f32.mrb[0].mxu0
      %2223 = vmatprep.mubr.bf16.mxu0 0
      %2224 = vmatmul.mubr.bf16.gmra.mrb[0].mxu0 %v2107
      %v2225 = vpop.f32.mrb[0].mxu0
      %v2226 = vadd.f32 0.0, %v2225
      %v2227 = vpop.f32.mrb[0].mxu0
      %v2228 = vpop.f32.mrb[0].mxu0
      %v2229 = vadd.f32 0.0, %v2228
      %v2230 = vpop.f32.mrb[0].mxu0
      %2231 = vmatprep.mubr.bf16.mxu0 0
      %2232 = vmatmul.mubr.bf16.gmra.mrb[0].mxu0 %v2109
      %v2233 = vpop.f32.mrb[0].mxu0
      %v2234 = vadd.f32 0.0, %v2233
      %v2235 = vpop.f32.mrb[0].mxu0
      %v2236 = vpop.f32.mrb[0].mxu0
      %v2237 = vadd.f32 0.0, %v2236
      %v2238 = vpop.f32.mrb[0].mxu0
      %2239 = vmatprep.mubr.bf16.mxu0 0
      %2240 = vmatmul.mubr.bf16.gmra.mrb[0].mxu0 %v2111
      %v2241 = vpop.f32.mrb[0].mxu0
      %v2242 = vadd.f32 0.0, %v2241
      %v2243 = vpop.f32.mrb[0].mxu0
      %v2244 = vpop.f32.mrb[0].mxu0
      %v2245 = vadd.f32 0.0, %v2244
      %v2246 = vpop.f32.mrb[0].mxu0
      %2247 = vmatprep.mubr.bf16.mxu0 0
      %2248 = vmatmul.mubr.bf16.gmra.mrb[0].mxu0 %v2110
      %v2249 = vpop.f32.mrb[0].mxu0
      %v2250 = vadd.f32 0.0, %v2249
      %v2251 = vpop.f32.mrb[0].mxu0
      %v2252 = vpop.f32.mrb[0].mxu0
      %v2253 = vpop.f32.mrb[0].mxu0
      %2254 = vdwg.mxu0
      %v2255 = vadd.f32 %v2064, %v2202
      %v2256 = vadd.f32 %v2065, %v2205
      %v2257 = vadd.f32 %v2066, %v2210
      %v2258 = vadd.f32 %v2067, %v2213
      %v2259 = vadd.f32 %v2068, %v2218
      %v2260 = vadd.f32 %v2069, %v2221
      %v2261 = vadd.f32 %v2070, %v2226
      %v2262 = vadd.f32 %v2071, %v2229
      %v2263 = vadd.f32 %v2072, %v2234
      %v2264 = vadd.f32 %v2073, %v2237
      %v2265 = vadd.f32 %v2074, %v2242
      %v2266 = vadd.f32 %v2075, %v2245
      %v2267 = vadd.f32 %v2076, %v2250
      %v2268 = vld [vmem:[%s263] sm:$0x1]
      %v2270 = vlaneseq
      %v2271 = vshrl.u32 %v2270, 7
      %v2272 = vsub.s32 0, %v2271
      %v2273 = vrot.slane %v2268, %v2272
      %v2275 = vadd.f32 %v2255, %v2273
      %v2276 = vadd.f32 %v2256, %v2273
      %v2277 = vadd.f32 %v2257, %v2273
      %v2278 = vadd.f32 %v2258, %v2273
      %v2279 = vadd.f32 %v2259, %v2273
      %v2280 = vadd.f32 %v2260, %v2273
      %v2281 = vadd.f32 %v2261, %v2273
      %v2282 = vadd.f32 %v2262, %v2273
      %v2283 = vadd.f32 %v2263, %v2273
      %v2284 = vadd.f32 %v2264, %v2273
      %v2285 = vadd.f32 %v2265, %v2273
      %v2286 = vadd.f32 %v2266, %v2273
      %v2287 = vadd.f32 %v2267, %v2273
      %v2288 = vld [vmem:[%s271] sm:$0xf]
      %v2289 = vld [vmem:[%s271 + $0x4] sm:$0xf]
      %v2290 = vld [vmem:[%s271 + $0x8] sm:$0xf]
      %v2291 = vld [vmem:[%s271 + $0xc] sm:$0xf]
      %v2292 = vld [vmem:[%s271 + $0x10] sm:$0xf]
      %v2293 = vld [vmem:[%s271 + $0x14] sm:$0xf]
      %v2294 = vld [vmem:[%s271 + $0x18] sm:$0xf]
      %v2295 = vld [vmem:[%s271 + $0x1c] sm:$0xf]
      %v2296 = vld [vmem:[%s271 + $0x20] sm:$0xf]
      %v2297 = vld [vmem:[%s271 + $0x24] sm:$0xf]
      %v2298 = vld [vmem:[%s271 + $0x28] sm:$0xf]
      %v2299 = vld [vmem:[%s271 + $0x2c] sm:$0xf]
      %v2300 = vld [vmem:[%s271 + $0x30] sm:$0x3]
      %v2301 = vunpack.c.l.bf16 %v2288
      %v2302 = vunpack.c.l.bf16 %v2289
      %v2303 = vunpack.c.l.bf16 %v2290
      %v2304 = vunpack.c.l.bf16 %v2291
      %v2305 = vunpack.c.l.bf16 %v2292
      %v2306 = vunpack.c.l.bf16 %v2293
      %v2307 = vunpack.c.l.bf16 %v2294
      %v2308 = vunpack.c.l.bf16 %v2295
      %v2309 = vunpack.c.l.bf16 %v2296
      %v2310 = vunpack.c.l.bf16 %v2297
      %v2311 = vunpack.c.l.bf16 %v2298
      %v2312 = vunpack.c.l.bf16 %v2299
      %v2313 = vunpack.c.l.bf16 %v2300
      %v2314 = vadd.f32 %v2275, %v2301
      %v2315 = vadd.f32 %v2276, %v2302
      %v2316 = vadd.f32 %v2277, %v2303
      %v2317 = vadd.f32 %v2278, %v2304
      %v2318 = vadd.f32 %v2279, %v2305
      %v2319 = vadd.f32 %v2280, %v2306
      %v2320 = vadd.f32 %v2281, %v2307
      %v2321 = vadd.f32 %v2282, %v2308
      %v2322 = vadd.f32 %v2283, %v2309
      %v2323 = vadd.f32 %v2284, %v2310
      %v2324 = vadd.f32 %v2285, %v2311
      %v2325 = vadd.f32 %v2286, %v2312
      %v2326 = vadd.f32 %v2287, %v2313
      %v2327 = vmax.f32 %v2314, 0.0
      %v2328 = vmax.f32 %v2315, 0.0
      %v2329 = vmax.f32 %v2316, 0.0
      %v2330 = vmax.f32 %v2317, 0.0
      %v2331 = vmax.f32 %v2318, 0.0
      %v2332 = vmax.f32 %v2319, 0.0
      %v2333 = vmax.f32 %v2320, 0.0
      %v2334 = vmax.f32 %v2321, 0.0
      %v2335 = vmax.f32 %v2322, 0.0
      %v2336 = vmax.f32 %v2323, 0.0
      %v2337 = vmax.f32 %v2324, 0.0
      %v2338 = vmax.f32 %v2325, 0.0
      %v2339 = vmax.f32 %v2326, 0.0
      %2340 = vst [vmem:[%s279] sm:$0xff] %v2327
      %2341 = vst [vmem:[%s279 + $0x8] sm:$0xff] %v2328
      %2342 = vst [vmem:[%s279 + $0x10] sm:$0xff] %v2329
      %2343 = vst [vmem:[%s279 + $0x18] sm:$0xff] %v2330
      %2344 = vst [vmem:[%s279 + $0x20] sm:$0xff] %v2331
      %2345 = vst [vmem:[%s279 + $0x28] sm:$0xff] %v2332
      %2346 = vst [vmem:[%s279 + $0x30] sm:$0xff] %v2333
      %2347 = vst [vmem:[%s279 + $0x38] sm:$0xff] %v2334
      %2348 = vst [vmem:[%s279 + $0x40] sm:$0xff] %v2335
      %2349 = vst [vmem:[%s279 + $0x48] sm:$0xff] %v2336
      %2350 = vst [vmem:[%s279 + $0x50] sm:$0xff] %v2337
      %2351 = vst [vmem:[%s279 + $0x58] sm:$0xff] %v2338
      %2352 = vst [vmem:[%s279 + $0x60] sm:$0xf] %v2339
      %p2353 = scmp.lt.s32.totalorder %s19, 1
      %s2354 = scalar_select %p2353, %s19, 1
      %p2355 = scmp.lt.s32.totalorder %s20, 0
      %s2356 = scalar_select %p2355, %s20, 0
      %s2357 = smul.addr %s2354, 13
      %s2358 = sadd.s32 %s2356, %s2357
      %s2359 = smul.addr %s2358, 8
      %s2360 = scalar_lea.vmem %s4, %s2359
      // Predicated region
      $region37: #{basic_block_forward.5} parent=35 // pred_check
        %p2361 = pneg %p153
      $region38: #{basic_block_forward.5} parent=35 // pred_check_branch
        %2363 = sbr.rel (%p2361) target = $region40
      $region39: #{basic_block_forward.5} parent=35 // pred_region
        _
      $region40: #{basic_block_forward.5} parent=35 // pred_fallthru
        _
    $region36: #{basic_block_forward.5} parent=5 // pred_fallthru
      _
    %p2364 = scmp.le.s32.totalorder 2, %s10
    // Predicated region
    $region41: #{basic_block_forward.5} parent=5 // pred_check
      %p2365 = pneg %p2364
    $region42: #{basic_block_forward.5} parent=5 // pred_check_branch
      %2367 = sbr.rel (%p2365) target = $region44
    $region43: #{basic_block_forward.5} parent=5 // pred_region
      %s2368 = ssub.s32 %s10, 2
      // Predicated region
      $region45: #{basic_block_forward.5} parent=43 // pred_check
        %p2369 = pneg %p159
      $region46: #{basic_block_forward.5} parent=43 // pred_check_branch
        %2371 = sbr.rel (%p2369) target = $region48
      $region47: #{basic_block_forward.5} parent=43 // pred_region
        %p2372 = scmp.lt.s32.totalorder %s21, 1
        %s2373 = scalar_select %p2372, %s21, 1
        %p2374 = scmp.lt.s32.totalorder %s22, 0
        %s2375 = scalar_select %p2374, %s22, 0
        %s2376 = smul.addr %s2373, 13
        %s2377 = sadd.s32 %s2375, %s2376
        %s2378 = smul.addr %s2377, 8
        %s2379 = scalar_lea.vmem %s4, %s2378
      $region48: #{basic_block_forward.5} parent=43 // pred_fallthru
        _
    $region44: #{basic_block_forward.5} parent=5 // pred_fallthru
      _
  $region6: #{basic_block_forward.5} parent=0 // loop_footer
    %s14 = sadd.s32 1, %s10
  $region7: #{basic_block_forward.5} parent=0 // loop_footer_branch
    %9 = sbr.rel target = $region3
  $region8: #{basic_block_forward.5} parent=0 // loop_exit
    _

</llo_original>
